<compile_context>
chip_gen: v5e
topology: v5e:2x2
jax: 0.10.0
libtpu: 0.0.40
codegen_flags: <defaults>
</compile_context>

<pallas_src>
import functools
import numpy as np

import jax
import jax.numpy as jnp
from jax.experimental import pallas as pl
from jax.experimental.pallas import tpu as pltpu


# ----------------------- host-side (one-time) operator builders -----------------------

def _interp_matrix(out_size, in_size):
    """align_corners=True bilinear interpolation matrix, shape (out_size, in_size)."""
    M = np.zeros((out_size, in_size), np.float32)
    if out_size == 1 or in_size == 1:
        M[:, 0] = 1.0
        return M
    scale = (in_size - 1) / (out_size - 1)
    for o in range(out_size):
        src = o * scale
        i0 = min(int(np.floor(src)), in_size - 1)
        i1 = min(i0 + 1, in_size - 1)
        f = src - i0
        M[o, i0] += 1.0 - f
        M[o, i1] += f
    return M


def _shift_matrix(h, dy):
    """Row shift with zero fill: (S @ X)[r] == X[r + dy - 1]  (zero when out of range)."""
    S = np.zeros((h, h), np.float32)
    for r in range(h):
        src = r + dy - 1
        if 0 <= src < h:
            S[r, src] = 1.0
    return S


def _band_matrices(w, W):
    """3x3 / pad=1 conv as banded right operators on an (H, W*Cin) slab.

    w: (3, 3, Cin, Cout).  Returns B of shape (3, W*Cin, W*Cout) such that
        out_slab = sum_dy  (row-shift(dy) @ in_slab) @ B[dy]
    equals the NHWC conv output flattened to (H, W*Cout).  The W-direction halo is
    folded into the band structure (out-of-range taps have no entry == zero pad).
    """
    kh, kw, cin, cout = w.shape
    B = np.zeros((kh, W * cin, W * cout), np.float32)
    for dy in range(kh):
        for dx in range(kw):
            for wo in range(W):
                wi = wo + dx - 1
                if 0 <= wi < W:
                    B[dy, wi * cin:(wi + 1) * cin, wo * cout:(wo + 1) * cout] += w[dy, dx]
    return B


_OP_ORDER = ("A1", "b1", "A2", "b2", "A3", "b3",
             "U32", "G32", "U21", "G21", "U10", "G10",
             "S0", "S1", "S2",
             "Bs0", "sb0", "Bs1", "sb1", "Bs2", "sb2",
             "Bf0", "M1", "Bc1", "M2", "Bc2", "M3", "Bc3",
             "bn_scale", "bn_shift")


def build_fpn_fuse_ops(params, sizes, fpn_out, batch_block):
    """One-time construction (host / numpy) of every dense operator the kernel consumes.

    Hoisted out of the per-call jit (feedback): none of this runs per forward pass.
    Matmul operands are bf16; biases / BN affine stay f32.
    """
    nb = int(batch_block)
    C = fpn_out
    (H0, W0), (H1, W1), (H2, W2), (H3, W3) = sizes
    bf16 = jnp.bfloat16
    ops = {"nb": nb}

    # lateral 1x1 convs:  slab @ kron(I_W, w) + bias
    names = (("A1", "b1", W1), ("A2", "b2", W2), ("A3", "b3", W3))
    for (wa, ba, Wl), (w, b) in zip(names, params["conv1x1"]):
        w = np.asarray(w, np.float32)
        b = np.asarray(b, np.float32)
        ops[wa] = jnp.asarray(np.kron(np.eye(Wl, dtype=np.float32), w), bf16)
        ops[ba] = jnp.asarray(np.tile(b, Wl)[None, :], jnp.float32)

    def rowblk(m):                       # block-diagonal over the nb stacked images
        return np.kron(np.eye(nb, dtype=np.float32), m)

    def colop(wo, wi):                   # column bilinear interp as a right operator
        return np.kron(_interp_matrix(wo, wi).T, np.eye(C, dtype=np.float32))

    # separable bilinear upsample operators for the top-down pathway
    ops["U32"] = jnp.asarray(rowblk(_interp_matrix(H2, H3)), bf16)
    ops["U21"] = jnp.asarray(rowblk(_interp_matrix(H1, H2)), bf16)
    ops["U10"] = jnp.asarray(rowblk(_interp_matrix(H0, H1)), bf16)
    ops["G32"] = jnp.asarray(colop(W2, W3), bf16)
    ops["G21"] = jnp.asarray(colop(W1, W2), bf16)
    ops["G10"] = jnp.asarray(colop(W0, W1), bf16)

    # row-shift operators for the 3x3 convs (only dy=0 and dy=2; dy=1 is identity)
    for name, Hl in (("S0", H0), ("S1", H1), ("S2", H2)):
        ops[name] = jnp.asarray(
            np.stack([rowblk(_shift_matrix(Hl, 0)), rowblk(_shift_matrix(Hl, 2))]), bf16)

    # shared smooth conv (torch builds the ModuleList as [conv]*(n-1): shared weights)
    sw = np.asarray(params["smooth"][0], np.float32)
    sb = np.asarray(params["smooth"][1], np.float32)
    for name, bias_name, Wl in (("Bs0", "sb0", W0), ("Bs1", "sb1", W1), ("Bs2", "sb2", W2)):
        ops[name] = jnp.asarray(_band_matrices(sw, Wl), bf16)
        ops[bias_name] = jnp.asarray(np.tile(sb, Wl)[None, :], jnp.float32)

    # fusion conv (no bias): level-0 band at full res; for levels 1..3 the full-res
    # bilinear upsample is FOLDED into the operators (feedback #1):
    #   rows:  M_l[dy] = blockdiag( shift(H0, dy) @ Mh(H0 <- Hl) )
    #   cols:  Bc_l[dy] = Gw(W0 <- Wl) @ band_l[dy]          (shape (Wl*C, W0*C))
    fw = np.asarray(params["fusion_w"], np.float32)          # (3, 3, 4*C, C)
    ops["Bf0"] = jnp.asarray(_band_matrices(fw[:, :, :C, :], W0), bf16)
    for lvl, (Hl, Wl) in ((1, (H1, W1)), (2, (H2, W2)), (3, (H3, W3))):
        band = _band_matrices(fw[:, :, lvl * C:(lvl + 1) * C, :], W0)   # (3, W0*C, W0*C)
        mh = _interp_matrix(H0, Hl)
        gw = colop(W0, Wl)                                              # (Wl*C, W0*C)
        ops[f"M{lvl}"] = jnp.asarray(
            np.stack([rowblk(_shift_matrix(H0, dy) @ mh) for dy in range(3)]), bf16)
        ops[f"Bc{lvl}"] = jnp.asarray(
            np.stack([gw @ band[dy] for dy in range(3)]), bf16)

    ops["bn_scale"] = jnp.asarray(
        np.tile(np.asarray(params["bn_scale"], np.float32), W0)[None, :], jnp.float32)
    ops["bn_shift"] = jnp.asarray(
        np.tile(np.asarray(params["bn_shift"], np.float32), W0)[None, :], jnp.float32)
    return ops


# ------------------------------ fused Pallas kernel ------------------------------

def _fpn_fuse_kernel(*refs):
    (x0_ref, x1_ref, x2_ref, x3_ref,
     a1_ref, b1_ref, a2_ref, b2_ref, a3_ref, b3_ref,
     u32_ref, g32_ref, u21_ref, g21_ref, u10_ref, g10_ref,
     s0_ref, s1_ref, s2_ref,
     bs0_ref, sb0_ref, bs1_ref, sb1_ref, bs2_ref, sb2_ref,
     bf0_ref, m1_ref, bc1_ref, m2_ref, bc2_ref, m3_ref, bc3_ref,
     bnsc_ref, bnsh_ref,
     o_ref) = refs

    f32 = jnp.float32
    bf16 = jnp.bfloat16

    def dot(a, b):
        return jnp.dot(a, b, preferred_element_type=f32)

    x0 = x0_ref[...]                 # (nb*H0, W0*C)  f32 (it is an addend, not only a matmul operand)
    x1 = x1_ref[...]                 # bf16 slabs (pure MXU operands)
    x2 = x2_ref[...]
    x3 = x3_ref[...]

    # --- lateral 1x1 convs (to fpn_out channels): bf16 MXU, f32 accumulate + bias ---
    c1 = dot(x1, a1_ref[...]) + b1_ref[...]          # (nb*H1, W1*C)
    c2 = dot(x2, a2_ref[...]) + b2_ref[...]          # (nb*H2, W2*C)
    c3 = dot(x3, a3_ref[...]) + b3_ref[...]          # (nb*H3, W3*C)
    c1b, c2b, c3b = c1.astype(bf16), c2.astype(bf16), c3.astype(bf16)

    def up(xb, u_ref, g_ref):
        # separable bilinear(align_corners=True): rows (block-diag over the image
        # stack) then columns (kron(Mw.T, I_C)); bf16 operands, f32 accumulation.
        return dot(dot(u_ref[...], xb).astype(bf16), g_ref[...])

    # --- top-down pathway (NOT accumulated across levels, exactly as in torch) ---
    p2pre = up(c3b, u32_ref, g32_ref) + c2           # (nb*H2, W2*C)
    p1pre = up(c2b, u21_ref, g21_ref) + c1           # (nb*H1, W1*C)
    p0pre = up(c1b, u10_ref, g10_ref) + x0           # (nb*H0, W0*C)

    def conv3x3(xb, s_ref, band_ref, bias):
        # 3x3 / pad=1 conv on a stacked slab as three banded right-matmuls; the H
        # halo (per image) is realized by block-diagonal shift operators, dy==1 is
        # the identity -> no pad scratch, no in-kernel stores, no WAR serialization.
        acc = bias + dot(xb, band_ref[1])
        acc = acc + dot(dot(s_ref[0], xb).astype(bf16), band_ref[0])
        acc = acc + dot(dot(s_ref[1], xb).astype(bf16), band_ref[2])
        return acc

    # --- shared smooth 3x3 conv at every level ---
    p0 = conv3x3(p0pre.astype(bf16), s0_ref, bs0_ref, sb0_ref[...])   # (nb*H0, W0*C)
    p1 = conv3x3(p1pre.astype(bf16), s1_ref, bs1_ref, sb1_ref[...])   # (nb*H1, W1*C)
    p2 = conv3x3(p2pre.astype(bf16), s2_ref, bs2_ref, sb2_ref[...])   # (nb*H2, W2*C)

    # --- fusion conv3x3 (no bias) over the channel-concat [p0, up(p1), up(p2), up(c3)].
    # The concat is never materialized and levels 1..3 are never upsampled to full
    # resolution: their upsample is folded into M{l}/Bc{l}, so K stays at Wl*C.
    p0b = p0.astype(bf16)
    acc = dot(p0b, bf0_ref[1])
    acc = acc + dot(dot(s0_ref[0], p0b).astype(bf16), bf0_ref[0])
    acc = acc + dot(dot(s0_ref[1], p0b).astype(bf16), bf0_ref[2])

    p1b = p1.astype(bf16)
    p2b = p2.astype(bf16)
    for src, m_ref, bc_ref in ((p1b, m1_ref, bc1_ref),
                               (p2b, m2_ref, bc2_ref),
                               (c3b, m3_ref, bc3_ref)):
        for dy in range(3):
            acc = acc + dot(dot(m_ref[dy], src).astype(bf16), bc_ref[dy])

    # --- eval-mode BatchNorm affine + ReLU epilogue (f32 on the VPU) ---
    y = acc * bnsc_ref[...] + bnsh_ref[...]
    o_ref[...] = jnp.maximum(y, 0.0).astype(o_ref.dtype)   # lane-dense (nb*H0, W0*C) store


# ------------------------------ forward wrapper ------------------------------

def fpn_fuse_forward(features, ops):
    """features: list of 4 NHWC maps (finest first).  Returns (N, H0, W0, fpn_out)."""
    op_arrays = tuple(ops[k] for k in _OP_ORDER)
    return _fpn_fuse_call(ops["nb"], *features, *op_arrays)


@functools.partial(jax.jit, static_argnums=(0,))
def _fpn_fuse_call(nb, f0, f1, f2, f3, *op_arrays):
    N, H0, W0, C = f0.shape
    H1, W1, C1 = f1.shape[1:]
    H2, W2, C2 = f2.shape[1:]
    H3, W3, C3 = f3.shape[1:]
    if N % nb != 0:
        raise ValueError("batch size must be divisible by the batch block")

    bf16 = jnp.bfloat16
    # lane-dense stacked slabs (free row-major views of NHWC); the coarse levels are
    # pure MXU operands, so they ship as bf16 (half the DMA); x0 is also an addend.
    x0 = f0.reshape(N * H0, W0 * C)
    x1 = f1.reshape(N * H1, W1 * C1).astype(bf16)
    x2 = f2.reshape(N * H2, W2 * C2).astype(bf16)
    x3 = f3.reshape(N * H3, W3 * C3).astype(bf16)

    slabs = (x0, x1, x2, x3)
    row_blocks = (nb * H0, nb * H1, nb * H2, nb * H3)

    in_specs = [pl.BlockSpec((rb, s.shape[1]), lambda n: (n, 0))
                for rb, s in zip(row_blocks, slabs)]
    for arr in op_arrays:
        nd = arr.ndim
        in_specs.append(pl.BlockSpec(arr.shape, lambda n, _nd=nd: (0,) * _nd))

    out_block = (nb * H0, W0 * C)
    out_spec = pl.BlockSpec(out_block, lambda n: (n, 0))
    out_shape = jax.ShapeDtypeStruct((N * H0, W0 * C), f0.dtype)

    # --- per-generation VMEM budget (feedback: derive from shapes, don't hard-code) ---
    def nbytes(shape, dtype):
        return int(np.prod(shape)) * np.dtype(dtype).itemsize

    io_bytes = sum(nbytes((rb, s.shape[1]), s.dtype) for rb, s in zip(row_blocks, slabs))
    io_bytes += sum(nbytes(a.shape, a.dtype) for a in op_arrays)
    io_bytes += nbytes(out_block, f0.dtype)
    try:
        vmem_cap = int(pltpu.get_tpu_info().vmem_capacity_bytes)
    except Exception:                     # conservative (v7x-sized) fallback
        vmem_cap = 64 * 1024 * 1024
    # 2x double-buffering + headroom for in-flight f32 intermediates, capped below
    # the physical VMEM of the smallest supported generation.
    vmem_limit = int(min(vmem_cap * 3 // 4, max(32 * 1024 * 1024, 4 * io_bytes)))

    out = pl.pallas_call(
        _fpn_fuse_kernel,
        out_shape=out_shape,
        grid=(N // nb,),
        in_specs=in_specs,
        out_specs=out_spec,
        compiler_params=pltpu.CompilerParams(
            dimension_semantics=("parallel",),
            vmem_limit_bytes=vmem_limit,
        ),
    )(*slabs, *op_arrays)

    return out.reshape(N, H0, W0, C)


# ------------------------------ pure-JAX reference ------------------------------

def fpn_fuse_reference(features, params):
    """f32 reference mirroring the PyTorch FPN_fuse.forward (for validation)."""
    f = [jnp.asarray(x, jnp.float32) for x in features]

    def conv1x1(x, w, b):
        return jnp.einsum('nhwc,cf->nhwf', x, w) + b

    def up(x, ho, wo):
        mh = jnp.asarray(_interp_matrix(ho, x.shape[1]))
        mw = jnp.asarray(_interp_matrix(wo, x.shape[2]))
        return jnp.einsum('oh,pw,nhwc->nopc', mh, mw, x)

    def conv3x3(x, w, b=None):
        y = jax.lax.conv_general_dilated(
            x, w, window_strides=(1, 1), padding=((1, 1), (1, 1)),
            dimension_numbers=('NHWC', 'HWIO', 'NHWC'))
        return y if b is None else y + b

    c = [f[0]] + [conv1x1(x, w, b) for x, (w, b) in zip(f[1:], params["conv1x1"])]
    sw, sb = params["smooth"]
    p = []
    for i in reversed(range(1, 4)):
        p.append(conv3x3(up(c[i], c[i - 1].shape[1], c[i - 1].shape[2]) + c[i - 1], sw, sb))
    p = list(reversed(p))
    p.append(c[-1])
    H0, W0 = p[0].shape[1], p[0].shape[2]
    p = [p[0]] + [up(x, H0, W0) for x in p[1:]]
    y = conv3x3(jnp.concatenate(p, axis=-1), params["fusion_w"])
    y = y * params["bn_scale"] + params["bn_shift"]
    return jnp.maximum(y, 0.0)


# ------------------------------ parameter init ------------------------------

def make_params(key, feature_channels, fpn_out):
    n = len(feature_channels)
    keys = jax.random.split(key, 2 * n + 4)
    params = {}

    conv1x1 = []
    for i, cin in enumerate(feature_channels[1:]):
        w = 0.05 * jax.random.normal(keys[2 * i], (cin, fpn_out), jnp.float32)
        b = 0.01 * jax.random.normal(keys[2 * i + 1], (fpn_out,), jnp.float32)
        conv1x1.append((w, b))
    params["conv1x1"] = conv1x1

    # one shared smooth 3x3 conv (matches `[conv] * (n-1)` in the torch module)
    sw = 0.05 * jax.random.normal(keys[-4], (3, 3, fpn_out, fpn_out), jnp.float32)
    sb = 0.01 * jax.random.normal(keys[-3], (fpn_out,), jnp.float32)
    params["smooth"] = (sw, sb)

    # fusion conv (no bias) + eval-mode BatchNorm affine
    params["fusion_w"] = 0.05 * jax.random.normal(
        keys[-2], (3, 3, n * fpn_out, fpn_out), jnp.float32)
    gamma = 1.0 + 0.1 * jnp.arange(fpn_out, dtype=jnp.float32) / fpn_out
    beta = 0.01 * jnp.arange(fpn_out, dtype=jnp.float32)
    running_mean = jnp.zeros((fpn_out,), jnp.float32)
    running_var = jnp.ones((fpn_out,), jnp.float32)
    eps = 1e-5
    scale = gamma / jnp.sqrt(running_var + eps)
    params["bn_scale"] = scale
    params["bn_shift"] = beta - running_mean * scale
    return params


# ---------------------------------- main ----------------------------------

if __name__ == "__main__":
    key = jax.random.PRNGKey(0)

    N = 2
    fpn_out = 16
    feature_channels = [16, 32, 64, 128]     # feature_channels[0] == fpn_out (torch assert)
    spatial = [16, 8, 4, 2]                  # pyramid resolutions (NHWC, square)
    assert feature_channels[0] == fpn_out

    fkeys = jax.random.split(key, len(feature_channels) + 1)
    features = [
        jax.random.normal(fkeys[i], (N, s, s, c), jnp.float32)
        for i, (c, s) in enumerate(zip(feature_channels, spatial))
    ]
    params = make_params(fkeys[-1], feature_channels, fpn_out)

    # largest batch block <= 8 that divides N (raises the MXU M dimension)
    nb = max(d for d in range(1, min(N, 8) + 1) if N % d == 0)
    sizes = [(f.shape[1], f.shape[2]) for f in features]
    ops = build_fpn_fuse_ops(params, sizes, fpn_out, nb)    # one-time operator build

    out = fpn_fuse_forward(features, ops)
    out = jax.block_until_ready(out)

    assert out.shape == (N, spatial[0], spatial[0], fpn_out), out.shape
    assert bool(jnp.all(jnp.isfinite(out)))
    assert bool(jnp.all(out >= 0.0))          # ReLU output

    # loose tolerance: kernel uses bf16 MXU operands with f32 accumulation
    ref = fpn_fuse_reference(features, params)
    np.testing.assert_allclose(np.asarray(out), np.asarray(ref), rtol=0.2, atol=0.2)

    print("KERNEL_OK")
</pallas_src>

<mosaic_0001>
module attributes {stable_mosaic.version = 11 : i64} {
  func.func @_fpn_fuse_kernel(%arg0: i32, %arg1: memref<32x256xf32, #tpu.memory_space<vmem>>, %arg2: memref<16x256xbf16, #tpu.memory_space<vmem>>, %arg3: memref<8x256xbf16, #tpu.memory_space<vmem>>, %arg4: memref<4x256xbf16, #tpu.memory_space<vmem>>, %arg5: memref<256x128xbf16, #tpu.memory_space<vmem>>, %arg6: memref<1x128xf32, #tpu.memory_space<vmem>>, %arg7: memref<256x64xbf16, #tpu.memory_space<vmem>>, %arg8: memref<1x64xf32, #tpu.memory_space<vmem>>, %arg9: memref<256x32xbf16, #tpu.memory_space<vmem>>, %arg10: memref<1x32xf32, #tpu.memory_space<vmem>>, %arg11: memref<8x4xbf16, #tpu.memory_space<vmem>>, %arg12: memref<32x64xbf16, #tpu.memory_space<vmem>>, %arg13: memref<16x8xbf16, #tpu.memory_space<vmem>>, %arg14: memref<64x128xbf16, #tpu.memory_space<vmem>>, %arg15: memref<32x16xbf16, #tpu.memory_space<vmem>>, %arg16: memref<128x256xbf16, #tpu.memory_space<vmem>>, %arg17: memref<2x32x32xbf16, #tpu.memory_space<vmem>>, %arg18: memref<2x16x16xbf16, #tpu.memory_space<vmem>>, %arg19: memref<2x8x8xbf16, #tpu.memory_space<vmem>>, %arg20: memref<3x256x256xbf16, #tpu.memory_space<vmem>>, %arg21: memref<1x256xf32, #tpu.memory_space<vmem>>, %arg22: memref<3x128x128xbf16, #tpu.memory_space<vmem>>, %arg23: memref<1x128xf32, #tpu.memory_space<vmem>>, %arg24: memref<3x64x64xbf16, #tpu.memory_space<vmem>>, %arg25: memref<1x64xf32, #tpu.memory_space<vmem>>, %arg26: memref<3x256x256xbf16, #tpu.memory_space<vmem>>, %arg27: memref<3x32x16xbf16, #tpu.memory_space<vmem>>, %arg28: memref<3x128x256xbf16, #tpu.memory_space<vmem>>, %arg29: memref<3x32x8xbf16, #tpu.memory_space<vmem>>, %arg30: memref<3x64x256xbf16, #tpu.memory_space<vmem>>, %arg31: memref<3x32x4xbf16, #tpu.memory_space<vmem>>, %arg32: memref<3x32x256xbf16, #tpu.memory_space<vmem>>, %arg33: memref<1x256xf32, #tpu.memory_space<vmem>>, %arg34: memref<1x256xf32, #tpu.memory_space<vmem>>, %arg35: memref<32x256xf32, #tpu.memory_space<vmem>>) attributes {dimension_semantics = [#tpu.dimension_semantics<parallel>], iteration_bounds = array<i64: 1>, scalar_prefetch = 0 : i64, scratch_operands = 0 : i64, tpu.core_type = #tpu.core_type<tc>, window_params = [{transform_indices = @transform_0, window_bounds = array<i64: 32, 256>}, {transform_indices = @transform_1, window_bounds = array<i64: 16, 256>}, {transform_indices = @transform_2, window_bounds = array<i64: 8, 256>}, {transform_indices = @transform_3, window_bounds = array<i64: 4, 256>}, {pipeline_mode = #tpu.pipeline_mode<synchronous>, transform_indices = @transform_4, window_bounds = array<i64: 256, 128>}, {pipeline_mode = #tpu.pipeline_mode<synchronous>, transform_indices = @transform_5, window_bounds = array<i64: 1, 128>}, {pipeline_mode = #tpu.pipeline_mode<synchronous>, transform_indices = @transform_6, window_bounds = array<i64: 256, 64>}, {pipeline_mode = #tpu.pipeline_mode<synchronous>, transform_indices = @transform_7, window_bounds = array<i64: 1, 64>}, {pipeline_mode = #tpu.pipeline_mode<synchronous>, transform_indices = @transform_8, window_bounds = array<i64: 256, 32>}, {pipeline_mode = #tpu.pipeline_mode<synchronous>, transform_indices = @transform_9, window_bounds = array<i64: 1, 32>}, {pipeline_mode = #tpu.pipeline_mode<synchronous>, transform_indices = @transform_10, window_bounds = array<i64: 8, 4>}, {pipeline_mode = #tpu.pipeline_mode<synchronous>, transform_indices = @transform_11, window_bounds = array<i64: 32, 64>}, {pipeline_mode = #tpu.pipeline_mode<synchronous>, transform_indices = @transform_12, window_bounds = array<i64: 16, 8>}, {pipeline_mode = #tpu.pipeline_mode<synchronous>, transform_indices = @transform_13, window_bounds = array<i64: 64, 128>}, {pipeline_mode = #tpu.pipeline_mode<synchronous>, transform_indices = @transform_14, window_bounds = array<i64: 32, 16>}, {pipeline_mode = #tpu.pipeline_mode<synchronous>, transform_indices = @transform_15, window_bounds = array<i64: 128, 256>}, {pipeline_mode = #tpu.pipeline_mode<synchronous>, transform_indices = @transform_16, window_bounds = array<i64: 2, 32, 32>}, {pipeline_mode = #tpu.pipeline_mode<synchronous>, transform_indices = @transform_17, window_bounds = array<i64: 2, 16, 16>}, {pipeline_mode = #tpu.pipeline_mode<synchronous>, transform_indices = @transform_18, window_bounds = array<i64: 2, 8, 8>}, {pipeline_mode = #tpu.pipeline_mode<synchronous>, transform_indices = @transform_19, window_bounds = array<i64: 3, 256, 256>}, {pipeline_mode = #tpu.pipeline_mode<synchronous>, transform_indices = @transform_20, window_bounds = array<i64: 1, 256>}, {pipeline_mode = #tpu.pipeline_mode<synchronous>, transform_indices = @transform_21, window_bounds = array<i64: 3, 128, 128>}, {pipeline_mode = #tpu.pipeline_mode<synchronous>, transform_indices = @transform_22, window_bounds = array<i64: 1, 128>}, {pipeline_mode = #tpu.pipeline_mode<synchronous>, transform_indices = @transform_23, window_bounds = array<i64: 3, 64, 64>}, {pipeline_mode = #tpu.pipeline_mode<synchronous>, transform_indices = @transform_24, window_bounds = array<i64: 1, 64>}, {pipeline_mode = #tpu.pipeline_mode<synchronous>, transform_indices = @transform_25, window_bounds = array<i64: 3, 256, 256>}, {pipeline_mode = #tpu.pipeline_mode<synchronous>, transform_indices = @transform_26, window_bounds = array<i64: 3, 32, 16>}, {pipeline_mode = #tpu.pipeline_mode<synchronous>, transform_indices = @transform_27, window_bounds = array<i64: 3, 128, 256>}, {pipeline_mode = #tpu.pipeline_mode<synchronous>, transform_indices = @transform_28, window_bounds = array<i64: 3, 32, 8>}, {pipeline_mode = #tpu.pipeline_mode<synchronous>, transform_indices = @transform_29, window_bounds = array<i64: 3, 64, 256>}, {pipeline_mode = #tpu.pipeline_mode<synchronous>, transform_indices = @transform_30, window_bounds = array<i64: 3, 32, 4>}, {pipeline_mode = #tpu.pipeline_mode<synchronous>, transform_indices = @transform_31, window_bounds = array<i64: 3, 32, 256>}, {pipeline_mode = #tpu.pipeline_mode<synchronous>, transform_indices = @transform_32, window_bounds = array<i64: 1, 256>}, {pipeline_mode = #tpu.pipeline_mode<synchronous>, transform_indices = @transform_33, window_bounds = array<i64: 1, 256>}, {transform_indices = @transform_34, window_bounds = array<i64: 32, 256>}]} {
    %c0 = arith.constant 0 : index
    %c0_0 = arith.constant 0 : index
    %0 = vector.load %arg1[%c0, %c0_0] : memref<32x256xf32, #tpu.memory_space<vmem>>, vector<32x256xf32>
    %c0_1 = arith.constant 0 : index
    %c0_2 = arith.constant 0 : index
    %1 = vector.load %arg2[%c0_1, %c0_2] : memref<16x256xbf16, #tpu.memory_space<vmem>>, vector<16x256xbf16>
    %c0_3 = arith.constant 0 : index
    %c0_4 = arith.constant 0 : index
    %2 = vector.load %arg3[%c0_3, %c0_4] : memref<8x256xbf16, #tpu.memory_space<vmem>>, vector<8x256xbf16>
    %c0_5 = arith.constant 0 : index
    %c0_6 = arith.constant 0 : index
    %3 = vector.load %arg4[%c0_5, %c0_6] : memref<4x256xbf16, #tpu.memory_space<vmem>>, vector<4x256xbf16>
    %c0_7 = arith.constant 0 : index
    %c0_8 = arith.constant 0 : index
    %4 = vector.load %arg5[%c0_7, %c0_8] : memref<256x128xbf16, #tpu.memory_space<vmem>>, vector<256x128xbf16>
    %cst = arith.constant dense<0.000000e+00> : vector<16x128xf32>
    %5 = tpu.matmul %1, %4, %cst {dimension_numbers = #tpu.dot_dimension_numbers<[1], [0], [0], [1], [0, 0, 1, 1], [], []>} : vector<16x256xbf16>, vector<256x128xbf16>, vector<16x128xf32> -> vector<16x128xf32>
    %c0_9 = arith.constant 0 : index
    %c0_10 = arith.constant 0 : index
    %6 = vector.load %arg6[%c0_9, %c0_10] : memref<1x128xf32, #tpu.memory_space<vmem>>, vector<1x128xf32>
    %7 = vector.broadcast %6 : vector<1x128xf32> to vector<16x128xf32>
    %8 = arith.addf %5, %7 : vector<16x128xf32>
    %c0_11 = arith.constant 0 : index
    %c0_12 = arith.constant 0 : index
    %9 = vector.load %arg7[%c0_11, %c0_12] : memref<256x64xbf16, #tpu.memory_space<vmem>>, vector<256x64xbf16>
    %cst_13 = arith.constant dense<0.000000e+00> : vector<8x64xf32>
    %10 = tpu.matmul %2, %9, %cst_13 {dimension_numbers = #tpu.dot_dimension_numbers<[1], [0], [0], [1], [0, 0, 1, 1], [], []>} : vector<8x256xbf16>, vector<256x64xbf16>, vector<8x64xf32> -> vector<8x64xf32>
    %c0_14 = arith.constant 0 : index
    %c0_15 = arith.constant 0 : index
    %11 = vector.load %arg8[%c0_14, %c0_15] : memref<1x64xf32, #tpu.memory_space<vmem>>, vector<1x64xf32>
    %12 = vector.broadcast %11 : vector<1x64xf32> to vector<8x64xf32>
    %13 = arith.addf %10, %12 : vector<8x64xf32>
    %c0_16 = arith.constant 0 : index
    %c0_17 = arith.constant 0 : index
    %14 = vector.load %arg9[%c0_16, %c0_17] : memref<256x32xbf16, #tpu.memory_space<vmem>>, vector<256x32xbf16>
    %cst_18 = arith.constant dense<0.000000e+00> : vector<4x32xf32>
    %15 = tpu.matmul %3, %14, %cst_18 {dimension_numbers = #tpu.dot_dimension_numbers<[1], [0], [0], [1], [0, 0, 1, 1], [], []>} : vector<4x256xbf16>, vector<256x32xbf16>, vector<4x32xf32> -> vector<4x32xf32>
    %c0_19 = arith.constant 0 : index
    %c0_20 = arith.constant 0 : index
    %16 = vector.load %arg10[%c0_19, %c0_20] : memref<1x32xf32, #tpu.memory_space<vmem>>, vector<1x32xf32>
    %17 = vector.broadcast %16 : vector<1x32xf32> to vector<4x32xf32>
    %18 = arith.addf %15, %17 : vector<4x32xf32>
    %19 = arith.truncf %8 : vector<16x128xf32> to vector<16x128xbf16>
    %20 = arith.truncf %13 : vector<8x64xf32> to vector<8x64xbf16>
    %21 = arith.truncf %18 : vector<4x32xf32> to vector<4x32xbf16>
    %c0_21 = arith.constant 0 : index
    %c0_22 = arith.constant 0 : index
    %22 = vector.load %arg11[%c0_21, %c0_22] : memref<8x4xbf16, #tpu.memory_space<vmem>>, vector<8x4xbf16>
    %cst_23 = arith.constant dense<0.000000e+00> : vector<8x32xf32>
    %23 = tpu.matmul %22, %21, %cst_23 {dimension_numbers = #tpu.dot_dimension_numbers<[1], [0], [0], [1], [0, 0, 1, 1], [], []>} : vector<8x4xbf16>, vector<4x32xbf16>, vector<8x32xf32> -> vector<8x32xf32>
    %24 = arith.truncf %23 : vector<8x32xf32> to vector<8x32xbf16>
    %c0_24 = arith.constant 0 : index
    %c0_25 = arith.constant 0 : index
    %25 = vector.load %arg12[%c0_24, %c0_25] : memref<32x64xbf16, #tpu.memory_space<vmem>>, vector<32x64xbf16>
    %cst_26 = arith.constant dense<0.000000e+00> : vector<8x64xf32>
    %26 = tpu.matmul %24, %25, %cst_26 {dimension_numbers = #tpu.dot_dimension_numbers<[1], [0], [0], [1], [0, 0, 1, 1], [], []>} : vector<8x32xbf16>, vector<32x64xbf16>, vector<8x64xf32> -> vector<8x64xf32>
    %27 = arith.addf %26, %13 : vector<8x64xf32>
    %c0_27 = arith.constant 0 : index
    %c0_28 = arith.constant 0 : index
    %28 = vector.load %arg13[%c0_27, %c0_28] : memref<16x8xbf16, #tpu.memory_space<vmem>>, vector<16x8xbf16>
    %cst_29 = arith.constant dense<0.000000e+00> : vector<16x64xf32>
    %29 = tpu.matmul %28, %20, %cst_29 {dimension_numbers = #tpu.dot_dimension_numbers<[1], [0], [0], [1], [0, 0, 1, 1], [], []>} : vector<16x8xbf16>, vector<8x64xbf16>, vector<16x64xf32> -> vector<16x64xf32>
    %30 = arith.truncf %29 : vector<16x64xf32> to vector<16x64xbf16>
    %c0_30 = arith.constant 0 : index
    %c0_31 = arith.constant 0 : index
    %31 = vector.load %arg14[%c0_30, %c0_31] : memref<64x128xbf16, #tpu.memory_space<vmem>>, vector<64x128xbf16>
    %cst_32 = arith.constant dense<0.000000e+00> : vector<16x128xf32>
    %32 = tpu.matmul %30, %31, %cst_32 {dimension_numbers = #tpu.dot_dimension_numbers<[1], [0], [0], [1], [0, 0, 1, 1], [], []>} : vector<16x64xbf16>, vector<64x128xbf16>, vector<16x128xf32> -> vector<16x128xf32>
    %33 = arith.addf %32, %8 : vector<16x128xf32>
    %c0_33 = arith.constant 0 : index
    %c0_34 = arith.constant 0 : index
    %34 = vector.load %arg15[%c0_33, %c0_34] : memref<32x16xbf16, #tpu.memory_space<vmem>>, vector<32x16xbf16>
    %cst_35 = arith.constant dense<0.000000e+00> : vector<32x128xf32>
    %35 = tpu.matmul %34, %19, %cst_35 {dimension_numbers = #tpu.dot_dimension_numbers<[1], [0], [0], [1], [0, 0, 1, 1], [], []>} : vector<32x16xbf16>, vector<16x128xbf16>, vector<32x128xf32> -> vector<32x128xf32>
    %36 = arith.truncf %35 : vector<32x128xf32> to vector<32x128xbf16>
    %c0_36 = arith.constant 0 : index
    %c0_37 = arith.constant 0 : index
    %37 = vector.load %arg16[%c0_36, %c0_37] : memref<128x256xbf16, #tpu.memory_space<vmem>>, vector<128x256xbf16>
    %cst_38 = arith.constant dense<0.000000e+00> : vector<32x256xf32>
    %38 = tpu.matmul %36, %37, %cst_38 {dimension_numbers = #tpu.dot_dimension_numbers<[1], [0], [0], [1], [0, 0, 1, 1], [], []>} : vector<32x128xbf16>, vector<128x256xbf16>, vector<32x256xf32> -> vector<32x256xf32>
    %39 = arith.addf %38, %0 : vector<32x256xf32>
    %40 = arith.truncf %39 : vector<32x256xf32> to vector<32x256xbf16>
    %c0_39 = arith.constant 0 : index
    %c0_40 = arith.constant 0 : index
    %41 = vector.load %arg21[%c0_39, %c0_40] : memref<1x256xf32, #tpu.memory_space<vmem>>, vector<1x256xf32>
    %c1 = arith.constant 1 : index
    %c0_41 = arith.constant 0 : index
    %c0_42 = arith.constant 0 : index
    %42 = vector.load %arg20[%c1, %c0_41, %c0_42] : memref<3x256x256xbf16, #tpu.memory_space<vmem>>, vector<1x256x256xbf16>
    %43 = vector.shape_cast %42 : vector<1x256x256xbf16> to vector<256x256xbf16>
    %cst_43 = arith.constant dense<0.000000e+00> : vector<32x256xf32>
    %44 = tpu.matmul %40, %43, %cst_43 {dimension_numbers = #tpu.dot_dimension_numbers<[1], [0], [0], [1], [0, 0, 1, 1], [], []>} : vector<32x256xbf16>, vector<256x256xbf16>, vector<32x256xf32> -> vector<32x256xf32>
    %45 = vector.broadcast %41 : vector<1x256xf32> to vector<32x256xf32>
    %46 = arith.addf %45, %44 : vector<32x256xf32>
    %c0_44 = arith.constant 0 : index
    %c0_45 = arith.constant 0 : index
    %c0_46 = arith.constant 0 : index
    %47 = vector.load %arg17[%c0_44, %c0_45, %c0_46] : memref<2x32x32xbf16, #tpu.memory_space<vmem>>, vector<1x32x32xbf16>
    %48 = vector.shape_cast %47 : vector<1x32x32xbf16> to vector<32x32xbf16>
    %cst_47 = arith.constant dense<0.000000e+00> : vector<32x256xf32>
    %49 = tpu.matmul %48, %40, %cst_47 {dimension_numbers = #tpu.dot_dimension_numbers<[1], [0], [0], [1], [0, 0, 1, 1], [], []>} : vector<32x32xbf16>, vector<32x256xbf16>, vector<32x256xf32> -> vector<32x256xf32>
    %50 = arith.truncf %49 : vector<32x256xf32> to vector<32x256xbf16>
    %c0_48 = arith.constant 0 : index
    %c0_49 = arith.constant 0 : index
    %c0_50 = arith.constant 0 : index
    %51 = vector.load %arg20[%c0_48, %c0_49, %c0_50] : memref<3x256x256xbf16, #tpu.memory_space<vmem>>, vector<1x256x256xbf16>
    %52 = vector.shape_cast %51 : vector<1x256x256xbf16> to vector<256x256xbf16>
    %cst_51 = arith.constant dense<0.000000e+00> : vector<32x256xf32>
    %53 = tpu.matmul %50, %52, %cst_51 {dimension_numbers = #tpu.dot_dimension_numbers<[1], [0], [0], [1], [0, 0, 1, 1], [], []>} : vector<32x256xbf16>, vector<256x256xbf16>, vector<32x256xf32> -> vector<32x256xf32>
    %54 = arith.addf %46, %53 : vector<32x256xf32>
    %c1_52 = arith.constant 1 : index
    %c0_53 = arith.constant 0 : index
    %c0_54 = arith.constant 0 : index
    %55 = vector.load %arg17[%c1_52, %c0_53, %c0_54] : memref<2x32x32xbf16, #tpu.memory_space<vmem>>, vector<1x32x32xbf16>
    %56 = vector.shape_cast %55 : vector<1x32x32xbf16> to vector<32x32xbf16>
    %cst_55 = arith.constant dense<0.000000e+00> : vector<32x256xf32>
    %57 = tpu.matmul %56, %40, %cst_55 {dimension_numbers = #tpu.dot_dimension_numbers<[1], [0], [0], [1], [0, 0, 1, 1], [], []>} : vector<32x32xbf16>, vector<32x256xbf16>, vector<32x256xf32> -> vector<32x256xf32>
    %58 = arith.truncf %57 : vector<32x256xf32> to vector<32x256xbf16>
    %c2 = arith.constant 2 : index
    %c0_56 = arith.constant 0 : index
    %c0_57 = arith.constant 0 : index
    %59 = vector.load %arg20[%c2, %c0_56, %c0_57] : memref<3x256x256xbf16, #tpu.memory_space<vmem>>, vector<1x256x256xbf16>
    %60 = vector.shape_cast %59 : vector<1x256x256xbf16> to vector<256x256xbf16>
    %cst_58 = arith.constant dense<0.000000e+00> : vector<32x256xf32>
    %61 = tpu.matmul %58, %60, %cst_58 {dimension_numbers = #tpu.dot_dimension_numbers<[1], [0], [0], [1], [0, 0, 1, 1], [], []>} : vector<32x256xbf16>, vector<256x256xbf16>, vector<32x256xf32> -> vector<32x256xf32>
    %62 = arith.addf %54, %61 : vector<32x256xf32>
    %63 = arith.truncf %33 : vector<16x128xf32> to vector<16x128xbf16>
    %c0_59 = arith.constant 0 : index
    %c0_60 = arith.constant 0 : index
    %64 = vector.load %arg23[%c0_59, %c0_60] : memref<1x128xf32, #tpu.memory_space<vmem>>, vector<1x128xf32>
    %c1_61 = arith.constant 1 : index
    %c0_62 = arith.constant 0 : index
    %c0_63 = arith.constant 0 : index
    %65 = vector.load %arg22[%c1_61, %c0_62, %c0_63] : memref<3x128x128xbf16, #tpu.memory_space<vmem>>, vector<1x128x128xbf16>
    %66 = vector.shape_cast %65 : vector<1x128x128xbf16> to vector<128x128xbf16>
    %cst_64 = arith.constant dense<0.000000e+00> : vector<16x128xf32>
    %67 = tpu.matmul %63, %66, %cst_64 {dimension_numbers = #tpu.dot_dimension_numbers<[1], [0], [0], [1], [0, 0, 1, 1], [], []>} : vector<16x128xbf16>, vector<128x128xbf16>, vector<16x128xf32> -> vector<16x128xf32>
    %68 = vector.broadcast %64 : vector<1x128xf32> to vector<16x128xf32>
    %69 = arith.addf %68, %67 : vector<16x128xf32>
    %c0_65 = arith.constant 0 : index
    %c0_66 = arith.constant 0 : index
    %c0_67 = arith.constant 0 : index
    %70 = vector.load %arg18[%c0_65, %c0_66, %c0_67] : memref<2x16x16xbf16, #tpu.memory_space<vmem>>, vector<1x16x16xbf16>
    %71 = vector.shape_cast %70 : vector<1x16x16xbf16> to vector<16x16xbf16>
    %cst_68 = arith.constant dense<0.000000e+00> : vector<16x128xf32>
    %72 = tpu.matmul %71, %63, %cst_68 {dimension_numbers = #tpu.dot_dimension_numbers<[1], [0], [0], [1], [0, 0, 1, 1], [], []>} : vector<16x16xbf16>, vector<16x128xbf16>, vector<16x128xf32> -> vector<16x128xf32>
    %73 = arith.truncf %72 : vector<16x128xf32> to vector<16x128xbf16>
    %c0_69 = arith.constant 0 : index
    %c0_70 = arith.constant 0 : index
    %c0_71 = arith.constant 0 : index
    %74 = vector.load %arg22[%c0_69, %c0_70, %c0_71] : memref<3x128x128xbf16, #tpu.memory_space<vmem>>, vector<1x128x128xbf16>
    %75 = vector.shape_cast %74 : vector<1x128x128xbf16> to vector<128x128xbf16>
    %cst_72 = arith.constant dense<0.000000e+00> : vector<16x128xf32>
    %76 = tpu.matmul %73, %75, %cst_72 {dimension_numbers = #tpu.dot_dimension_numbers<[1], [0], [0], [1], [0, 0, 1, 1], [], []>} : vector<16x128xbf16>, vector<128x128xbf16>, vector<16x128xf32> -> vector<16x128xf32>
    %77 = arith.addf %69, %76 : vector<16x128xf32>
    %c1_73 = arith.constant 1 : index
    %c0_74 = arith.constant 0 : index
    %c0_75 = arith.constant 0 : index
    %78 = vector.load %arg18[%c1_73, %c0_74, %c0_75] : memref<2x16x16xbf16, #tpu.memory_space<vmem>>, vector<1x16x16xbf16>
    %79 = vector.shape_cast %78 : vector<1x16x16xbf16> to vector<16x16xbf16>
    %cst_76 = arith.constant dense<0.000000e+00> : vector<16x128xf32>
    %80 = tpu.matmul %79, %63, %cst_76 {dimension_numbers = #tpu.dot_dimension_numbers<[1], [0], [0], [1], [0, 0, 1, 1], [], []>} : vector<16x16xbf16>, vector<16x128xbf16>, vector<16x128xf32> -> vector<16x128xf32>
    %81 = arith.truncf %80 : vector<16x128xf32> to vector<16x128xbf16>
    %c2_77 = arith.constant 2 : index
    %c0_78 = arith.constant 0 : index
    %c0_79 = arith.constant 0 : index
    %82 = vector.load %arg22[%c2_77, %c0_78, %c0_79] : memref<3x128x128xbf16, #tpu.memory_space<vmem>>, vector<1x128x128xbf16>
    %83 = vector.shape_cast %82 : vector<1x128x128xbf16> to vector<128x128xbf16>
    %cst_80 = arith.constant dense<0.000000e+00> : vector<16x128xf32>
    %84 = tpu.matmul %81, %83, %cst_80 {dimension_numbers = #tpu.dot_dimension_numbers<[1], [0], [0], [1], [0, 0, 1, 1], [], []>} : vector<16x128xbf16>, vector<128x128xbf16>, vector<16x128xf32> -> vector<16x128xf32>
    %85 = arith.addf %77, %84 : vector<16x128xf32>
    %86 = arith.truncf %27 : vector<8x64xf32> to vector<8x64xbf16>
    %c0_81 = arith.constant 0 : index
    %c0_82 = arith.constant 0 : index
    %87 = vector.load %arg25[%c0_81, %c0_82] : memref<1x64xf32, #tpu.memory_space<vmem>>, vector<1x64xf32>
    %c1_83 = arith.constant 1 : index
    %c0_84 = arith.constant 0 : index
    %c0_85 = arith.constant 0 : index
    %88 = vector.load %arg24[%c1_83, %c0_84, %c0_85] : memref<3x64x64xbf16, #tpu.memory_space<vmem>>, vector<1x64x64xbf16>
    %89 = vector.shape_cast %88 : vector<1x64x64xbf16> to vector<64x64xbf16>
    %cst_86 = arith.constant dense<0.000000e+00> : vector<8x64xf32>
    %90 = tpu.matmul %86, %89, %cst_86 {dimension_numbers = #tpu.dot_dimension_numbers<[1], [0], [0], [1], [0, 0, 1, 1], [], []>} : vector<8x64xbf16>, vector<64x64xbf16>, vector<8x64xf32> -> vector<8x64xf32>
    %91 = vector.broadcast %87 : vector<1x64xf32> to vector<8x64xf32>
    %92 = arith.addf %91, %90 : vector<8x64xf32>
    %c0_87 = arith.constant 0 : index
    %c0_88 = arith.constant 0 : index
    %c0_89 = arith.constant 0 : index
    %93 = vector.load %arg19[%c0_87, %c0_88, %c0_89] : memref<2x8x8xbf16, #tpu.memory_space<vmem>>, vector<1x8x8xbf16>
    %94 = vector.shape_cast %93 : vector<1x8x8xbf16> to vector<8x8xbf16>
    %cst_90 = arith.constant dense<0.000000e+00> : vector<8x64xf32>
    %95 = tpu.matmul %94, %86, %cst_90 {dimension_numbers = #tpu.dot_dimension_numbers<[1], [0], [0], [1], [0, 0, 1, 1], [], []>} : vector<8x8xbf16>, vector<8x64xbf16>, vector<8x64xf32> -> vector<8x64xf32>
    %96 = arith.truncf %95 : vector<8x64xf32> to vector<8x64xbf16>
    %c0_91 = arith.constant 0 : index
    %c0_92 = arith.constant 0 : index
    %c0_93 = arith.constant 0 : index
    %97 = vector.load %arg24[%c0_91, %c0_92, %c0_93] : memref<3x64x64xbf16, #tpu.memory_space<vmem>>, vector<1x64x64xbf16>
    %98 = vector.shape_cast %97 : vector<1x64x64xbf16> to vector<64x64xbf16>
    %cst_94 = arith.constant dense<0.000000e+00> : vector<8x64xf32>
    %99 = tpu.matmul %96, %98, %cst_94 {dimension_numbers = #tpu.dot_dimension_numbers<[1], [0], [0], [1], [0, 0, 1, 1], [], []>} : vector<8x64xbf16>, vector<64x64xbf16>, vector<8x64xf32> -> vector<8x64xf32>
    %100 = arith.addf %92, %99 : vector<8x64xf32>
    %c1_95 = arith.constant 1 : index
    %c0_96 = arith.constant 0 : index
    %c0_97 = arith.constant 0 : index
    %101 = vector.load %arg19[%c1_95, %c0_96, %c0_97] : memref<2x8x8xbf16, #tpu.memory_space<vmem>>, vector<1x8x8xbf16>
    %102 = vector.shape_cast %101 : vector<1x8x8xbf16> to vector<8x8xbf16>
    %cst_98 = arith.constant dense<0.000000e+00> : vector<8x64xf32>
    %103 = tpu.matmul %102, %86, %cst_98 {dimension_numbers = #tpu.dot_dimension_numbers<[1], [0], [0], [1], [0, 0, 1, 1], [], []>} : vector<8x8xbf16>, vector<8x64xbf16>, vector<8x64xf32> -> vector<8x64xf32>
    %104 = arith.truncf %103 : vector<8x64xf32> to vector<8x64xbf16>
    %c2_99 = arith.constant 2 : index
    %c0_100 = arith.constant 0 : index
    %c0_101 = arith.constant 0 : index
    %105 = vector.load %arg24[%c2_99, %c0_100, %c0_101] : memref<3x64x64xbf16, #tpu.memory_space<vmem>>, vector<1x64x64xbf16>
    %106 = vector.shape_cast %105 : vector<1x64x64xbf16> to vector<64x64xbf16>
    %cst_102 = arith.constant dense<0.000000e+00> : vector<8x64xf32>
    %107 = tpu.matmul %104, %106, %cst_102 {dimension_numbers = #tpu.dot_dimension_numbers<[1], [0], [0], [1], [0, 0, 1, 1], [], []>} : vector<8x64xbf16>, vector<64x64xbf16>, vector<8x64xf32> -> vector<8x64xf32>
    %108 = arith.addf %100, %107 : vector<8x64xf32>
    %109 = arith.truncf %62 : vector<32x256xf32> to vector<32x256xbf16>
    %c1_103 = arith.constant 1 : index
    %c0_104 = arith.constant 0 : index
    %c0_105 = arith.constant 0 : index
    %110 = vector.load %arg26[%c1_103, %c0_104, %c0_105] : memref<3x256x256xbf16, #tpu.memory_space<vmem>>, vector<1x256x256xbf16>
    %111 = vector.shape_cast %110 : vector<1x256x256xbf16> to vector<256x256xbf16>
    %cst_106 = arith.constant dense<0.000000e+00> : vector<32x256xf32>
    %112 = tpu.matmul %109, %111, %cst_106 {dimension_numbers = #tpu.dot_dimension_numbers<[1], [0], [0], [1], [0, 0, 1, 1], [], []>} : vector<32x256xbf16>, vector<256x256xbf16>, vector<32x256xf32> -> vector<32x256xf32>
    %c0_107 = arith.constant 0 : index
    %c0_108 = arith.constant 0 : index
    %c0_109 = arith.constant 0 : index
    %113 = vector.load %arg17[%c0_107, %c0_108, %c0_109] : memref<2x32x32xbf16, #tpu.memory_space<vmem>>, vector<1x32x32xbf16>
    %114 = vector.shape_cast %113 : vector<1x32x32xbf16> to vector<32x32xbf16>
    %cst_110 = arith.constant dense<0.000000e+00> : vector<32x256xf32>
    %115 = tpu.matmul %114, %109, %cst_110 {dimension_numbers = #tpu.dot_dimension_numbers<[1], [0], [0], [1], [0, 0, 1, 1], [], []>} : vector<32x32xbf16>, vector<32x256xbf16>, vector<32x256xf32> -> vector<32x256xf32>
    %116 = arith.truncf %115 : vector<32x256xf32> to vector<32x256xbf16>
    %c0_111 = arith.constant 0 : index
    %c0_112 = arith.constant 0 : index
    %c0_113 = arith.constant 0 : index
    %117 = vector.load %arg26[%c0_111, %c0_112, %c0_113] : memref<3x256x256xbf16, #tpu.memory_space<vmem>>, vector<1x256x256xbf16>
    %118 = vector.shape_cast %117 : vector<1x256x256xbf16> to vector<256x256xbf16>
    %cst_114 = arith.constant dense<0.000000e+00> : vector<32x256xf32>
    %119 = tpu.matmul %116, %118, %cst_114 {dimension_numbers = #tpu.dot_dimension_numbers<[1], [0], [0], [1], [0, 0, 1, 1], [], []>} : vector<32x256xbf16>, vector<256x256xbf16>, vector<32x256xf32> -> vector<32x256xf32>
    %120 = arith.addf %112, %119 : vector<32x256xf32>
    %c1_115 = arith.constant 1 : index
    %c0_116 = arith.constant 0 : index
    %c0_117 = arith.constant 0 : index
    %121 = vector.load %arg17[%c1_115, %c0_116, %c0_117] : memref<2x32x32xbf16, #tpu.memory_space<vmem>>, vector<1x32x32xbf16>
    %122 = vector.shape_cast %121 : vector<1x32x32xbf16> to vector<32x32xbf16>
    %cst_118 = arith.constant dense<0.000000e+00> : vector<32x256xf32>
    %123 = tpu.matmul %122, %109, %cst_118 {dimension_numbers = #tpu.dot_dimension_numbers<[1], [0], [0], [1], [0, 0, 1, 1], [], []>} : vector<32x32xbf16>, vector<32x256xbf16>, vector<32x256xf32> -> vector<32x256xf32>
    %124 = arith.truncf %123 : vector<32x256xf32> to vector<32x256xbf16>
    %c2_119 = arith.constant 2 : index
    %c0_120 = arith.constant 0 : index
    %c0_121 = arith.constant 0 : index
    %125 = vector.load %arg26[%c2_119, %c0_120, %c0_121] : memref<3x256x256xbf16, #tpu.memory_space<vmem>>, vector<1x256x256xbf16>
    %126 = vector.shape_cast %125 : vector<1x256x256xbf16> to vector<256x256xbf16>
    %cst_122 = arith.constant dense<0.000000e+00> : vector<32x256xf32>
    %127 = tpu.matmul %124, %126, %cst_122 {dimension_numbers = #tpu.dot_dimension_numbers<[1], [0], [0], [1], [0, 0, 1, 1], [], []>} : vector<32x256xbf16>, vector<256x256xbf16>, vector<32x256xf32> -> vector<32x256xf32>
    %128 = arith.addf %120, %127 : vector<32x256xf32>
    %129 = arith.truncf %85 : vector<16x128xf32> to vector<16x128xbf16>
    %130 = arith.truncf %108 : vector<8x64xf32> to vector<8x64xbf16>
    %c0_123 = arith.constant 0 : index
    %c0_124 = arith.constant 0 : index
    %c0_125 = arith.constant 0 : index
    %131 = vector.load %arg27[%c0_123, %c0_124, %c0_125] : memref<3x32x16xbf16, #tpu.memory_space<vmem>>, vector<1x32x16xbf16>
    %132 = vector.shape_cast %131 : vector<1x32x16xbf16> to vector<32x16xbf16>
    %cst_126 = arith.constant dense<0.000000e+00> : vector<32x128xf32>
    %133 = tpu.matmul %132, %129, %cst_126 {dimension_numbers = #tpu.dot_dimension_numbers<[1], [0], [0], [1], [0, 0, 1, 1], [], []>} : vector<32x16xbf16>, vector<16x128xbf16>, vector<32x128xf32> -> vector<32x128xf32>
    %134 = arith.truncf %133 : vector<32x128xf32> to vector<32x128xbf16>
    %c0_127 = arith.constant 0 : index
    %c0_128 = arith.constant 0 : index
    %c0_129 = arith.constant 0 : index
    %135 = vector.load %arg28[%c0_127, %c0_128, %c0_129] : memref<3x128x256xbf16, #tpu.memory_space<vmem>>, vector<1x128x256xbf16>
    %136 = vector.shape_cast %135 : vector<1x128x256xbf16> to vector<128x256xbf16>
    %cst_130 = arith.constant dense<0.000000e+00> : vector<32x256xf32>
    %137 = tpu.matmul %134, %136, %cst_130 {dimension_numbers = #tpu.dot_dimension_numbers<[1], [0], [0], [1], [0, 0, 1, 1], [], []>} : vector<32x128xbf16>, vector<128x256xbf16>, vector<32x256xf32> -> vector<32x256xf32>
    %138 = arith.addf %128, %137 : vector<32x256xf32>
    %c1_131 = arith.constant 1 : index
    %c0_132 = arith.constant 0 : index
    %c0_133 = arith.constant 0 : index
    %139 = vector.load %arg27[%c1_131, %c0_132, %c0_133] : memref<3x32x16xbf16, #tpu.memory_space<vmem>>, vector<1x32x16xbf16>
    %140 = vector.shape_cast %139 : vector<1x32x16xbf16> to vector<32x16xbf16>
    %cst_134 = arith.constant dense<0.000000e+00> : vector<32x128xf32>
    %141 = tpu.matmul %140, %129, %cst_134 {dimension_numbers = #tpu.dot_dimension_numbers<[1], [0], [0], [1], [0, 0, 1, 1], [], []>} : vector<32x16xbf16>, vector<16x128xbf16>, vector<32x128xf32> -> vector<32x128xf32>
    %142 = arith.truncf %141 : vector<32x128xf32> to vector<32x128xbf16>
    %c1_135 = arith.constant 1 : index
    %c0_136 = arith.constant 0 : index
    %c0_137 = arith.constant 0 : index
    %143 = vector.load %arg28[%c1_135, %c0_136, %c0_137] : memref<3x128x256xbf16, #tpu.memory_space<vmem>>, vector<1x128x256xbf16>
    %144 = vector.shape_cast %143 : vector<1x128x256xbf16> to vector<128x256xbf16>
    %cst_138 = arith.constant dense<0.000000e+00> : vector<32x256xf32>
    %145 = tpu.matmul %142, %144, %cst_138 {dimension_numbers = #tpu.dot_dimension_numbers<[1], [0], [0], [1], [0, 0, 1, 1], [], []>} : vector<32x128xbf16>, vector<128x256xbf16>, vector<32x256xf32> -> vector<32x256xf32>
    %146 = arith.addf %138, %145 : vector<32x256xf32>
    %c2_139 = arith.constant 2 : index
    %c0_140 = arith.constant 0 : index
    %c0_141 = arith.constant 0 : index
    %147 = vector.load %arg27[%c2_139, %c0_140, %c0_141] : memref<3x32x16xbf16, #tpu.memory_space<vmem>>, vector<1x32x16xbf16>
    %148 = vector.shape_cast %147 : vector<1x32x16xbf16> to vector<32x16xbf16>
    %cst_142 = arith.constant dense<0.000000e+00> : vector<32x128xf32>
    %149 = tpu.matmul %148, %129, %cst_142 {dimension_numbers = #tpu.dot_dimension_numbers<[1], [0], [0], [1], [0, 0, 1, 1], [], []>} : vector<32x16xbf16>, vector<16x128xbf16>, vector<32x128xf32> -> vector<32x128xf32>
    %150 = arith.truncf %149 : vector<32x128xf32> to vector<32x128xbf16>
    %c2_143 = arith.constant 2 : index
    %c0_144 = arith.constant 0 : index
    %c0_145 = arith.constant 0 : index
    %151 = vector.load %arg28[%c2_143, %c0_144, %c0_145] : memref<3x128x256xbf16, #tpu.memory_space<vmem>>, vector<1x128x256xbf16>
    %152 = vector.shape_cast %151 : vector<1x128x256xbf16> to vector<128x256xbf16>
    %cst_146 = arith.constant dense<0.000000e+00> : vector<32x256xf32>
    %153 = tpu.matmul %150, %152, %cst_146 {dimension_numbers = #tpu.dot_dimension_numbers<[1], [0], [0], [1], [0, 0, 1, 1], [], []>} : vector<32x128xbf16>, vector<128x256xbf16>, vector<32x256xf32> -> vector<32x256xf32>
    %154 = arith.addf %146, %153 : vector<32x256xf32>
    %c0_147 = arith.constant 0 : index
    %c0_148 = arith.constant 0 : index
    %c0_149 = arith.constant 0 : index
    %155 = vector.load %arg29[%c0_147, %c0_148, %c0_149] : memref<3x32x8xbf16, #tpu.memory_space<vmem>>, vector<1x32x8xbf16>
    %156 = vector.shape_cast %155 : vector<1x32x8xbf16> to vector<32x8xbf16>
    %cst_150 = arith.constant dense<0.000000e+00> : vector<32x64xf32>
    %157 = tpu.matmul %156, %130, %cst_150 {dimension_numbers = #tpu.dot_dimension_numbers<[1], [0], [0], [1], [0, 0, 1, 1], [], []>} : vector<32x8xbf16>, vector<8x64xbf16>, vector<32x64xf32> -> vector<32x64xf32>
    %158 = arith.truncf %157 : vector<32x64xf32> to vector<32x64xbf16>
    %c0_151 = arith.constant 0 : index
    %c0_152 = arith.constant 0 : index
    %c0_153 = arith.constant 0 : index
    %159 = vector.load %arg30[%c0_151, %c0_152, %c0_153] : memref<3x64x256xbf16, #tpu.memory_space<vmem>>, vector<1x64x256xbf16>
    %160 = vector.shape_cast %159 : vector<1x64x256xbf16> to vector<64x256xbf16>
    %cst_154 = arith.constant dense<0.000000e+00> : vector<32x256xf32>
    %161 = tpu.matmul %158, %160, %cst_154 {dimension_numbers = #tpu.dot_dimension_numbers<[1], [0], [0], [1], [0, 0, 1, 1], [], []>} : vector<32x64xbf16>, vector<64x256xbf16>, vector<32x256xf32> -> vector<32x256xf32>
    %162 = arith.addf %154, %161 : vector<32x256xf32>
    %c1_155 = arith.constant 1 : index
    %c0_156 = arith.constant 0 : index
    %c0_157 = arith.constant 0 : index
    %163 = vector.load %arg29[%c1_155, %c0_156, %c0_157] : memref<3x32x8xbf16, #tpu.memory_space<vmem>>, vector<1x32x8xbf16>
    %164 = vector.shape_cast %163 : vector<1x32x8xbf16> to vector<32x8xbf16>
    %cst_158 = arith.constant dense<0.000000e+00> : vector<32x64xf32>
    %165 = tpu.matmul %164, %130, %cst_158 {dimension_numbers = #tpu.dot_dimension_numbers<[1], [0], [0], [1], [0, 0, 1, 1], [], []>} : vector<32x8xbf16>, vector<8x64xbf16>, vector<32x64xf32> -> vector<32x64xf32>
    %166 = arith.truncf %165 : vector<32x64xf32> to vector<32x64xbf16>
    %c1_159 = arith.constant 1 : index
    %c0_160 = arith.constant 0 : index
    %c0_161 = arith.constant 0 : index
    %167 = vector.load %arg30[%c1_159, %c0_160, %c0_161] : memref<3x64x256xbf16, #tpu.memory_space<vmem>>, vector<1x64x256xbf16>
    %168 = vector.shape_cast %167 : vector<1x64x256xbf16> to vector<64x256xbf16>
    %cst_162 = arith.constant dense<0.000000e+00> : vector<32x256xf32>
    %169 = tpu.matmul %166, %168, %cst_162 {dimension_numbers = #tpu.dot_dimension_numbers<[1], [0], [0], [1], [0, 0, 1, 1], [], []>} : vector<32x64xbf16>, vector<64x256xbf16>, vector<32x256xf32> -> vector<32x256xf32>
    %170 = arith.addf %162, %169 : vector<32x256xf32>
    %c2_163 = arith.constant 2 : index
    %c0_164 = arith.constant 0 : index
    %c0_165 = arith.constant 0 : index
    %171 = vector.load %arg29[%c2_163, %c0_164, %c0_165] : memref<3x32x8xbf16, #tpu.memory_space<vmem>>, vector<1x32x8xbf16>
    %172 = vector.shape_cast %171 : vector<1x32x8xbf16> to vector<32x8xbf16>
    %cst_166 = arith.constant dense<0.000000e+00> : vector<32x64xf32>
    %173 = tpu.matmul %172, %130, %cst_166 {dimension_numbers = #tpu.dot_dimension_numbers<[1], [0], [0], [1], [0, 0, 1, 1], [], []>} : vector<32x8xbf16>, vector<8x64xbf16>, vector<32x64xf32> -> vector<32x64xf32>
    %174 = arith.truncf %173 : vector<32x64xf32> to vector<32x64xbf16>
    %c2_167 = arith.constant 2 : index
    %c0_168 = arith.constant 0 : index
    %c0_169 = arith.constant 0 : index
    %175 = vector.load %arg30[%c2_167, %c0_168, %c0_169] : memref<3x64x256xbf16, #tpu.memory_space<vmem>>, vector<1x64x256xbf16>
    %176 = vector.shape_cast %175 : vector<1x64x256xbf16> to vector<64x256xbf16>
    %cst_170 = arith.constant dense<0.000000e+00> : vector<32x256xf32>
    %177 = tpu.matmul %174, %176, %cst_170 {dimension_numbers = #tpu.dot_dimension_numbers<[1], [0], [0], [1], [0, 0, 1, 1], [], []>} : vector<32x64xbf16>, vector<64x256xbf16>, vector<32x256xf32> -> vector<32x256xf32>
    %178 = arith.addf %170, %177 : vector<32x256xf32>
    %c0_171 = arith.constant 0 : index
    %c0_172 = arith.constant 0 : index
    %c0_173 = arith.constant 0 : index
    %179 = vector.load %arg31[%c0_171, %c0_172, %c0_173] : memref<3x32x4xbf16, #tpu.memory_space<vmem>>, vector<1x32x4xbf16>
    %180 = vector.shape_cast %179 : vector<1x32x4xbf16> to vector<32x4xbf16>
    %cst_174 = arith.constant dense<0.000000e+00> : vector<32x32xf32>
    %181 = tpu.matmul %180, %21, %cst_174 {dimension_numbers = #tpu.dot_dimension_numbers<[1], [0], [0], [1], [0, 0, 1, 1], [], []>} : vector<32x4xbf16>, vector<4x32xbf16>, vector<32x32xf32> -> vector<32x32xf32>
    %182 = arith.truncf %181 : vector<32x32xf32> to vector<32x32xbf16>
    %c0_175 = arith.constant 0 : index
    %c0_176 = arith.constant 0 : index
    %c0_177 = arith.constant 0 : index
    %183 = vector.load %arg32[%c0_175, %c0_176, %c0_177] : memref<3x32x256xbf16, #tpu.memory_space<vmem>>, vector<1x32x256xbf16>
    %184 = vector.shape_cast %183 : vector<1x32x256xbf16> to vector<32x256xbf16>
    %cst_178 = arith.constant dense<0.000000e+00> : vector<32x256xf32>
    %185 = tpu.matmul %182, %184, %cst_178 {dimension_numbers = #tpu.dot_dimension_numbers<[1], [0], [0], [1], [0, 0, 1, 1], [], []>} : vector<32x32xbf16>, vector<32x256xbf16>, vector<32x256xf32> -> vector<32x256xf32>
    %186 = arith.addf %178, %185 : vector<32x256xf32>
    %c1_179 = arith.constant 1 : index
    %c0_180 = arith.constant 0 : index
    %c0_181 = arith.constant 0 : index
    %187 = vector.load %arg31[%c1_179, %c0_180, %c0_181] : memref<3x32x4xbf16, #tpu.memory_space<vmem>>, vector<1x32x4xbf16>
    %188 = vector.shape_cast %187 : vector<1x32x4xbf16> to vector<32x4xbf16>
    %cst_182 = arith.constant dense<0.000000e+00> : vector<32x32xf32>
    %189 = tpu.matmul %188, %21, %cst_182 {dimension_numbers = #tpu.dot_dimension_numbers<[1], [0], [0], [1], [0, 0, 1, 1], [], []>} : vector<32x4xbf16>, vector<4x32xbf16>, vector<32x32xf32> -> vector<32x32xf32>
    %190 = arith.truncf %189 : vector<32x32xf32> to vector<32x32xbf16>
    %c1_183 = arith.constant 1 : index
    %c0_184 = arith.constant 0 : index
    %c0_185 = arith.constant 0 : index
    %191 = vector.load %arg32[%c1_183, %c0_184, %c0_185] : memref<3x32x256xbf16, #tpu.memory_space<vmem>>, vector<1x32x256xbf16>
    %192 = vector.shape_cast %191 : vector<1x32x256xbf16> to vector<32x256xbf16>
    %cst_186 = arith.constant dense<0.000000e+00> : vector<32x256xf32>
    %193 = tpu.matmul %190, %192, %cst_186 {dimension_numbers = #tpu.dot_dimension_numbers<[1], [0], [0], [1], [0, 0, 1, 1], [], []>} : vector<32x32xbf16>, vector<32x256xbf16>, vector<32x256xf32> -> vector<32x256xf32>
    %194 = arith.addf %186, %193 : vector<32x256xf32>
    %c2_187 = arith.constant 2 : index
    %c0_188 = arith.constant 0 : index
    %c0_189 = arith.constant 0 : index
    %195 = vector.load %arg31[%c2_187, %c0_188, %c0_189] : memref<3x32x4xbf16, #tpu.memory_space<vmem>>, vector<1x32x4xbf16>
    %196 = vector.shape_cast %195 : vector<1x32x4xbf16> to vector<32x4xbf16>
    %cst_190 = arith.constant dense<0.000000e+00> : vector<32x32xf32>
    %197 = tpu.matmul %196, %21, %cst_190 {dimension_numbers = #tpu.dot_dimension_numbers<[1], [0], [0], [1], [0, 0, 1, 1], [], []>} : vector<32x4xbf16>, vector<4x32xbf16>, vector<32x32xf32> -> vector<32x32xf32>
    %198 = arith.truncf %197 : vector<32x32xf32> to vector<32x32xbf16>
    %c2_191 = arith.constant 2 : index
    %c0_192 = arith.constant 0 : index
    %c0_193 = arith.constant 0 : index
    %199 = vector.load %arg32[%c2_191, %c0_192, %c0_193] : memref<3x32x256xbf16, #tpu.memory_space<vmem>>, vector<1x32x256xbf16>
    %200 = vector.shape_cast %199 : vector<1x32x256xbf16> to vector<32x256xbf16>
    %cst_194 = arith.constant dense<0.000000e+00> : vector<32x256xf32>
    %201 = tpu.matmul %198, %200, %cst_194 {dimension_numbers = #tpu.dot_dimension_numbers<[1], [0], [0], [1], [0, 0, 1, 1], [], []>} : vector<32x32xbf16>, vector<32x256xbf16>, vector<32x256xf32> -> vector<32x256xf32>
    %202 = arith.addf %194, %201 : vector<32x256xf32>
    %c0_195 = arith.constant 0 : index
    %c0_196 = arith.constant 0 : index
    %203 = vector.load %arg33[%c0_195, %c0_196] : memref<1x256xf32, #tpu.memory_space<vmem>>, vector<1x256xf32>
    %204 = vector.broadcast %203 : vector<1x256xf32> to vector<32x256xf32>
    %205 = arith.mulf %202, %204 : vector<32x256xf32>
    %c0_197 = arith.constant 0 : index
    %c0_198 = arith.constant 0 : index
    %206 = vector.load %arg34[%c0_197, %c0_198] : memref<1x256xf32, #tpu.memory_space<vmem>>, vector<1x256xf32>
    %207 = vector.broadcast %206 : vector<1x256xf32> to vector<32x256xf32>
    %208 = arith.addf %205, %207 : vector<32x256xf32>
    %cst_199 = arith.constant 0.000000e+00 : f32
    %209 = vector.broadcast %cst_199 : f32 to vector<32x256xf32>
    %210 = arith.maximumf %208, %209 : vector<32x256xf32>
    %c0_200 = arith.constant 0 : index
    %c0_201 = arith.constant 0 : index
    %211 = vector.load %arg35[%c0_200, %c0_201] : memref<32x256xf32, #tpu.memory_space<vmem>>, vector<32x256xf32>
    tpu.vector_store %arg35[%c0_200, %c0_201], %210 {strides = array<i32>} : memref<32x256xf32, #tpu.memory_space<vmem>>, vector<32x256xf32>,
    return
  }
  func.func @transform_0(%arg0: i32) -> (i32, i32) {
    %c0_i32 = arith.constant 0 : i32
    %c0_i32_0 = arith.constant 0 : i32
    return %arg0, %c0_i32 : i32, i32
  }
  func.func @transform_1(%arg0: i32) -> (i32, i32) {
    %c0_i32 = arith.constant 0 : i32
    %c0_i32_0 = arith.constant 0 : i32
    return %arg0, %c0_i32 : i32, i32
  }
  func.func @transform_2(%arg0: i32) -> (i32, i32) {
    %c0_i32 = arith.constant 0 : i32
    %c0_i32_0 = arith.constant 0 : i32
    return %arg0, %c0_i32 : i32, i32
  }
  func.func @transform_3(%arg0: i32) -> (i32, i32) {
    %c0_i32 = arith.constant 0 : i32
    %c0_i32_0 = arith.constant 0 : i32
    return %arg0, %c0_i32 : i32, i32
  }
  func.func @transform_4(%arg0: i32) -> (i32, i32) {
    %c0_i32 = arith.constant 0 : i32
    %c0_i32_0 = arith.constant 0 : i32
    %c0_i32_1 = arith.constant 0 : i32
    return %c0_i32, %c0_i32_0 : i32, i32
  }
  func.func @transform_5(%arg0: i32) -> (i32, i32) {
    %c0_i32 = arith.constant 0 : i32
    %c0_i32_0 = arith.constant 0 : i32
    %c0_i32_1 = arith.constant 0 : i32
    return %c0_i32, %c0_i32_0 : i32, i32
  }
  func.func @transform_6(%arg0: i32) -> (i32, i32) {
    %c0_i32 = arith.constant 0 : i32
    %c0_i32_0 = arith.constant 0 : i32
    %c0_i32_1 = arith.constant 0 : i32
    return %c0_i32, %c0_i32_0 : i32, i32
  }
  func.func @transform_7(%arg0: i32) -> (i32, i32) {
    %c0_i32 = arith.constant 0 : i32
    %c0_i32_0 = arith.constant 0 : i32
    %c0_i32_1 = arith.constant 0 : i32
    return %c0_i32, %c0_i32_0 : i32, i32
  }
  func.func @transform_8(%arg0: i32) -> (i32, i32) {
    %c0_i32 = arith.constant 0 : i32
    %c0_i32_0 = arith.constant 0 : i32
    %c0_i32_1 = arith.constant 0 : i32
    return %c0_i32, %c0_i32_0 : i32, i32
  }
  func.func @transform_9(%arg0: i32) -> (i32, i32) {
    %c0_i32 = arith.constant 0 : i32
    %c0_i32_0 = arith.constant 0 : i32
    %c0_i32_1 = arith.constant 0 : i32
    return %c0_i32, %c0_i32_0 : i32, i32
  }
  func.func @transform_10(%arg0: i32) -> (i32, i32) {
    %c0_i32 = arith.constant 0 : i32
    %c0_i32_0 = arith.constant 0 : i32
    %c0_i32_1 = arith.constant 0 : i32
    return %c0_i32, %c0_i32_0 : i32, i32
  }
  func.func @transform_11(%arg0: i32) -> (i32, i32) {
    %c0_i32 = arith.constant 0 : i32
    %c0_i32_0 = arith.constant 0 : i32
    %c0_i32_1 = arith.constant 0 : i32
    return %c0_i32, %c0_i32_0 : i32, i32
  }
  func.func @transform_12(%arg0: i32) -> (i32, i32) {
    %c0_i32 = arith.constant 0 : i32
    %c0_i32_0 = arith.constant 0 : i32
    %c0_i32_1 = arith.constant 0 : i32
    return %c0_i32, %c0_i32_0 : i32, i32
  }
  func.func @transform_13(%arg0: i32) -> (i32, i32) {
    %c0_i32 = arith.constant 0 : i32
    %c0_i32_0 = arith.constant 0 : i32
    %c0_i32_1 = arith.constant 0 : i32
    return %c0_i32, %c0_i32_0 : i32, i32
  }
  func.func @transform_14(%arg0: i32) -> (i32, i32) {
    %c0_i32 = arith.constant 0 : i32
    %c0_i32_0 = arith.constant 0 : i32
    %c0_i32_1 = arith.constant 0 : i32
    return %c0_i32, %c0_i32_0 : i32, i32
  }
  func.func @transform_15(%arg0: i32) -> (i32, i32) {
    %c0_i32 = arith.constant 0 : i32
    %c0_i32_0 = arith.constant 0 : i32
    %c0_i32_1 = arith.constant 0 : i32
    return %c0_i32, %c0_i32_0 : i32, i32
  }
  func.func @transform_16(%arg0: i32) -> (i32, i32, i32) {
    %c0_i32 = arith.constant 0 : i32
    %c0_i32_0 = arith.constant 0 : i32
    %c0_i32_1 = arith.constant 0 : i32
    %c0_i32_2 = arith.constant 0 : i32
    return %c0_i32, %c0_i32_0, %c0_i32_1 : i32, i32, i32
  }
  func.func @transform_17(%arg0: i32) -> (i32, i32, i32) {
    %c0_i32 = arith.constant 0 : i32
    %c0_i32_0 = arith.constant 0 : i32
    %c0_i32_1 = arith.constant 0 : i32
    %c0_i32_2 = arith.constant 0 : i32
    return %c0_i32, %c0_i32_0, %c0_i32_1 : i32, i32, i32
  }
  func.func @transform_18(%arg0: i32) -> (i32, i32, i32) {
    %c0_i32 = arith.constant 0 : i32
    %c0_i32_0 = arith.constant 0 : i32
    %c0_i32_1 = arith.constant 0 : i32
    %c0_i32_2 = arith.constant 0 : i32
    return %c0_i32, %c0_i32_0, %c0_i32_1 : i32, i32, i32
  }
  func.func @transform_19(%arg0: i32) -> (i32, i32, i32) {
    %c0_i32 = arith.constant 0 : i32
    %c0_i32_0 = arith.constant 0 : i32
    %c0_i32_1 = arith.constant 0 : i32
    %c0_i32_2 = arith.constant 0 : i32
    return %c0_i32, %c0_i32_0, %c0_i32_1 : i32, i32, i32
  }
  func.func @transform_20(%arg0: i32) -> (i32, i32) {
    %c0_i32 = arith.constant 0 : i32
    %c0_i32_0 = arith.constant 0 : i32
    %c0_i32_1 = arith.constant 0 : i32
    return %c0_i32, %c0_i32_0 : i32, i32
  }
  func.func @transform_21(%arg0: i32) -> (i32, i32, i32) {
    %c0_i32 = arith.constant 0 : i32
    %c0_i32_0 = arith.constant 0 : i32
    %c0_i32_1 = arith.constant 0 : i32
    %c0_i32_2 = arith.constant 0 : i32
    return %c0_i32, %c0_i32_0, %c0_i32_1 : i32, i32, i32
  }
  func.func @transform_22(%arg0: i32) -> (i32, i32) {
    %c0_i32 = arith.constant 0 : i32
    %c0_i32_0 = arith.constant 0 : i32
    %c0_i32_1 = arith.constant 0 : i32
    return %c0_i32, %c0_i32_0 : i32, i32
  }
  func.func @transform_23(%arg0: i32) -> (i32, i32, i32) {
    %c0_i32 = arith.constant 0 : i32
    %c0_i32_0 = arith.constant 0 : i32
    %c0_i32_1 = arith.constant 0 : i32
    %c0_i32_2 = arith.constant 0 : i32
    return %c0_i32, %c0_i32_0, %c0_i32_1 : i32, i32, i32
  }
  func.func @transform_24(%arg0: i32) -> (i32, i32) {
    %c0_i32 = arith.constant 0 : i32
    %c0_i32_0 = arith.constant 0 : i32
    %c0_i32_1 = arith.constant 0 : i32
    return %c0_i32, %c0_i32_0 : i32, i32
  }
  func.func @transform_25(%arg0: i32) -> (i32, i32, i32) {
    %c0_i32 = arith.constant 0 : i32
    %c0_i32_0 = arith.constant 0 : i32
    %c0_i32_1 = arith.constant 0 : i32
    %c0_i32_2 = arith.constant 0 : i32
    return %c0_i32, %c0_i32_0, %c0_i32_1 : i32, i32, i32
  }
  func.func @transform_26(%arg0: i32) -> (i32, i32, i32) {
    %c0_i32 = arith.constant 0 : i32
    %c0_i32_0 = arith.constant 0 : i32
    %c0_i32_1 = arith.constant 0 : i32
    %c0_i32_2 = arith.constant 0 : i32
    return %c0_i32, %c0_i32_0, %c0_i32_1 : i32, i32, i32
  }
  func.func @transform_27(%arg0: i32) -> (i32, i32, i32) {
    %c0_i32 = arith.constant 0 : i32
    %c0_i32_0 = arith.constant 0 : i32
    %c0_i32_1 = arith.constant 0 : i32
    %c0_i32_2 = arith.constant 0 : i32
    return %c0_i32, %c0_i32_0, %c0_i32_1 : i32, i32, i32
  }
  func.func @transform_28(%arg0: i32) -> (i32, i32, i32) {
    %c0_i32 = arith.constant 0 : i32
    %c0_i32_0 = arith.constant 0 : i32
    %c0_i32_1 = arith.constant 0 : i32
    %c0_i32_2 = arith.constant 0 : i32
    return %c0_i32, %c0_i32_0, %c0_i32_1 : i32, i32, i32
  }
  func.func @transform_29(%arg0: i32) -> (i32, i32, i32) {
    %c0_i32 = arith.constant 0 : i32
    %c0_i32_0 = arith.constant 0 : i32
    %c0_i32_1 = arith.constant 0 : i32
    %c0_i32_2 = arith.constant 0 : i32
    return %c0_i32, %c0_i32_0, %c0_i32_1 : i32, i32, i32
  }
  func.func @transform_30(%arg0: i32) -> (i32, i32, i32) {
    %c0_i32 = arith.constant 0 : i32
    %c0_i32_0 = arith.constant 0 : i32
    %c0_i32_1 = arith.constant 0 : i32
    %c0_i32_2 = arith.constant 0 : i32
    return %c0_i32, %c0_i32_0, %c0_i32_1 : i32, i32, i32
  }
  func.func @transform_31(%arg0: i32) -> (i32, i32, i32) {
    %c0_i32 = arith.constant 0 : i32
    %c0_i32_0 = arith.constant 0 : i32
    %c0_i32_1 = arith.constant 0 : i32
    %c0_i32_2 = arith.constant 0 : i32
    return %c0_i32, %c0_i32_0, %c0_i32_1 : i32, i32, i32
  }
  func.func @transform_32(%arg0: i32) -> (i32, i32) {
    %c0_i32 = arith.constant 0 : i32
    %c0_i32_0 = arith.constant 0 : i32
    %c0_i32_1 = arith.constant 0 : i32
    return %c0_i32, %c0_i32_0 : i32, i32
  }
  func.func @transform_33(%arg0: i32) -> (i32, i32) {
    %c0_i32 = arith.constant 0 : i32
    %c0_i32_0 = arith.constant 0 : i32
    %c0_i32_1 = arith.constant 0 : i32
    return %c0_i32, %c0_i32_0 : i32, i32
  }
  func.func @transform_34(%arg0: i32) -> (i32, i32) {
    %c0_i32 = arith.constant 0 : i32
    %c0_i32_0 = arith.constant 0 : i32
    return %arg0, %c0_i32 : i32, i32
  }
}

</mosaic_0001>

<llo_original>
// kernel: _fpn_fuse_call.1
$region0: #{_fpn_fuse_call.1}
  #allocation0 [shape = 'u32[]', space=smem, size = 0x4, offset = 0x4, fixed_abs, tag = 'smem constant byte address 0x4 - core index']
  #allocation1 [shape = 'u32[72,128]{1,0:T(1,128)}', space=vmem, size = 0x9000, scoped, tag = 'internal scratch']
  %s0 = inlined_call_operand.smem [shape: u32[35], index: -1, kind: input, shape index: {}]
  %s1 = sld [smem:[%s0]]
  %s2 = scalar_lea.smem %s0, 1
  %s3 = sld [smem:[%s2]]
  %s4 = scalar_lea.smem %s0, 2
  %s5 = sld [smem:[%s4]]
  %s6 = scalar_lea.smem %s0, 3
  %s7 = sld [smem:[%s6]]
  %s8 = scalar_lea.smem %s0, 4
  %s9 = sld [smem:[%s8]]
  %s10 = scalar_lea.smem %s0, 5
  %s11 = sld [smem:[%s10]]
  %s12 = scalar_lea.smem %s0, 6
  %s13 = sld [smem:[%s12]]
  %s14 = scalar_lea.smem %s0, 7
  %s15 = sld [smem:[%s14]]
  %s16 = scalar_lea.smem %s0, 8
  %s17 = sld [smem:[%s16]]
  %s18 = scalar_lea.smem %s0, 9
  %s19 = sld [smem:[%s18]]
  %s20 = scalar_lea.smem %s0, 10
  %s21 = sld [smem:[%s20]]
  %s22 = scalar_lea.smem %s0, 11
  %s23 = sld [smem:[%s22]]
  %s24 = scalar_lea.smem %s0, 12
  %s25 = sld [smem:[%s24]]
  %s26 = scalar_lea.smem %s0, 13
  %s27 = sld [smem:[%s26]]
  %s28 = scalar_lea.smem %s0, 14
  %s29 = sld [smem:[%s28]]
  %s30 = scalar_lea.smem %s0, 15
  %s31 = sld [smem:[%s30]]
  %s32 = scalar_lea.smem %s0, 16
  %s33 = sld [smem:[%s32]]
  %s34 = scalar_lea.smem %s0, 17
  %s35 = sld [smem:[%s34]]
  %s36 = scalar_lea.smem %s0, 18
  %s37 = sld [smem:[%s36]]
  %s38 = scalar_lea.smem %s0, 19
  %s39 = sld [smem:[%s38]]
  %s40 = scalar_lea.smem %s0, 20
  %s41 = sld [smem:[%s40]]
  %s42 = scalar_lea.smem %s0, 21
  %s43 = sld [smem:[%s42]]
  %s44 = scalar_lea.smem %s0, 22
  %s45 = sld [smem:[%s44]]
  %s46 = scalar_lea.smem %s0, 23
  %s47 = sld [smem:[%s46]]
  %s48 = scalar_lea.smem %s0, 24
  %s49 = sld [smem:[%s48]]
  %s50 = scalar_lea.smem %s0, 25
  %s51 = sld [smem:[%s50]]
  %s52 = scalar_lea.smem %s0, 26
  %s53 = sld [smem:[%s52]]
  %s54 = scalar_lea.smem %s0, 27
  %s55 = sld [smem:[%s54]]
  %s56 = scalar_lea.smem %s0, 28
  %s57 = sld [smem:[%s56]]
  %s58 = scalar_lea.smem %s0, 29
  %s59 = sld [smem:[%s58]]
  %s60 = scalar_lea.smem %s0, 30
  %s61 = sld [smem:[%s60]]
  %s62 = scalar_lea.smem %s0, 31
  %s63 = sld [smem:[%s62]]
  %s64 = scalar_lea.smem %s0, 32
  %s65 = sld [smem:[%s64]]
  %s66 = scalar_lea.smem %s0, 33
  %s67 = sld [smem:[%s66]]
  %s68 = scalar_lea.smem %s0, 34
  %s69 = sld [smem:[%s68]]
  %s70 = sld [smem:[#allocation0]]
  $region186: #{_fpn_fuse_call.1} parent=0
    _
  %s72 = ssub.s32 1, %s70
  %s73 = scalar_select 0, %s72, %s70
  $region1: #{_fpn_fuse_call.1} parent=0
    #allocation2 [shape = 'u8[512]{0}', space=vmem, size = 0x400, scoped, tag = 'input window, operand 7, single buffered']
    #allocation3 [shape = 's32[1]{0}', space=sflag, size = 0x4, scoped, tag = 'scoped memory for _fpn_fuse_call.1']
    #allocation4 [shape = 'u8[512]{0}', space=vmem, size = 0x400, scoped, tag = 'input window, operand 9, single buffered']
    #allocation5 [shape = 's32[1]{0}', space=sflag, size = 0x4, scoped, tag = 'scoped memory for _fpn_fuse_call.1']
    #allocation6 [shape = 'u8[393216]{0}', space=vmem, size = 0x60000, scoped, tag = 'input window, operand 19, single buffered']
    #allocation7 [shape = 'u8[1024]{0}', space=vmem, size = 0x400, scoped, tag = 'input window, operand 20, single buffered']
    #allocation8 [shape = 's32[1]{0}', space=sflag, size = 0x4, scoped, tag = 'scoped memory for _fpn_fuse_call.1']
    #allocation9 [shape = 'u8[512]{0}', space=vmem, size = 0x400, scoped, tag = 'input window, operand 22, single buffered']
    #allocation10 [shape = 'u8[512]{0}', space=vmem, size = 0x400, scoped, tag = 'input window, operand 24, single buffered']
    #allocation11 [shape = 's32[1]{0}', space=sflag, size = 0x4, scoped, tag = 'scoped memory for _fpn_fuse_call.1']
    #allocation12 [shape = 'u8[393216]{0}', space=vmem, size = 0x60000, scoped, tag = 'input window, operand 25, single buffered']
    #allocation13 [shape = 'u8[49152]{0}', space=vmem, size = 0xc000, scoped, tag = 'input window, operand 31, single buffered']
    #allocation14 [shape = 's32[1]{0}', space=sflag, size = 0x4, scoped, tag = 'scoped memory for _fpn_fuse_call.1']
    #allocation15 [shape = 'u8[1024]{0}', space=vmem, size = 0x400, scoped, tag = 'input window, operand 32, single buffered']
    #allocation16 [shape = 'u8[1024]{0}', space=vmem, size = 0x400, scoped, tag = 'input window, operand 33, single buffered']
    #allocation17 [shape = 's32[1]{0}', space=sflag, size = 0x4, scoped, tag = 'scoped memory for _fpn_fuse_call.1']
    %74 = vsyncpa [#allocation3], 0
    %75 = vsyncpa [#allocation5], 0
    %76 = vsyncpa [#allocation8], 0
    %77 = vsyncpa [#allocation11], 0
    %78 = vsyncpa [#allocation14], 0
    %79 = vsyncpa [#allocation17], 0
    // Predicated region
    $region2: #{_fpn_fuse_call.1} parent=1 // pred_check
      _
    $region3: #{_fpn_fuse_call.1} parent=1 // pred_check_branch
      %81 = sbr.rel (0) target = $region5
    $region4: #{_fpn_fuse_call.1} parent=1 // pred_region
      _
    $region5: #{_fpn_fuse_call.1} parent=1 // pred_fallthru
      _
    // Predicated region
    $region6: #{_fpn_fuse_call.1} parent=1 // pred_check
      _
    $region7: #{_fpn_fuse_call.1} parent=1 // pred_check_branch
      %83 = sbr.rel (0) target = $region9
    $region8: #{_fpn_fuse_call.1} parent=1 // pred_region
      _
    $region9: #{_fpn_fuse_call.1} parent=1 // pred_fallthru
      _
    // Predicated region
    $region10: #{_fpn_fuse_call.1} parent=1 // pred_check
      _
    $region11: #{_fpn_fuse_call.1} parent=1 // pred_check_branch
      %85 = sbr.rel (0) target = $region13
    $region12: #{_fpn_fuse_call.1} parent=1 // pred_region
      _
    $region13: #{_fpn_fuse_call.1} parent=1 // pred_fallthru
      _
    // Predicated region
    $region14: #{_fpn_fuse_call.1} parent=1 // pred_check
      _
    $region15: #{_fpn_fuse_call.1} parent=1 // pred_check_branch
      %87 = sbr.rel (0) target = $region17
    $region16: #{_fpn_fuse_call.1} parent=1 // pred_region
      _
    $region17: #{_fpn_fuse_call.1} parent=1 // pred_fallthru
      _
    // Predicated region
    $region18: #{_fpn_fuse_call.1} parent=1 // pred_check
      _
    $region19: #{_fpn_fuse_call.1} parent=1 // pred_check_branch
      %89 = sbr.rel (0) target = $region21
    $region20: #{_fpn_fuse_call.1} parent=1 // pred_region
      _
    $region21: #{_fpn_fuse_call.1} parent=1 // pred_fallthru
      _
    // Predicated region
    $region22: #{_fpn_fuse_call.1} parent=1 // pred_check
      _
    $region23: #{_fpn_fuse_call.1} parent=1 // pred_check_branch
      %91 = sbr.rel (0) target = $region25
    $region24: #{_fpn_fuse_call.1} parent=1 // pred_region
      _
    $region25: #{_fpn_fuse_call.1} parent=1 // pred_fallthru
      _
    // Predicated region
    $region26: #{_fpn_fuse_call.1} parent=1 // pred_check
      _
    $region27: #{_fpn_fuse_call.1} parent=1 // pred_check_branch
      %93 = sbr.rel (0) target = $region29
    $region28: #{_fpn_fuse_call.1} parent=1 // pred_region
      _
    $region29: #{_fpn_fuse_call.1} parent=1 // pred_fallthru
      _
    // Predicated region
    $region30: #{_fpn_fuse_call.1} parent=1 // pred_check
      _
    $region31: #{_fpn_fuse_call.1} parent=1 // pred_check_branch
      %95 = sbr.rel (0) target = $region33
    $region32: #{_fpn_fuse_call.1} parent=1 // pred_region
      %97 = vsyncadd [#allocation3], 0
      %s99 = sshll.u32 %s15, 4
      %s100 = int_to_ptr.hbm [resolvable:$true] %s99
      %s101 = sshll.u32 [#allocation2], 4
      %s102 = int_to_ptr.vmem [resolvable:$true] %s101
      %104 = dma.hbm_to_vmem [thread:$0]  %s100, 16, %s102, [#allocation3]
    $region33: #{_fpn_fuse_call.1} parent=1 // pred_fallthru
      _
    // Predicated region
    $region34: #{_fpn_fuse_call.1} parent=1 // pred_check
      _
    $region35: #{_fpn_fuse_call.1} parent=1 // pred_check_branch
      %106 = sbr.rel (0) target = $region37
    $region36: #{_fpn_fuse_call.1} parent=1 // pred_region
      _
    $region37: #{_fpn_fuse_call.1} parent=1 // pred_fallthru
      _
    // Predicated region
    $region38: #{_fpn_fuse_call.1} parent=1 // pred_check
      _
    $region39: #{_fpn_fuse_call.1} parent=1 // pred_check_branch
      %108 = sbr.rel (0) target = $region41
    $region40: #{_fpn_fuse_call.1} parent=1 // pred_region
      %110 = vsyncadd [#allocation5], 0
      %s112 = sshll.u32 %s19, 4
      %s113 = int_to_ptr.hbm [resolvable:$true] %s112
      %s114 = sshll.u32 [#allocation4], 4
      %s115 = int_to_ptr.vmem [resolvable:$true] %s114
      %117 = dma.hbm_to_vmem [thread:$0]  %s113, 16, %s115, [#allocation5]
    $region41: #{_fpn_fuse_call.1} parent=1 // pred_fallthru
      _
    // Predicated region
    $region42: #{_fpn_fuse_call.1} parent=1 // pred_check
      _
    $region43: #{_fpn_fuse_call.1} parent=1 // pred_check_branch
      %119 = sbr.rel (0) target = $region45
    $region44: #{_fpn_fuse_call.1} parent=1 // pred_region
      _
    $region45: #{_fpn_fuse_call.1} parent=1 // pred_fallthru
      _
    // Predicated region
    $region46: #{_fpn_fuse_call.1} parent=1 // pred_check
      _
    $region47: #{_fpn_fuse_call.1} parent=1 // pred_check_branch
      %121 = sbr.rel (0) target = $region49
    $region48: #{_fpn_fuse_call.1} parent=1 // pred_region
      _
    $region49: #{_fpn_fuse_call.1} parent=1 // pred_fallthru
      _
    // Predicated region
    $region50: #{_fpn_fuse_call.1} parent=1 // pred_check
      _
    $region51: #{_fpn_fuse_call.1} parent=1 // pred_check_branch
      %123 = sbr.rel (0) target = $region53
    $region52: #{_fpn_fuse_call.1} parent=1 // pred_region
      _
    $region53: #{_fpn_fuse_call.1} parent=1 // pred_fallthru
      _
    // Predicated region
    $region54: #{_fpn_fuse_call.1} parent=1 // pred_check
      _
    $region55: #{_fpn_fuse_call.1} parent=1 // pred_check_branch
      %125 = sbr.rel (0) target = $region57
    $region56: #{_fpn_fuse_call.1} parent=1 // pred_region
      _
    $region57: #{_fpn_fuse_call.1} parent=1 // pred_fallthru
      _
    // Predicated region
    $region58: #{_fpn_fuse_call.1} parent=1 // pred_check
      _
    $region59: #{_fpn_fuse_call.1} parent=1 // pred_check_branch
      %127 = sbr.rel (0) target = $region61
    $region60: #{_fpn_fuse_call.1} parent=1 // pred_region
      _
    $region61: #{_fpn_fuse_call.1} parent=1 // pred_fallthru
      _
    // Predicated region
    $region62: #{_fpn_fuse_call.1} parent=1 // pred_check
      _
    $region63: #{_fpn_fuse_call.1} parent=1 // pred_check_branch
      %129 = sbr.rel (0) target = $region65
    $region64: #{_fpn_fuse_call.1} parent=1 // pred_region
      _
    $region65: #{_fpn_fuse_call.1} parent=1 // pred_fallthru
      _
    // Predicated region
    $region66: #{_fpn_fuse_call.1} parent=1 // pred_check
      _
    $region67: #{_fpn_fuse_call.1} parent=1 // pred_check_branch
      %131 = sbr.rel (0) target = $region69
    $region68: #{_fpn_fuse_call.1} parent=1 // pred_region
      _
    $region69: #{_fpn_fuse_call.1} parent=1 // pred_fallthru
      _
    // Predicated region
    $region70: #{_fpn_fuse_call.1} parent=1 // pred_check
      _
    $region71: #{_fpn_fuse_call.1} parent=1 // pred_check_branch
      %133 = sbr.rel (0) target = $region73
    $region72: #{_fpn_fuse_call.1} parent=1 // pred_region
      _
    $region73: #{_fpn_fuse_call.1} parent=1 // pred_fallthru
      _
    // Predicated region
    $region74: #{_fpn_fuse_call.1} parent=1 // pred_check
      _
    $region75: #{_fpn_fuse_call.1} parent=1 // pred_check_branch
      %135 = sbr.rel (0) target = $region77
    $region76: #{_fpn_fuse_call.1} parent=1 // pred_region
      _
    $region77: #{_fpn_fuse_call.1} parent=1 // pred_fallthru
      _
    // Predicated region
    $region78: #{_fpn_fuse_call.1} parent=1 // pred_check
      _
    $region79: #{_fpn_fuse_call.1} parent=1 // pred_check_branch
      %137 = sbr.rel (0) target = $region81
    $region80: #{_fpn_fuse_call.1} parent=1 // pred_region
      %139 = vsyncadd [#allocation5], 0
      %s140 = sshll.u32 %s39, 4
      %s141 = int_to_ptr.hbm [resolvable:$true] %s140
      %s142 = sshll.u32 [#allocation6], 4
      %s143 = int_to_ptr.vmem [resolvable:$true] %s142
      %148 = dma.hbm_to_vmem [thread:$0]  %s141, 12288, %s143, [#allocation5], 128, 128, 8
    $region81: #{_fpn_fuse_call.1} parent=1 // pred_fallthru
      _
    // Predicated region
    $region82: #{_fpn_fuse_call.1} parent=1 // pred_check
      _
    $region83: #{_fpn_fuse_call.1} parent=1 // pred_check_branch
      %150 = sbr.rel (0) target = $region85
    $region84: #{_fpn_fuse_call.1} parent=1 // pred_region
      %152 = vsyncadd [#allocation8], 0
      %s154 = sshll.u32 %s41, 4
      %s155 = int_to_ptr.hbm [resolvable:$true] %s154
      %s156 = sshll.u32 [#allocation7], 4
      %s157 = int_to_ptr.vmem [resolvable:$true] %s156
      %159 = dma.hbm_to_vmem [thread:$0]  %s155, 32, %s157, [#allocation8]
    $region85: #{_fpn_fuse_call.1} parent=1 // pred_fallthru
      _
    // Predicated region
    $region86: #{_fpn_fuse_call.1} parent=1 // pred_check
      _
    $region87: #{_fpn_fuse_call.1} parent=1 // pred_check_branch
      %161 = sbr.rel (0) target = $region89
    $region88: #{_fpn_fuse_call.1} parent=1 // pred_region
      _
    $region89: #{_fpn_fuse_call.1} parent=1 // pred_fallthru
      _
    // Predicated region
    $region90: #{_fpn_fuse_call.1} parent=1 // pred_check
      _
    $region91: #{_fpn_fuse_call.1} parent=1 // pred_check_branch
      %163 = sbr.rel (0) target = $region93
    $region92: #{_fpn_fuse_call.1} parent=1 // pred_region
      %165 = vsyncadd [#allocation8], 0
      %s167 = sshll.u32 %s45, 4
      %s168 = int_to_ptr.hbm [resolvable:$true] %s167
      %s169 = sshll.u32 [#allocation9], 4
      %s170 = int_to_ptr.vmem [resolvable:$true] %s169
      %172 = dma.hbm_to_vmem [thread:$0]  %s168, 16, %s170, [#allocation8]
    $region93: #{_fpn_fuse_call.1} parent=1 // pred_fallthru
      _
    // Predicated region
    $region94: #{_fpn_fuse_call.1} parent=1 // pred_check
      _
    $region95: #{_fpn_fuse_call.1} parent=1 // pred_check_branch
      %174 = sbr.rel (0) target = $region97
    $region96: #{_fpn_fuse_call.1} parent=1 // pred_region
      _
    $region97: #{_fpn_fuse_call.1} parent=1 // pred_fallthru
      _
    // Predicated region
    $region98: #{_fpn_fuse_call.1} parent=1 // pred_check
      _
    $region99: #{_fpn_fuse_call.1} parent=1 // pred_check_branch
      %176 = sbr.rel (0) target = $region101
    $region100: #{_fpn_fuse_call.1} parent=1 // pred_region
      %178 = vsyncadd [#allocation11], 0
      %s180 = sshll.u32 %s49, 4
      %s181 = int_to_ptr.hbm [resolvable:$true] %s180
      %s182 = sshll.u32 [#allocation10], 4
      %s183 = int_to_ptr.vmem [resolvable:$true] %s182
      %185 = dma.hbm_to_vmem [thread:$0]  %s181, 16, %s183, [#allocation11]
    $region101: #{_fpn_fuse_call.1} parent=1 // pred_fallthru
      _
    // Predicated region
    $region102: #{_fpn_fuse_call.1} parent=1 // pred_check
      _
    $region103: #{_fpn_fuse_call.1} parent=1 // pred_check_branch
      %187 = sbr.rel (0) target = $region105
    $region104: #{_fpn_fuse_call.1} parent=1 // pred_region
      %189 = vsyncadd [#allocation11], 0
      %s190 = sshll.u32 %s51, 4
      %s191 = int_to_ptr.hbm [resolvable:$true] %s190
      %s192 = sshll.u32 [#allocation12], 4
      %s193 = int_to_ptr.vmem [resolvable:$true] %s192
      %198 = dma.hbm_to_vmem [thread:$0]  %s191, 12288, %s193, [#allocation11], 128, 128, 8
    $region105: #{_fpn_fuse_call.1} parent=1 // pred_fallthru
      _
    // Predicated region
    $region106: #{_fpn_fuse_call.1} parent=1 // pred_check
      _
    $region107: #{_fpn_fuse_call.1} parent=1 // pred_check_branch
      %200 = sbr.rel (0) target = $region109
    $region108: #{_fpn_fuse_call.1} parent=1 // pred_region
      _
    $region109: #{_fpn_fuse_call.1} parent=1 // pred_fallthru
      _
    // Predicated region
    $region110: #{_fpn_fuse_call.1} parent=1 // pred_check
      _
    $region111: #{_fpn_fuse_call.1} parent=1 // pred_check_branch
      %202 = sbr.rel (0) target = $region113
    $region112: #{_fpn_fuse_call.1} parent=1 // pred_region
      _
    $region113: #{_fpn_fuse_call.1} parent=1 // pred_fallthru
      _
    // Predicated region
    $region114: #{_fpn_fuse_call.1} parent=1 // pred_check
      _
    $region115: #{_fpn_fuse_call.1} parent=1 // pred_check_branch
      %204 = sbr.rel (0) target = $region117
    $region116: #{_fpn_fuse_call.1} parent=1 // pred_region
      _
    $region117: #{_fpn_fuse_call.1} parent=1 // pred_fallthru
      _
    // Predicated region
    $region118: #{_fpn_fuse_call.1} parent=1 // pred_check
      _
    $region119: #{_fpn_fuse_call.1} parent=1 // pred_check_branch
      %206 = sbr.rel (0) target = $region121
    $region120: #{_fpn_fuse_call.1} parent=1 // pred_region
      _
    $region121: #{_fpn_fuse_call.1} parent=1 // pred_fallthru
      _
    // Predicated region
    $region122: #{_fpn_fuse_call.1} parent=1 // pred_check
      _
    $region123: #{_fpn_fuse_call.1} parent=1 // pred_check_branch
      %208 = sbr.rel (0) target = $region125
    $region124: #{_fpn_fuse_call.1} parent=1 // pred_region
      _
    $region125: #{_fpn_fuse_call.1} parent=1 // pred_fallthru
      _
    // Predicated region
    $region126: #{_fpn_fuse_call.1} parent=1 // pred_check
      _
    $region127: #{_fpn_fuse_call.1} parent=1 // pred_check_branch
      %210 = sbr.rel (0) target = $region129
    $region128: #{_fpn_fuse_call.1} parent=1 // pred_region
      %212 = vsyncadd [#allocation14], 0
      %s213 = sshll.u32 %s63, 4
      %s214 = int_to_ptr.hbm [resolvable:$true] %s213
      %s215 = sshll.u32 [#allocation13], 4
      %s216 = int_to_ptr.vmem [resolvable:$true] %s215
      %221 = dma.hbm_to_vmem [thread:$0]  %s214, 1536, %s216, [#allocation14], 128, 128, 8
    $region129: #{_fpn_fuse_call.1} parent=1 // pred_fallthru
      _
    // Predicated region
    $region130: #{_fpn_fuse_call.1} parent=1 // pred_check
      _
    $region131: #{_fpn_fuse_call.1} parent=1 // pred_check_branch
      %223 = sbr.rel (0) target = $region133
    $region132: #{_fpn_fuse_call.1} parent=1 // pred_region
      %225 = vsyncadd [#allocation14], 0
      %s227 = sshll.u32 %s65, 4
      %s228 = int_to_ptr.hbm [resolvable:$true] %s227
      %s229 = sshll.u32 [#allocation15], 4
      %s230 = int_to_ptr.vmem [resolvable:$true] %s229
      %232 = dma.hbm_to_vmem [thread:$0]  %s228, 32, %s230, [#allocation14]
    $region133: #{_fpn_fuse_call.1} parent=1 // pred_fallthru
      _
    // Predicated region
    $region134: #{_fpn_fuse_call.1} parent=1 // pred_check
      _
    $region135: #{_fpn_fuse_call.1} parent=1 // pred_check_branch
      %234 = sbr.rel (0) target = $region137
    $region136: #{_fpn_fuse_call.1} parent=1 // pred_region
      %236 = vsyncadd [#allocation17], 0
      %s238 = sshll.u32 %s67, 4
      %s239 = int_to_ptr.hbm [resolvable:$true] %s238
      %s240 = sshll.u32 [#allocation16], 4
      %s241 = int_to_ptr.vmem [resolvable:$true] %s240
      %243 = dma.hbm_to_vmem [thread:$0]  %s239, 32, %s241, [#allocation17]
    $region137: #{_fpn_fuse_call.1} parent=1 // pred_fallthru
      _
    // Predicated region
    $region138: #{_fpn_fuse_call.1} parent=1 // pred_check
      _
    $region139: #{_fpn_fuse_call.1} parent=1 // pred_check_branch
      %245 = sbr.rel (0) target = $region141
    $region140: #{_fpn_fuse_call.1} parent=1 // pred_region
      %247 = dma.done [#allocation3], 16
    $region141: #{_fpn_fuse_call.1} parent=1 // pred_fallthru
      _
    // Predicated region
    $region142: #{_fpn_fuse_call.1} parent=1 // pred_check
      _
    $region143: #{_fpn_fuse_call.1} parent=1 // pred_check_branch
      %249 = sbr.rel (0) target = $region145
    $region144: #{_fpn_fuse_call.1} parent=1 // pred_region
      %251 = dma.done [#allocation5], 16
    $region145: #{_fpn_fuse_call.1} parent=1 // pred_fallthru
      _
    // Predicated region
    $region146: #{_fpn_fuse_call.1} parent=1 // pred_check
      _
    $region147: #{_fpn_fuse_call.1} parent=1 // pred_check_branch
      %253 = sbr.rel (0) target = $region149
    $region148: #{_fpn_fuse_call.1} parent=1 // pred_region
      %255 = dma.done [#allocation5], 12288
    $region149: #{_fpn_fuse_call.1} parent=1 // pred_fallthru
      _
    // Predicated region
    $region150: #{_fpn_fuse_call.1} parent=1 // pred_check
      _
    $region151: #{_fpn_fuse_call.1} parent=1 // pred_check_branch
      %257 = sbr.rel (0) target = $region153
    $region152: #{_fpn_fuse_call.1} parent=1 // pred_region
      %259 = dma.done [#allocation8], 32
    $region153: #{_fpn_fuse_call.1} parent=1 // pred_fallthru
      _
    // Predicated region
    $region154: #{_fpn_fuse_call.1} parent=1 // pred_check
      _
    $region155: #{_fpn_fuse_call.1} parent=1 // pred_check_branch
      %261 = sbr.rel (0) target = $region157
    $region156: #{_fpn_fuse_call.1} parent=1 // pred_region
      %263 = dma.done [#allocation8], 16
    $region157: #{_fpn_fuse_call.1} parent=1 // pred_fallthru
      _
    // Predicated region
    $region158: #{_fpn_fuse_call.1} parent=1 // pred_check
      _
    $region159: #{_fpn_fuse_call.1} parent=1 // pred_check_branch
      %265 = sbr.rel (0) target = $region161
    $region160: #{_fpn_fuse_call.1} parent=1 // pred_region
      %267 = dma.done [#allocation11], 16
    $region161: #{_fpn_fuse_call.1} parent=1 // pred_fallthru
      _
    // Predicated region
    $region162: #{_fpn_fuse_call.1} parent=1 // pred_check
      _
    $region163: #{_fpn_fuse_call.1} parent=1 // pred_check_branch
      %269 = sbr.rel (0) target = $region165
    $region164: #{_fpn_fuse_call.1} parent=1 // pred_region
      %271 = dma.done [#allocation11], 12288
    $region165: #{_fpn_fuse_call.1} parent=1 // pred_fallthru
      _
    // Predicated region
    $region166: #{_fpn_fuse_call.1} parent=1 // pred_check
      _
    $region167: #{_fpn_fuse_call.1} parent=1 // pred_check_branch
      %273 = sbr.rel (0) target = $region169
    $region168: #{_fpn_fuse_call.1} parent=1 // pred_region
      %275 = dma.done [#allocation14], 1536
    $region169: #{_fpn_fuse_call.1} parent=1 // pred_fallthru
      _
    // Predicated region
    $region170: #{_fpn_fuse_call.1} parent=1 // pred_check
      _
    $region171: #{_fpn_fuse_call.1} parent=1 // pred_check_branch
      %277 = sbr.rel (0) target = $region173
    $region172: #{_fpn_fuse_call.1} parent=1 // pred_region
      %279 = dma.done [#allocation14], 32
    $region173: #{_fpn_fuse_call.1} parent=1 // pred_fallthru
      _
    // Predicated region
    $region174: #{_fpn_fuse_call.1} parent=1 // pred_check
      _
    $region175: #{_fpn_fuse_call.1} parent=1 // pred_check_branch
      %281 = sbr.rel (0) target = $region177
    $region176: #{_fpn_fuse_call.1} parent=1 // pred_region
      %283 = dma.done [#allocation17], 32
    $region177: #{_fpn_fuse_call.1} parent=1 // pred_fallthru
      _
    %v285 = vld [vmem:[%s1] sm:$0xff]
    %v286 = vld [vmem:[%s1 + $0x8] sm:$0xff]
    %v287 = vld [vmem:[%s1 + $0x10] sm:$0xff]
    %v288 = vld [vmem:[%s1 + $0x18] sm:$0xff]
    %v289 = vld [vmem:[%s1 + $0x20] sm:$0xff]
    %v290 = vld [vmem:[%s1 + $0x28] sm:$0xff]
    %v291 = vld [vmem:[%s1 + $0x30] sm:$0xff]
    %v292 = vld [vmem:[%s1 + $0x38] sm:$0xff]
    %v293 = vld [vmem:[%s3] sm:$0xff]
    %v294 = vld [vmem:[%s3 + $0x8] sm:$0xff]
    %v295 = vld [vmem:[%s5] sm:$0xff]
    %v296 = vld [vmem:[%s7] sm:$0xf]
    %v297 = vld [vmem:[%s9] sm:$0xf]
    %v298 = vld [vmem:[%s9 + $0x4] sm:$0xf]
    %v299 = vld [vmem:[%s9 + $0x8] sm:$0xf]
    %v300 = vld [vmem:[%s9 + $0xc] sm:$0xf]
    %v301 = vld [vmem:[%s9 + $0x10] sm:$0xf]
    %v302 = vld [vmem:[%s9 + $0x14] sm:$0xf]
    %v303 = vld [vmem:[%s9 + $0x18] sm:$0xf]
    %v304 = vld [vmem:[%s9 + $0x1c] sm:$0xf]
    %v305 = vld [vmem:[%s9 + $0x20] sm:$0xf]
    %v306 = vld [vmem:[%s9 + $0x24] sm:$0xf]
    %v307 = vld [vmem:[%s9 + $0x28] sm:$0xf]
    %v308 = vld [vmem:[%s9 + $0x2c] sm:$0xf]
    %v309 = vld [vmem:[%s9 + $0x30] sm:$0xf]
    %v310 = vld [vmem:[%s9 + $0x34] sm:$0xf]
    %v311 = vld [vmem:[%s9 + $0x38] sm:$0xf]
    %v312 = vld [vmem:[%s9 + $0x3c] sm:$0xf]
    %v313 = vld [vmem:[%s9 + $0x40] sm:$0xf]
    %v314 = vld [vmem:[%s9 + $0x44] sm:$0xf]
    %v315 = vld [vmem:[%s9 + $0x48] sm:$0xf]
    %v316 = vld [vmem:[%s9 + $0x4c] sm:$0xf]
    %v317 = vld [vmem:[%s9 + $0x50] sm:$0xf]
    %v318 = vld [vmem:[%s9 + $0x54] sm:$0xf]
    %v319 = vld [vmem:[%s9 + $0x58] sm:$0xf]
    %v320 = vld [vmem:[%s9 + $0x5c] sm:$0xf]
    %v321 = vld [vmem:[%s9 + $0x60] sm:$0xf]
    %v322 = vld [vmem:[%s9 + $0x64] sm:$0xf]
    %v323 = vld [vmem:[%s9 + $0x68] sm:$0xf]
    %v324 = vld [vmem:[%s9 + $0x6c] sm:$0xf]
    %v325 = vld [vmem:[%s9 + $0x70] sm:$0xf]
    %v326 = vld [vmem:[%s9 + $0x74] sm:$0xf]
    %v327 = vld [vmem:[%s9 + $0x78] sm:$0xf]
    %v328 = vld [vmem:[%s9 + $0x7c] sm:$0xf]
    %v329 = vld [vmem:[%s11] sm:$0x1]
    %v331 = vperm.slane %v329, 0
    %v335 = vunpack.c.l.b16 %v293
    %v336 = vunpack.c.h.b16 %v293
    %v337 = vunpack.c.l.b16 %v294
    %v338 = vunpack.c.h.b16 %v294
    %v339 = vpack.c.b16 %v337, %v335
    %v340 = vpack.c.b16 %v338, %v336
    %v375 = vunpack.c.l.b16 %v297
    %v376 = vunpack.c.l.b16 %v298
    %v377 = vunpack.c.l.b16 %v299
    %v378 = vunpack.c.l.b16 %v300
    %v379 = vunpack.c.l.b16 %v301
    %v380 = vunpack.c.l.b16 %v302
    %v381 = vunpack.c.l.b16 %v303
    %v382 = vunpack.c.l.b16 %v304
    %v383 = vunpack.c.l.b16 %v305
    %v384 = vunpack.c.l.b16 %v306
    %v385 = vunpack.c.l.b16 %v307
    %v386 = vunpack.c.l.b16 %v308
    %v387 = vunpack.c.l.b16 %v309
    %v388 = vunpack.c.l.b16 %v310
    %v389 = vunpack.c.l.b16 %v311
    %v390 = vunpack.c.l.b16 %v312
    %v391 = vunpack.c.l.b16 %v313
    %v392 = vunpack.c.l.b16 %v314
    %v393 = vunpack.c.l.b16 %v315
    %v394 = vunpack.c.l.b16 %v316
    %v395 = vunpack.c.l.b16 %v317
    %v396 = vunpack.c.l.b16 %v318
    %v397 = vunpack.c.l.b16 %v319
    %v398 = vunpack.c.l.b16 %v320
    %v399 = vunpack.c.l.b16 %v321
    %v400 = vunpack.c.l.b16 %v322
    %v401 = vunpack.c.l.b16 %v323
    %v402 = vunpack.c.l.b16 %v324
    %v403 = vunpack.c.l.b16 %v325
    %v404 = vunpack.c.l.b16 %v326
    %v405 = vunpack.c.l.b16 %v327
    %v406 = vunpack.c.l.b16 %v328
    %v407 = vpack.c.b16 %v376, %v375
    %v408 = vpack.c.b16 %v378, %v377
    %v409 = vpack.c.b16 %v380, %v379
    %v410 = vpack.c.b16 %v382, %v381
    %v411 = vpack.c.b16 %v384, %v383
    %v412 = vpack.c.b16 %v386, %v385
    %v413 = vpack.c.b16 %v388, %v387
    %v414 = vpack.c.b16 %v390, %v389
    %v415 = vpack.c.b16 %v392, %v391
    %v416 = vpack.c.b16 %v394, %v393
    %v417 = vpack.c.b16 %v396, %v395
    %v418 = vpack.c.b16 %v398, %v397
    %v419 = vpack.c.b16 %v400, %v399
    %v420 = vpack.c.b16 %v402, %v401
    %v421 = vpack.c.b16 %v404, %v403
    %v422 = vpack.c.b16 %v406, %v405
    %439 = vmatpush.bf16.msra.mxu0 %v414
    %440 = vmatpush.bf16.msra.mxu0 %v413
    %441 = vmatpush.bf16.msra.mxu0 %v412
    %442 = vmatpush.bf16.msra.mxu0 %v411
    %443 = vmatpush.bf16.msra.mxu0 %v410
    %444 = vmatpush.bf16.msra.mxu0 %v409
    %445 = vmatpush.bf16.msra.mxu0 %v408
    %446 = vmatpush.bf16.msra.mxu0 %v407
    %447 = vmatmul.bf16.gmra.mxu0 %v339
    %v448 = vpop.f32.mrf.mxu0
    %v449 = vadd.f32 %v331, %v448
    %v450 = vpop.f32.mrf.mxu0
    %v451 = vadd.f32 %v331, %v450
    %452 = vdwg.mxu0
    %453 = vmatpush.bf16.msra.mxu0 %v422
    %454 = vmatpush.bf16.msra.mxu0 %v421
    %455 = vmatpush.bf16.msra.mxu0 %v420
    %456 = vmatpush.bf16.msra.mxu0 %v419
    %457 = vmatpush.bf16.msra.mxu0 %v418
    %458 = vmatpush.bf16.msra.mxu0 %v417
    %459 = vmatpush.bf16.msra.mxu0 %v416
    %460 = vmatpush.bf16.msra.mxu0 %v415
    %461 = vmatmul.bf16.gmra.mxu0 %v340
    %v462 = vpop.f32.mrf.mxu0
    %v463 = vadd.f32 %v449, %v462
    %v464 = vpop.f32.mrf.mxu0
    %v465 = vadd.f32 %v451, %v464
    %466 = vdwg.mxu0
    %v467 = vld [vmem:[%s13] sm:$0xf]
    %v468 = vld [vmem:[%s13 + $0x4] sm:$0xf]
    %v469 = vld [vmem:[%s13 + $0x8] sm:$0xf]
    %v470 = vld [vmem:[%s13 + $0xc] sm:$0xf]
    %v471 = vld [vmem:[%s13 + $0x10] sm:$0xf]
    %v472 = vld [vmem:[%s13 + $0x14] sm:$0xf]
    %v473 = vld [vmem:[%s13 + $0x18] sm:$0xf]
    %v474 = vld [vmem:[%s13 + $0x1c] sm:$0xf]
    %v475 = vld [vmem:[%s13 + $0x20] sm:$0xf]
    %v476 = vld [vmem:[%s13 + $0x24] sm:$0xf]
    %v477 = vld [vmem:[%s13 + $0x28] sm:$0xf]
    %v478 = vld [vmem:[%s13 + $0x2c] sm:$0xf]
    %v479 = vld [vmem:[%s13 + $0x30] sm:$0xf]
    %v480 = vld [vmem:[%s13 + $0x34] sm:$0xf]
    %v481 = vld [vmem:[%s13 + $0x38] sm:$0xf]
    %v482 = vld [vmem:[%s13 + $0x3c] sm:$0xf]
    %v483 = vld [vmem:[%s13 + $0x40] sm:$0xf]
    %v484 = vld [vmem:[%s13 + $0x44] sm:$0xf]
    %v485 = vld [vmem:[%s13 + $0x48] sm:$0xf]
    %v486 = vld [vmem:[%s13 + $0x4c] sm:$0xf]
    %v487 = vld [vmem:[%s13 + $0x50] sm:$0xf]
    %v488 = vld [vmem:[%s13 + $0x54] sm:$0xf]
    %v489 = vld [vmem:[%s13 + $0x58] sm:$0xf]
    %v490 = vld [vmem:[%s13 + $0x5c] sm:$0xf]
    %v491 = vld [vmem:[%s13 + $0x60] sm:$0xf]
    %v492 = vld [vmem:[%s13 + $0x64] sm:$0xf]
    %v493 = vld [vmem:[%s13 + $0x68] sm:$0xf]
    %v494 = vld [vmem:[%s13 + $0x6c] sm:$0xf]
    %v495 = vld [vmem:[%s13 + $0x70] sm:$0xf]
    %v496 = vld [vmem:[%s13 + $0x74] sm:$0xf]
    %v497 = vld [vmem:[%s13 + $0x78] sm:$0xf]
    %v498 = vld [vmem:[%s13 + $0x7c] sm:$0xf]
    %v499 = vld [vmem:[#allocation2] sm:$0x1]
    %v501 = vperm.slane %v499, 0
    %v504 = vunpack.c.l.b16 %v295
    %v505 = vunpack.c.h.b16 %v295
    %v506 = vpack.c.b16 %v504, %v504
    %v507 = vpack.c.b16 %v505, %v505
    %v542 = vunpack.c.l.b16 %v467
    %v543 = vunpack.c.l.b16 %v468
    %v544 = vunpack.c.l.b16 %v469
    %v545 = vunpack.c.l.b16 %v470
    %v546 = vunpack.c.l.b16 %v471
    %v547 = vunpack.c.l.b16 %v472
    %v548 = vunpack.c.l.b16 %v473
    %v549 = vunpack.c.l.b16 %v474
    %v550 = vunpack.c.l.b16 %v475
    %v551 = vunpack.c.l.b16 %v476
    %v552 = vunpack.c.l.b16 %v477
    %v553 = vunpack.c.l.b16 %v478
    %v554 = vunpack.c.l.b16 %v479
    %v555 = vunpack.c.l.b16 %v480
    %v556 = vunpack.c.l.b16 %v481
    %v557 = vunpack.c.l.b16 %v482
    %v558 = vunpack.c.l.b16 %v483
    %v559 = vunpack.c.l.b16 %v484
    %v560 = vunpack.c.l.b16 %v485
    %v561 = vunpack.c.l.b16 %v486
    %v562 = vunpack.c.l.b16 %v487
    %v563 = vunpack.c.l.b16 %v488
    %v564 = vunpack.c.l.b16 %v489
    %v565 = vunpack.c.l.b16 %v490
    %v566 = vunpack.c.l.b16 %v491
    %v567 = vunpack.c.l.b16 %v492
    %v568 = vunpack.c.l.b16 %v493
    %v569 = vunpack.c.l.b16 %v494
    %v570 = vunpack.c.l.b16 %v495
    %v571 = vunpack.c.l.b16 %v496
    %v572 = vunpack.c.l.b16 %v497
    %v573 = vunpack.c.l.b16 %v498
    %v574 = vpack.c.b16 %v543, %v542
    %v575 = vpack.c.b16 %v545, %v544
    %v576 = vpack.c.b16 %v547, %v546
    %v577 = vpack.c.b16 %v549, %v548
    %v578 = vpack.c.b16 %v551, %v550
    %v579 = vpack.c.b16 %v553, %v552
    %v580 = vpack.c.b16 %v555, %v554
    %v581 = vpack.c.b16 %v557, %v556
    %v582 = vpack.c.b16 %v559, %v558
    %v583 = vpack.c.b16 %v561, %v560
    %v584 = vpack.c.b16 %v563, %v562
    %v585 = vpack.c.b16 %v565, %v564
    %v586 = vpack.c.b16 %v567, %v566
    %v587 = vpack.c.b16 %v569, %v568
    %v588 = vpack.c.b16 %v571, %v570
    %v589 = vpack.c.b16 %v573, %v572
    %606 = vmatpush.bf16.msra.mxu0 %v581
    %607 = vmatpush.bf16.msra.mxu0 %v580
    %608 = vmatpush.bf16.msra.mxu0 %v579
    %609 = vmatpush.bf16.msra.mxu0 %v578
    %610 = vmatpush.bf16.msra.mxu0 %v577
    %611 = vmatpush.bf16.msra.mxu0 %v576
    %612 = vmatpush.bf16.msra.mxu0 %v575
    %613 = vmatpush.bf16.msra.mxu0 %v574
    %614 = vmatmul.bf16.gmra.mxu0 %v506
    %v615 = vpop.f32.mrf.mxu0
    %v616 = vadd.f32 %v501, %v615
    %v617 = vpop.f32.mrf.mxu0
    %618 = vdwg.mxu0
    %619 = vmatpush.bf16.msra.mxu0 %v589
    %620 = vmatpush.bf16.msra.mxu0 %v588
    %621 = vmatpush.bf16.msra.mxu0 %v587
    %622 = vmatpush.bf16.msra.mxu0 %v586
    %623 = vmatpush.bf16.msra.mxu0 %v585
    %624 = vmatpush.bf16.msra.mxu0 %v584
    %625 = vmatpush.bf16.msra.mxu0 %v583
    %626 = vmatpush.bf16.msra.mxu0 %v582
    %627 = vmatmul.bf16.gmra.mxu0 %v507
    %v628 = vpop.f32.mrf.mxu0
    %v629 = vadd.f32 %v616, %v628
    %v630 = vpop.f32.mrf.mxu0
    %631 = vdwg.mxu0
    %v632 = vld [vmem:[%s17] sm:$0xf]
    %v633 = vld [vmem:[%s17 + $0x4] sm:$0xf]
    %v634 = vld [vmem:[%s17 + $0x8] sm:$0xf]
    %v635 = vld [vmem:[%s17 + $0xc] sm:$0xf]
    %v636 = vld [vmem:[%s17 + $0x10] sm:$0xf]
    %v637 = vld [vmem:[%s17 + $0x14] sm:$0xf]
    %v638 = vld [vmem:[%s17 + $0x18] sm:$0xf]
    %v639 = vld [vmem:[%s17 + $0x1c] sm:$0xf]
    %v640 = vld [vmem:[%s17 + $0x20] sm:$0xf]
    %v641 = vld [vmem:[%s17 + $0x24] sm:$0xf]
    %v642 = vld [vmem:[%s17 + $0x28] sm:$0xf]
    %v643 = vld [vmem:[%s17 + $0x2c] sm:$0xf]
    %v644 = vld [vmem:[%s17 + $0x30] sm:$0xf]
    %v645 = vld [vmem:[%s17 + $0x34] sm:$0xf]
    %v646 = vld [vmem:[%s17 + $0x38] sm:$0xf]
    %v647 = vld [vmem:[%s17 + $0x3c] sm:$0xf]
    %v648 = vld [vmem:[%s17 + $0x40] sm:$0xf]
    %v649 = vld [vmem:[%s17 + $0x44] sm:$0xf]
    %v650 = vld [vmem:[%s17 + $0x48] sm:$0xf]
    %v651 = vld [vmem:[%s17 + $0x4c] sm:$0xf]
    %v652 = vld [vmem:[%s17 + $0x50] sm:$0xf]
    %v653 = vld [vmem:[%s17 + $0x54] sm:$0xf]
    %v654 = vld [vmem:[%s17 + $0x58] sm:$0xf]
    %v655 = vld [vmem:[%s17 + $0x5c] sm:$0xf]
    %v656 = vld [vmem:[%s17 + $0x60] sm:$0xf]
    %v657 = vld [vmem:[%s17 + $0x64] sm:$0xf]
    %v658 = vld [vmem:[%s17 + $0x68] sm:$0xf]
    %v659 = vld [vmem:[%s17 + $0x6c] sm:$0xf]
    %v660 = vld [vmem:[%s17 + $0x70] sm:$0xf]
    %v661 = vld [vmem:[%s17 + $0x74] sm:$0xf]
    %v662 = vld [vmem:[%s17 + $0x78] sm:$0xf]
    %v663 = vld [vmem:[%s17 + $0x7c] sm:$0xf]
    %v664 = vld [vmem:[#allocation4] sm:$0x1]
    %v666 = vperm.slane %v664, 0
    %669 = vst [vmem:[#allocation1] ss:$4 sm:$0xff] %v296
    %v670 = vld.sshfl [vmem:[#allocation1] sm:$0xff pattern:$0x73625140]
    %v671 = vld.sshfl [vmem:[#allocation1 + $0x8] sm:$0xff pattern:$0x73625140]
    %v706 = vunpack.c.l.b16 %v632
    %v707 = vunpack.c.l.b16 %v633
    %v708 = vunpack.c.l.b16 %v634
    %v709 = vunpack.c.l.b16 %v635
    %v710 = vunpack.c.l.b16 %v636
    %v711 = vunpack.c.l.b16 %v637
    %v712 = vunpack.c.l.b16 %v638
    %v713 = vunpack.c.l.b16 %v639
    %v714 = vunpack.c.l.b16 %v640
    %v715 = vunpack.c.l.b16 %v641
    %v716 = vunpack.c.l.b16 %v642
    %v717 = vunpack.c.l.b16 %v643
    %v718 = vunpack.c.l.b16 %v644
    %v719 = vunpack.c.l.b16 %v645
    %v720 = vunpack.c.l.b16 %v646
    %v721 = vunpack.c.l.b16 %v647
    %v722 = vunpack.c.l.b16 %v648
    %v723 = vunpack.c.l.b16 %v649
    %v724 = vunpack.c.l.b16 %v650
    %v725 = vunpack.c.l.b16 %v651
    %v726 = vunpack.c.l.b16 %v652
    %v727 = vunpack.c.l.b16 %v653
    %v728 = vunpack.c.l.b16 %v654
    %v729 = vunpack.c.l.b16 %v655
    %v730 = vunpack.c.l.b16 %v656
    %v731 = vunpack.c.l.b16 %v657
    %v732 = vunpack.c.l.b16 %v658
    %v733 = vunpack.c.l.b16 %v659
    %v734 = vunpack.c.l.b16 %v660
    %v735 = vunpack.c.l.b16 %v661
    %v736 = vunpack.c.l.b16 %v662
    %v737 = vunpack.c.l.b16 %v663
    %v738 = vpack.c.b16 %v707, %v706
    %v739 = vpack.c.b16 %v709, %v708
    %v740 = vpack.c.b16 %v711, %v710
    %v741 = vpack.c.b16 %v713, %v712
    %v742 = vpack.c.b16 %v715, %v714
    %v743 = vpack.c.b16 %v717, %v716
    %v744 = vpack.c.b16 %v719, %v718
    %v745 = vpack.c.b16 %v721, %v720
    %v746 = vpack.c.b16 %v723, %v722
    %v747 = vpack.c.b16 %v725, %v724
    %v748 = vpack.c.b16 %v727, %v726
    %v749 = vpack.c.b16 %v729, %v728
    %v750 = vpack.c.b16 %v731, %v730
    %v751 = vpack.c.b16 %v733, %v732
    %v752 = vpack.c.b16 %v735, %v734
    %v753 = vpack.c.b16 %v737, %v736
    %770 = vmatpush.bf16.msra.mxu0 %v745
    %771 = vmatpush.bf16.msra.mxu0 %v744
    %772 = vmatpush.bf16.msra.mxu0 %v743
    %773 = vmatpush.bf16.msra.mxu0 %v742
    %774 = vmatpush.bf16.msra.mxu0 %v741
    %775 = vmatpush.bf16.msra.mxu0 %v740
    %776 = vmatpush.bf16.msra.mxu0 %v739
    %777 = vmatpush.bf16.msra.mxu0 %v738
    %778 = vmatmul.bf16.gmra.mxu0 %v670
    %v779 = vpop.f32.mrf.mxu0
    %v780 = vadd.f32 %v666, %v779
    %v781 = vpop.f32.mrf.mxu0
    %782 = vdwg.mxu0
    %783 = vmatpush.bf16.msra.mxu0 %v753
    %784 = vmatpush.bf16.msra.mxu0 %v752
    %785 = vmatpush.bf16.msra.mxu0 %v751
    %786 = vmatpush.bf16.msra.mxu0 %v750
    %787 = vmatpush.bf16.msra.mxu0 %v749
    %788 = vmatpush.bf16.msra.mxu0 %v748
    %789 = vmatpush.bf16.msra.mxu0 %v747
    %790 = vmatpush.bf16.msra.mxu0 %v746
    %791 = vmatmul.bf16.gmra.mxu0 %v671
    %v792 = vpop.f32.mrf.mxu0
    %v793 = vadd.f32 %v780, %v792
    %v794 = vpop.f32.mrf.mxu0
    %795 = vdwg.mxu0
    %v796 = vpack.c.bf16 %v465, %v463
    %v797 = vpack.c.bf16 %v629, %v629
    %v798 = vpack.c.bf16 %v793, %v793
    %v799 = vld [vmem:[%s21] sm:$0xf]
    %vm800 = vcmask 31744
    %v802 = vsel %vm800, %v799, 0
    %vm804 = vcmask 1041408
    %v806 = vsel %vm804, %v798, 0
    %808 = vmatpush.bf16.msra.mxu0 0
    %809 = vmatpush.bf16.msra.mxu0 0
    %810 = vmatpush.bf16.msra.mxu0 0
    %811 = vmatpush.bf16.msra.mxu0 0
    %812 = vmatpush.bf16.msra.mxu0 0
    %813 = vmatpush.bf16.msra.mxu0 0
    %814 = vmatpush.bf16.msra.mxu0 0
    %815 = vmatpush.bf16.msra.mxu0 %v806
    %816 = vmatmul.bf16.gmra.mxu0 %v802
    %v817 = vpop.f32.mrf.mxu0
    %v818 = vadd.f32 0.0, %v817
    %v819 = vpop.f32.mrf.mxu0
    %820 = vdwg.mxu0
    %v821 = vpack.c.bf16 %v818, %v818
    %v822 = vld [vmem:[%s23] sm:$0xf]
    %v823 = vld [vmem:[%s23 + $0x4] sm:$0xf]
    %v824 = vld [vmem:[%s23 + $0x8] sm:$0xf]
    %v825 = vld [vmem:[%s23 + $0xc] sm:$0xf]
    %v830 = vunpack.c.l.b16 %v822
    %v831 = vunpack.c.l.b16 %v823
    %v832 = vunpack.c.l.b16 %v824
    %v833 = vunpack.c.l.b16 %v825
    %v834 = vpack.c.b16 %v831, %v830
    %v835 = vpack.c.b16 %v833, %v832
    %vm838 = vcmask 261120
    %v840 = vsel %vm838, %v821, 0
    %842 = vmatpush.bf16.msra.mxu0 0
    %843 = vmatpush.bf16.msra.mxu0 0
    %844 = vmatpush.bf16.msra.mxu0 0
    %845 = vmatpush.bf16.msra.mxu0 0
    %846 = vmatpush.bf16.msra.mxu0 0
    %847 = vmatpush.bf16.msra.mxu0 0
    %848 = vmatpush.bf16.msra.mxu0 %v835
    %849 = vmatpush.bf16.msra.mxu0 %v834
    %850 = vmatmul.bf16.gmra.mxu0 %v840
    %v851 = vpop.f32.mrf.mxu0
    %v852 = vadd.f32 %v629, %v851
    %v853 = vpop.f32.mrf.mxu0
    %854 = vdwg.mxu0
    %v855 = vld [vmem:[%s25] sm:$0xf]
    %v856 = vld [vmem:[%s25 + $0x4] sm:$0xf]
    %v859 = vunpack.c.l.b16 %v855
    %v860 = vunpack.c.l.b16 %v856
    %v861 = vpack.c.b16 %v860, %v859
    %vm862 = vcmask 64512
    %v864 = vsel %vm862, %v861, 0
    %vm866 = vcmask 1043456
    %v868 = vsel %vm866, %v797, 0
    %870 = vmatpush.bf16.msra.mxu0 0
    %871 = vmatpush.bf16.msra.mxu0 0
    %872 = vmatpush.bf16.msra.mxu0 0
    %873 = vmatpush.bf16.msra.mxu0 0
    %874 = vmatpush.bf16.msra.mxu0 0
    %875 = vmatpush.bf16.msra.mxu0 0
    %876 = vmatpush.bf16.msra.mxu0 0
    %877 = vmatpush.bf16.msra.mxu0 %v868
    %878 = vmatmul.bf16.gmra.mxu0 %v864
    %v879 = vpop.f32.mrf.mxu0
    %v880 = vadd.f32 0.0, %v879
    %v881 = vpop.f32.mrf.mxu0
    %v882 = vadd.f32 0.0, %v881
    %883 = vdwg.mxu0
    %v884 = vpack.c.bf16 %v882, %v880
    %v885 = vld [vmem:[%s27] sm:$0xf]
    %v886 = vld [vmem:[%s27 + $0x4] sm:$0xf]
    %v887 = vld [vmem:[%s27 + $0x8] sm:$0xf]
    %v888 = vld [vmem:[%s27 + $0xc] sm:$0xf]
    %v889 = vld [vmem:[%s27 + $0x10] sm:$0xf]
    %v890 = vld [vmem:[%s27 + $0x14] sm:$0xf]
    %v891 = vld [vmem:[%s27 + $0x18] sm:$0xf]
    %v892 = vld [vmem:[%s27 + $0x1c] sm:$0xf]
    %v901 = vunpack.c.l.b16 %v885
    %v902 = vunpack.c.l.b16 %v886
    %v903 = vunpack.c.l.b16 %v887
    %v904 = vunpack.c.l.b16 %v888
    %v905 = vunpack.c.l.b16 %v889
    %v906 = vunpack.c.l.b16 %v890
    %v907 = vunpack.c.l.b16 %v891
    %v908 = vunpack.c.l.b16 %v892
    %v909 = vpack.c.b16 %v902, %v901
    %v910 = vpack.c.b16 %v904, %v903
    %v911 = vpack.c.b16 %v906, %v905
    %v912 = vpack.c.b16 %v908, %v907
    %vm917 = vcmask 523264
    %v919 = vsel %vm917, %v884, 0
    %921 = vmatpush.bf16.msra.mxu0 0
    %922 = vmatpush.bf16.msra.mxu0 0
    %923 = vmatpush.bf16.msra.mxu0 0
    %924 = vmatpush.bf16.msra.mxu0 0
    %925 = vmatpush.bf16.msra.mxu0 %v912
    %926 = vmatpush.bf16.msra.mxu0 %v911
    %927 = vmatpush.bf16.msra.mxu0 %v910
    %928 = vmatpush.bf16.msra.mxu0 %v909
    %929 = vmatmul.bf16.gmra.mxu0 %v919
    %v930 = vpop.f32.mrf.mxu0
    %v931 = vadd.f32 %v463, %v930
    %v932 = vpop.f32.mrf.mxu0
    %v933 = vadd.f32 %v465, %v932
    %934 = vdwg.mxu0
    %v935 = vld [vmem:[%s29] sm:$0xf]
    %v936 = vld [vmem:[%s29 + $0x4] sm:$0xf]
    %v937 = vld [vmem:[%s29 + $0x8] sm:$0xf]
    %v938 = vld [vmem:[%s29 + $0xc] sm:$0xf]
    %v943 = vunpack.c.l.b16 %v935
    %v944 = vunpack.c.l.b16 %v936
    %v945 = vunpack.c.l.b16 %v937
    %v946 = vunpack.c.l.b16 %v938
    %v947 = vpack.c.b16 %v944, %v943
    %v948 = vpack.c.b16 %v946, %v945
    %vm949 = vcmask 130048
    %v951 = vsel %vm949, %v947, 0
    %v954 = vsel %vm949, %v948, 0
    %956 = vmatpush.bf16.msra.mxu0 0
    %957 = vmatpush.bf16.msra.mxu0 0
    %958 = vmatpush.bf16.msra.mxu0 0
    %959 = vmatpush.bf16.msra.mxu0 0
    %960 = vmatpush.bf16.msra.mxu0 0
    %961 = vmatpush.bf16.msra.mxu0 0
    %962 = vmatpush.bf16.msra.mxu0 0
    %963 = vmatpush.bf16.msra.mxu0 %v796
    %964 = vmatmul.bf16.gmra.mxu0 %v951
    %v965 = vpop.f32.mrf.mxu0
    %v966 = vadd.f32 0.0, %v965
    %v967 = vpop.f32.mrf.mxu0
    %v968 = vadd.f32 0.0, %v967
    %969 = vmatmul.bf16.gmra.mxu0 %v954
    %v970 = vpop.f32.mrf.mxu0
    %v971 = vadd.f32 0.0, %v970
    %v972 = vpop.f32.mrf.mxu0
    %v973 = vadd.f32 0.0, %v972
    %974 = vdwg.mxu0
    %v975 = vpack.c.bf16 %v968, %v966
    %v976 = vpack.c.bf16 %v973, %v971
    %v977 = vld [vmem:[%s31] sm:$0xff]
    %v978 = vld [vmem:[%s31 + $0x8] sm:$0xff]
    %v979 = vld [vmem:[%s31 + $0x10] sm:$0xff]
    %v980 = vld [vmem:[%s31 + $0x18] sm:$0xff]
    %v981 = vld [vmem:[%s31 + $0x20] sm:$0xff]
    %v982 = vld [vmem:[%s31 + $0x28] sm:$0xff]
    %v983 = vld [vmem:[%s31 + $0x30] sm:$0xff]
    %v984 = vld [vmem:[%s31 + $0x38] sm:$0xff]
    %v985 = vld [vmem:[%s31 + $0x40] sm:$0xff]
    %v986 = vld [vmem:[%s31 + $0x48] sm:$0xff]
    %v987 = vld [vmem:[%s31 + $0x50] sm:$0xff]
    %v988 = vld [vmem:[%s31 + $0x58] sm:$0xff]
    %v989 = vld [vmem:[%s31 + $0x60] sm:$0xff]
    %v990 = vld [vmem:[%s31 + $0x68] sm:$0xff]
    %v991 = vld [vmem:[%s31 + $0x70] sm:$0xff]
    %v992 = vld [vmem:[%s31 + $0x78] sm:$0xff]
    %v1009 = vunpack.c.l.b16 %v977
    %v1010 = vunpack.c.h.b16 %v977
    %v1011 = vunpack.c.l.b16 %v978
    %v1012 = vunpack.c.h.b16 %v978
    %v1013 = vunpack.c.l.b16 %v979
    %v1014 = vunpack.c.h.b16 %v979
    %v1015 = vunpack.c.l.b16 %v980
    %v1016 = vunpack.c.h.b16 %v980
    %v1017 = vunpack.c.l.b16 %v981
    %v1018 = vunpack.c.h.b16 %v981
    %v1019 = vunpack.c.l.b16 %v982
    %v1020 = vunpack.c.h.b16 %v982
    %v1021 = vunpack.c.l.b16 %v983
    %v1022 = vunpack.c.h.b16 %v983
    %v1023 = vunpack.c.l.b16 %v984
    %v1024 = vunpack.c.h.b16 %v984
    %v1025 = vunpack.c.l.b16 %v985
    %v1026 = vunpack.c.h.b16 %v985
    %v1027 = vunpack.c.l.b16 %v986
    %v1028 = vunpack.c.h.b16 %v986
    %v1029 = vunpack.c.l.b16 %v987
    %v1030 = vunpack.c.h.b16 %v987
    %v1031 = vunpack.c.l.b16 %v988
    %v1032 = vunpack.c.h.b16 %v988
    %v1033 = vunpack.c.l.b16 %v989
    %v1034 = vunpack.c.h.b16 %v989
    %v1035 = vunpack.c.l.b16 %v990
    %v1036 = vunpack.c.h.b16 %v990
    %v1037 = vunpack.c.l.b16 %v991
    %v1038 = vunpack.c.h.b16 %v991
    %v1039 = vunpack.c.l.b16 %v992
    %v1040 = vunpack.c.h.b16 %v992
    %v1041 = vpack.c.b16 %v1011, %v1009
    %v1042 = vpack.c.b16 %v1012, %v1010
    %v1043 = vpack.c.b16 %v1015, %v1013
    %v1044 = vpack.c.b16 %v1016, %v1014
    %v1045 = vpack.c.b16 %v1019, %v1017
    %v1046 = vpack.c.b16 %v1020, %v1018
    %v1047 = vpack.c.b16 %v1023, %v1021
    %v1048 = vpack.c.b16 %v1024, %v1022
    %v1049 = vpack.c.b16 %v1027, %v1025
    %v1050 = vpack.c.b16 %v1028, %v1026
    %v1051 = vpack.c.b16 %v1031, %v1029
    %v1052 = vpack.c.b16 %v1032, %v1030
    %v1053 = vpack.c.b16 %v1035, %v1033
    %v1054 = vpack.c.b16 %v1036, %v1034
    %v1055 = vpack.c.b16 %v1039, %v1037
    %v1056 = vpack.c.b16 %v1040, %v1038
    %1073 = vmatpush.bf16.msra.mxu0 %v1055
    %1074 = vmatpush.bf16.msra.mxu0 %v1053
    %1075 = vmatpush.bf16.msra.mxu0 %v1051
    %1076 = vmatpush.bf16.msra.mxu0 %v1049
    %1077 = vmatpush.bf16.msra.mxu0 %v1047
    %1078 = vmatpush.bf16.msra.mxu0 %v1045
    %1079 = vmatpush.bf16.msra.mxu0 %v1043
    %1080 = vmatpush.bf16.msra.mxu0 %v1041
    %1081 = vmatmul.bf16.gmra.mxu0 %v975
    %v1082 = vpop.f32.mrf.mxu0
    %v1083 = vadd.f32 %v285, %v1082
    %v1084 = vpop.f32.mrf.mxu0
    %v1085 = vadd.f32 %v287, %v1084
    %1086 = vmatmul.bf16.gmra.mxu0 %v976
    %v1087 = vpop.f32.mrf.mxu0
    %v1088 = vadd.f32 %v289, %v1087
    %v1089 = vpop.f32.mrf.mxu0
    %v1090 = vadd.f32 %v291, %v1089
    %1091 = vdwg.mxu0
    %1092 = vmatpush.bf16.msra.mxu0 %v1056
    %1093 = vmatpush.bf16.msra.mxu0 %v1054
    %1094 = vmatpush.bf16.msra.mxu0 %v1052
    %1095 = vmatpush.bf16.msra.mxu0 %v1050
    %1096 = vmatpush.bf16.msra.mxu0 %v1048
    %1097 = vmatpush.bf16.msra.mxu0 %v1046
    %1098 = vmatpush.bf16.msra.mxu0 %v1044
    %1099 = vmatpush.bf16.msra.mxu0 %v1042
    %1100 = vmatmul.bf16.gmra.mxu0 %v975
    %v1101 = vpop.f32.mrf.mxu0
    %v1102 = vadd.f32 %v286, %v1101
    %v1103 = vpop.f32.mrf.mxu0
    %v1104 = vadd.f32 %v288, %v1103
    %1105 = vmatmul.bf16.gmra.mxu0 %v976
    %v1106 = vpop.f32.mrf.mxu0
    %v1107 = vadd.f32 %v290, %v1106
    %v1108 = vpop.f32.mrf.mxu0
    %v1109 = vadd.f32 %v292, %v1108
    %1110 = vdwg.mxu0
    %v1111 = vpack.c.bf16 %v1085, %v1083
    %v1112 = vpack.c.bf16 %v1104, %v1102
    %v1113 = vpack.c.bf16 %v1090, %v1088
    %v1114 = vpack.c.bf16 %v1109, %v1107
    %v1115 = vld [vmem:[#allocation7] sm:$0x3]
    %s1116 = scalar_lea.vmem [#allocation6], 256
    %v1117 = vld [vmem:[%s1116] sm:$0xff]
    %v1118 = vld [vmem:[%s1116 + $0x8] sm:$0xff]
    %v1119 = vld [vmem:[%s1116 + $0x10] sm:$0xff]
    %v1120 = vld [vmem:[%s1116 + $0x18] sm:$0xff]
    %v1121 = vld [vmem:[%s1116 + $0x20] sm:$0xff]
    %v1122 = vld [vmem:[%s1116 + $0x28] sm:$0xff]
    %v1123 = vld [vmem:[%s1116 + $0x30] sm:$0xff]
    %v1124 = vld [vmem:[%s1116 + $0x38] sm:$0xff]
    %v1125 = vld [vmem:[%s1116 + $0x40] sm:$0xff]
    %v1126 = vld [vmem:[%s1116 + $0x48] sm:$0xff]
    %v1127 = vld [vmem:[%s1116 + $0x50] sm:$0xff]
    %v1128 = vld [vmem:[%s1116 + $0x58] sm:$0xff]
    %v1129 = vld [vmem:[%s1116 + $0x60] sm:$0xff]
    %v1130 = vld [vmem:[%s1116 + $0x68] sm:$0xff]
    %v1131 = vld [vmem:[%s1116 + $0x70] sm:$0xff]
    %v1132 = vld [vmem:[%s1116 + $0x78] sm:$0xff]
    %v1133 = vld [vmem:[%s1116 + $0x80] sm:$0xff]
    %v1134 = vld [vmem:[%s1116 + $0x88] sm:$0xff]
    %v1135 = vld [vmem:[%s1116 + $0x90] sm:$0xff]
    %v1136 = vld [vmem:[%s1116 + $0x98] sm:$0xff]
    %v1137 = vld [vmem:[%s1116 + $0xa0] sm:$0xff]
    %v1138 = vld [vmem:[%s1116 + $0xa8] sm:$0xff]
    %v1139 = vld [vmem:[%s1116 + $0xb0] sm:$0xff]
    %v1140 = vld [vmem:[%s1116 + $0xb8] sm:$0xff]
    %v1141 = vld [vmem:[%s1116 + $0xc0] sm:$0xff]
    %v1142 = vld [vmem:[%s1116 + $0xc8] sm:$0xff]
    %v1143 = vld [vmem:[%s1116 + $0xd0] sm:$0xff]
    %v1144 = vld [vmem:[%s1116 + $0xd8] sm:$0xff]
    %v1145 = vld [vmem:[%s1116 + $0xe0] sm:$0xff]
    %v1146 = vld [vmem:[%s1116 + $0xe8] sm:$0xff]
    %v1147 = vld [vmem:[%s1116 + $0xf0] sm:$0xff]
    %v1148 = vld [vmem:[%s1116 + $0xf8] sm:$0xff]
    %v1181 = vunpack.c.l.b16 %v1117
    %v1182 = vunpack.c.h.b16 %v1117
    %v1183 = vunpack.c.l.b16 %v1118
    %v1184 = vunpack.c.h.b16 %v1118
    %v1185 = vunpack.c.l.b16 %v1119
    %v1186 = vunpack.c.h.b16 %v1119
    %v1187 = vunpack.c.l.b16 %v1120
    %v1188 = vunpack.c.h.b16 %v1120
    %v1189 = vunpack.c.l.b16 %v1121
    %v1190 = vunpack.c.h.b16 %v1121
    %v1191 = vunpack.c.l.b16 %v1122
    %v1192 = vunpack.c.h.b16 %v1122
    %v1193 = vunpack.c.l.b16 %v1123
    %v1194 = vunpack.c.h.b16 %v1123
    %v1195 = vunpack.c.l.b16 %v1124
    %v1196 = vunpack.c.h.b16 %v1124
    %v1197 = vunpack.c.l.b16 %v1125
    %v1198 = vunpack.c.h.b16 %v1125
    %v1199 = vunpack.c.l.b16 %v1126
    %v1200 = vunpack.c.h.b16 %v1126
    %v1201 = vunpack.c.l.b16 %v1127
    %v1202 = vunpack.c.h.b16 %v1127
    %v1203 = vunpack.c.l.b16 %v1128
    %v1204 = vunpack.c.h.b16 %v1128
    %v1205 = vunpack.c.l.b16 %v1129
    %v1206 = vunpack.c.h.b16 %v1129
    %v1207 = vunpack.c.l.b16 %v1130
    %v1208 = vunpack.c.h.b16 %v1130
    %v1209 = vunpack.c.l.b16 %v1131
    %v1210 = vunpack.c.h.b16 %v1131
    %v1211 = vunpack.c.l.b16 %v1132
    %v1212 = vunpack.c.h.b16 %v1132
    %v1213 = vunpack.c.l.b16 %v1133
    %v1214 = vunpack.c.h.b16 %v1133
    %v1215 = vunpack.c.l.b16 %v1134
    %v1216 = vunpack.c.h.b16 %v1134
    %v1217 = vunpack.c.l.b16 %v1135
    %v1218 = vunpack.c.h.b16 %v1135
    %v1219 = vunpack.c.l.b16 %v1136
    %v1220 = vunpack.c.h.b16 %v1136
    %v1221 = vunpack.c.l.b16 %v1137
    %v1222 = vunpack.c.h.b16 %v1137
    %v1223 = vunpack.c.l.b16 %v1138
    %v1224 = vunpack.c.h.b16 %v1138
    %v1225 = vunpack.c.l.b16 %v1139
    %v1226 = vunpack.c.h.b16 %v1139
    %v1227 = vunpack.c.l.b16 %v1140
    %v1228 = vunpack.c.h.b16 %v1140
    %v1229 = vunpack.c.l.b16 %v1141
    %v1230 = vunpack.c.h.b16 %v1141
    %v1231 = vunpack.c.l.b16 %v1142
    %v1232 = vunpack.c.h.b16 %v1142
    %v1233 = vunpack.c.l.b16 %v1143
    %v1234 = vunpack.c.h.b16 %v1143
    %v1235 = vunpack.c.l.b16 %v1144
    %v1236 = vunpack.c.h.b16 %v1144
    %v1237 = vunpack.c.l.b16 %v1145
    %v1238 = vunpack.c.h.b16 %v1145
    %v1239 = vunpack.c.l.b16 %v1146
    %v1240 = vunpack.c.h.b16 %v1146
    %v1241 = vunpack.c.l.b16 %v1147
    %v1242 = vunpack.c.h.b16 %v1147
    %v1243 = vunpack.c.l.b16 %v1148
    %v1244 = vunpack.c.h.b16 %v1148
    %v1245 = vpack.c.b16 %v1183, %v1181
    %v1246 = vpack.c.b16 %v1184, %v1182
    %v1247 = vpack.c.b16 %v1187, %v1185
    %v1248 = vpack.c.b16 %v1188, %v1186
    %v1249 = vpack.c.b16 %v1191, %v1189
    %v1250 = vpack.c.b16 %v1192, %v1190
    %v1251 = vpack.c.b16 %v1195, %v1193
    %v1252 = vpack.c.b16 %v1196, %v1194
    %v1253 = vpack.c.b16 %v1199, %v1197
    %v1254 = vpack.c.b16 %v1200, %v1198
    %v1255 = vpack.c.b16 %v1203, %v1201
    %v1256 = vpack.c.b16 %v1204, %v1202
    %v1257 = vpack.c.b16 %v1207, %v1205
    %v1258 = vpack.c.b16 %v1208, %v1206
    %v1259 = vpack.c.b16 %v1211, %v1209
    %v1260 = vpack.c.b16 %v1212, %v1210
    %v1261 = vpack.c.b16 %v1215, %v1213
    %v1262 = vpack.c.b16 %v1216, %v1214
    %v1263 = vpack.c.b16 %v1219, %v1217
    %v1264 = vpack.c.b16 %v1220, %v1218
    %v1265 = vpack.c.b16 %v1223, %v1221
    %v1266 = vpack.c.b16 %v1224, %v1222
    %v1267 = vpack.c.b16 %v1227, %v1225
    %v1268 = vpack.c.b16 %v1228, %v1226
    %v1269 = vpack.c.b16 %v1231, %v1229
    %v1270 = vpack.c.b16 %v1232, %v1230
    %v1271 = vpack.c.b16 %v1235, %v1233
    %v1272 = vpack.c.b16 %v1236, %v1234
    %v1273 = vpack.c.b16 %v1239, %v1237
    %v1274 = vpack.c.b16 %v1240, %v1238
    %v1275 = vpack.c.b16 %v1243, %v1241
    %v1276 = vpack.c.b16 %v1244, %v1242
    %1309 = vmatpush.bf16.msra.mxu0 %v1259
    %1310 = vmatpush.bf16.msra.mxu0 %v1257
    %1311 = vmatpush.bf16.msra.mxu0 %v1255
    %1312 = vmatpush.bf16.msra.mxu0 %v1253
    %1313 = vmatpush.bf16.msra.mxu0 %v1251
    %1314 = vmatpush.bf16.msra.mxu0 %v1249
    %1315 = vmatpush.bf16.msra.mxu0 %v1247
    %1316 = vmatpush.bf16.msra.mxu0 %v1245
    %1317 = vmatmul.bf16.gmra.mxu0 %v1111
    %v1318 = vpop.f32.mrf.mxu0
    %v1319 = vadd.f32 0.0, %v1318
    %v1320 = vpop.f32.mrf.mxu0
    %v1321 = vadd.f32 0.0, %v1320
    %1322 = vmatmul.bf16.gmra.mxu0 %v1113
    %v1323 = vpop.f32.mrf.mxu0
    %v1324 = vadd.f32 0.0, %v1323
    %v1325 = vpop.f32.mrf.mxu0
    %v1326 = vadd.f32 0.0, %v1325
    %1327 = vdwg.mxu0
    %1328 = vmatpush.bf16.msra.mxu0 %v1275
    %1329 = vmatpush.bf16.msra.mxu0 %v1273
    %1330 = vmatpush.bf16.msra.mxu0 %v1271
    %1331 = vmatpush.bf16.msra.mxu0 %v1269
    %1332 = vmatpush.bf16.msra.mxu0 %v1267
    %1333 = vmatpush.bf16.msra.mxu0 %v1265
    %1334 = vmatpush.bf16.msra.mxu0 %v1263
    %1335 = vmatpush.bf16.msra.mxu0 %v1261
    %1336 = vmatmul.bf16.gmra.mxu0 %v1112
    %v1337 = vpop.f32.mrf.mxu0
    %v1338 = vadd.f32 %v1319, %v1337
    %v1339 = vpop.f32.mrf.mxu0
    %v1340 = vadd.f32 %v1321, %v1339
    %1341 = vmatmul.bf16.gmra.mxu0 %v1114
    %v1342 = vpop.f32.mrf.mxu0
    %v1343 = vadd.f32 %v1324, %v1342
    %v1344 = vpop.f32.mrf.mxu0
    %v1345 = vadd.f32 %v1326, %v1344
    %1346 = vdwg.mxu0
    %1347 = vmatpush.bf16.msra.mxu0 %v1260
    %1348 = vmatpush.bf16.msra.mxu0 %v1258
    %1349 = vmatpush.bf16.msra.mxu0 %v1256
    %1350 = vmatpush.bf16.msra.mxu0 %v1254
    %1351 = vmatpush.bf16.msra.mxu0 %v1252
    %1352 = vmatpush.bf16.msra.mxu0 %v1250
    %1353 = vmatpush.bf16.msra.mxu0 %v1248
    %1354 = vmatpush.bf16.msra.mxu0 %v1246
    %1355 = vmatmul.bf16.gmra.mxu0 %v1111
    %v1356 = vpop.f32.mrf.mxu0
    %v1357 = vadd.f32 0.0, %v1356
    %v1358 = vpop.f32.mrf.mxu0
    %v1359 = vadd.f32 0.0, %v1358
    %1360 = vmatmul.bf16.gmra.mxu0 %v1113
    %v1361 = vpop.f32.mrf.mxu0
    %v1362 = vadd.f32 0.0, %v1361
    %v1363 = vpop.f32.mrf.mxu0
    %v1364 = vadd.f32 0.0, %v1363
    %1365 = vdwg.mxu0
    %1366 = vmatpush.bf16.msra.mxu0 %v1276
    %1367 = vmatpush.bf16.msra.mxu0 %v1274
    %1368 = vmatpush.bf16.msra.mxu0 %v1272
    %1369 = vmatpush.bf16.msra.mxu0 %v1270
    %1370 = vmatpush.bf16.msra.mxu0 %v1268
    %1371 = vmatpush.bf16.msra.mxu0 %v1266
    %1372 = vmatpush.bf16.msra.mxu0 %v1264
    %1373 = vmatpush.bf16.msra.mxu0 %v1262
    %1374 = vmatmul.bf16.gmra.mxu0 %v1112
    %v1375 = vpop.f32.mrf.mxu0
    %v1376 = vadd.f32 %v1357, %v1375
    %v1377 = vpop.f32.mrf.mxu0
    %v1378 = vadd.f32 %v1359, %v1377
    %1379 = vmatmul.bf16.gmra.mxu0 %v1114
    %v1380 = vpop.f32.mrf.mxu0
    %v1381 = vadd.f32 %v1362, %v1380
    %v1382 = vpop.f32.mrf.mxu0
    %v1383 = vadd.f32 %v1364, %v1382
    %1384 = vdwg.mxu0
    %v1386 = vperm.slane %v1115, 0
    %v1387 = vperm.slane %v1115, 1
    %v1390 = vadd.f32 %v1386, %v1338
    %v1391 = vadd.f32 %v1387, %v1376
    %v1392 = vadd.f32 %v1386, %v1340
    %v1393 = vadd.f32 %v1387, %v1378
    %v1394 = vadd.f32 %v1386, %v1343
    %v1395 = vadd.f32 %v1387, %v1381
    %v1396 = vadd.f32 %v1386, %v1345
    %v1397 = vadd.f32 %v1387, %v1383
    %v1398 = vld [vmem:[%s33] sm:$0xf]
    %v1399 = vld [vmem:[%s33 + $0x4] sm:$0xf]
    %v1400 = vld [vmem:[%s33 + $0x8] sm:$0xf]
    %v1401 = vld [vmem:[%s33 + $0xc] sm:$0xf]
    %v1406 = vunpack.c.l.b16 %v1398
    %v1407 = vunpack.c.l.b16 %v1399
    %v1408 = vunpack.c.l.b16 %v1400
    %v1409 = vunpack.c.l.b16 %v1401
    %v1410 = vpack.c.b16 %v1407, %v1406
    %v1411 = vpack.c.b16 %v1409, %v1408
    %v1413 = vsel %vm838, %v1410, 0
    %v1416 = vsel %vm838, %v1411, 0
    %1418 = vmatpush.bf16.msra.mxu0 0
    %1419 = vmatpush.bf16.msra.mxu0 0
    %1420 = vmatpush.bf16.msra.mxu0 0
    %1421 = vmatpush.bf16.msra.mxu0 0
    %1422 = vmatpush.bf16.msra.mxu0 0
    %1423 = vmatpush.bf16.msra.mxu0 0
    %1424 = vmatpush.bf16.msra.mxu0 %v1113
    %1425 = vmatpush.bf16.msra.mxu0 %v1111
    %1426 = vmatmul.bf16.gmra.mxu0 %v1413
    %v1427 = vpop.f32.mrf.mxu0
    %v1428 = vadd.f32 0.0, %v1427
    %v1429 = vpop.f32.mrf.mxu0
    %v1430 = vadd.f32 0.0, %v1429
    %1431 = vmatmul.bf16.gmra.mxu0 %v1416
    %v1432 = vpop.f32.mrf.mxu0
    %v1433 = vadd.f32 0.0, %v1432
    %v1434 = vpop.f32.mrf.mxu0
    %v1435 = vadd.f32 0.0, %v1434
    %1436 = vdwg.mxu0
    %1437 = vmatpush.bf16.msra.mxu0 0
    %1438 = vmatpush.bf16.msra.mxu0 0
    %1439 = vmatpush.bf16.msra.mxu0 0
    %1440 = vmatpush.bf16.msra.mxu0 0
    %1441 = vmatpush.bf16.msra.mxu0 0
    %1442 = vmatpush.bf16.msra.mxu0 0
    %1443 = vmatpush.bf16.msra.mxu0 %v1114
    %1444 = vmatpush.bf16.msra.mxu0 %v1112
    %1445 = vmatmul.bf16.gmra.mxu0 %v1413
    %v1446 = vpop.f32.mrf.mxu0
    %v1447 = vadd.f32 0.0, %v1446
    %v1448 = vpop.f32.mrf.mxu0
    %v1449 = vadd.f32 0.0, %v1448
    %1450 = vmatmul.bf16.gmra.mxu0 %v1416
    %v1451 = vpop.f32.mrf.mxu0
    %v1452 = vadd.f32 0.0, %v1451
    %v1453 = vpop.f32.mrf.mxu0
    %v1454 = vadd.f32 0.0, %v1453
    %1455 = vdwg.mxu0
    %v1456 = vpack.c.bf16 %v1430, %v1428
    %v1457 = vpack.c.bf16 %v1449, %v1447
    %v1458 = vpack.c.bf16 %v1435, %v1433
    %v1459 = vpack.c.bf16 %v1454, %v1452
    %v1460 = vld [vmem:[#allocation6] sm:$0xff]
    %v1461 = vld [vmem:[#allocation6 + $0x8] sm:$0xff]
    %v1462 = vld [vmem:[#allocation6 + $0x10] sm:$0xff]
    %v1463 = vld [vmem:[#allocation6 + $0x18] sm:$0xff]
    %v1464 = vld [vmem:[#allocation6 + $0x20] sm:$0xff]
    %v1465 = vld [vmem:[#allocation6 + $0x28] sm:$0xff]
    %v1466 = vld [vmem:[#allocation6 + $0x30] sm:$0xff]
    %v1467 = vld [vmem:[#allocation6 + $0x38] sm:$0xff]
    %v1468 = vld [vmem:[#allocation6 + $0x40] sm:$0xff]
    %v1469 = vld [vmem:[#allocation6 + $0x48] sm:$0xff]
    %v1470 = vld [vmem:[#allocation6 + $0x50] sm:$0xff]
    %v1471 = vld [vmem:[#allocation6 + $0x58] sm:$0xff]
    %v1472 = vld [vmem:[#allocation6 + $0x60] sm:$0xff]
    %v1473 = vld [vmem:[#allocation6 + $0x68] sm:$0xff]
    %v1474 = vld [vmem:[#allocation6 + $0x70] sm:$0xff]
    %v1475 = vld [vmem:[#allocation6 + $0x78] sm:$0xff]
    %v1476 = vld [vmem:[#allocation6 + $0x80] sm:$0xff]
    %v1477 = vld [vmem:[#allocation6 + $0x88] sm:$0xff]
    %v1478 = vld [vmem:[#allocation6 + $0x90] sm:$0xff]
    %v1479 = vld [vmem:[#allocation6 + $0x98] sm:$0xff]
    %v1480 = vld [vmem:[#allocation6 + $0xa0] sm:$0xff]
    %v1481 = vld [vmem:[#allocation6 + $0xa8] sm:$0xff]
    %v1482 = vld [vmem:[#allocation6 + $0xb0] sm:$0xff]
    %v1483 = vld [vmem:[#allocation6 + $0xb8] sm:$0xff]
    %v1484 = vld [vmem:[#allocation6 + $0xc0] sm:$0xff]
    %v1485 = vld [vmem:[#allocation6 + $0xc8] sm:$0xff]
    %v1486 = vld [vmem:[#allocation6 + $0xd0] sm:$0xff]
    %v1487 = vld [vmem:[#allocation6 + $0xd8] sm:$0xff]
    %v1488 = vld [vmem:[#allocation6 + $0xe0] sm:$0xff]
    %v1489 = vld [vmem:[#allocation6 + $0xe8] sm:$0xff]
    %v1490 = vld [vmem:[#allocation6 + $0xf0] sm:$0xff]
    %v1491 = vld [vmem:[#allocation6 + $0xf8] sm:$0xff]
    %v1524 = vunpack.c.l.b16 %v1460
    %v1525 = vunpack.c.h.b16 %v1460
    %v1526 = vunpack.c.l.b16 %v1461
    %v1527 = vunpack.c.h.b16 %v1461
    %v1528 = vunpack.c.l.b16 %v1462
    %v1529 = vunpack.c.h.b16 %v1462
    %v1530 = vunpack.c.l.b16 %v1463
    %v1531 = vunpack.c.h.b16 %v1463
    %v1532 = vunpack.c.l.b16 %v1464
    %v1533 = vunpack.c.h.b16 %v1464
    %v1534 = vunpack.c.l.b16 %v1465
    %v1535 = vunpack.c.h.b16 %v1465
    %v1536 = vunpack.c.l.b16 %v1466
    %v1537 = vunpack.c.h.b16 %v1466
    %v1538 = vunpack.c.l.b16 %v1467
    %v1539 = vunpack.c.h.b16 %v1467
    %v1540 = vunpack.c.l.b16 %v1468
    %v1541 = vunpack.c.h.b16 %v1468
    %v1542 = vunpack.c.l.b16 %v1469
    %v1543 = vunpack.c.h.b16 %v1469
    %v1544 = vunpack.c.l.b16 %v1470
    %v1545 = vunpack.c.h.b16 %v1470
    %v1546 = vunpack.c.l.b16 %v1471
    %v1547 = vunpack.c.h.b16 %v1471
    %v1548 = vunpack.c.l.b16 %v1472
    %v1549 = vunpack.c.h.b16 %v1472
    %v1550 = vunpack.c.l.b16 %v1473
    %v1551 = vunpack.c.h.b16 %v1473
    %v1552 = vunpack.c.l.b16 %v1474
    %v1553 = vunpack.c.h.b16 %v1474
    %v1554 = vunpack.c.l.b16 %v1475
    %v1555 = vunpack.c.h.b16 %v1475
    %v1556 = vunpack.c.l.b16 %v1476
    %v1557 = vunpack.c.h.b16 %v1476
    %v1558 = vunpack.c.l.b16 %v1477
    %v1559 = vunpack.c.h.b16 %v1477
    %v1560 = vunpack.c.l.b16 %v1478
    %v1561 = vunpack.c.h.b16 %v1478
    %v1562 = vunpack.c.l.b16 %v1479
    %v1563 = vunpack.c.h.b16 %v1479
    %v1564 = vunpack.c.l.b16 %v1480
    %v1565 = vunpack.c.h.b16 %v1480
    %v1566 = vunpack.c.l.b16 %v1481
    %v1567 = vunpack.c.h.b16 %v1481
    %v1568 = vunpack.c.l.b16 %v1482
    %v1569 = vunpack.c.h.b16 %v1482
    %v1570 = vunpack.c.l.b16 %v1483
    %v1571 = vunpack.c.h.b16 %v1483
    %v1572 = vunpack.c.l.b16 %v1484
    %v1573 = vunpack.c.h.b16 %v1484
    %v1574 = vunpack.c.l.b16 %v1485
    %v1575 = vunpack.c.h.b16 %v1485
    %v1576 = vunpack.c.l.b16 %v1486
    %v1577 = vunpack.c.h.b16 %v1486
    %v1578 = vunpack.c.l.b16 %v1487
    %v1579 = vunpack.c.h.b16 %v1487
    %v1580 = vunpack.c.l.b16 %v1488
    %v1581 = vunpack.c.h.b16 %v1488
    %v1582 = vunpack.c.l.b16 %v1489
    %v1583 = vunpack.c.h.b16 %v1489
    %v1584 = vunpack.c.l.b16 %v1490
    %v1585 = vunpack.c.h.b16 %v1490
    %v1586 = vunpack.c.l.b16 %v1491
    %v1587 = vunpack.c.h.b16 %v1491
    %v1588 = vpack.c.b16 %v1526, %v1524
    %v1589 = vpack.c.b16 %v1527, %v1525
    %v1590 = vpack.c.b16 %v1530, %v1528
    %v1591 = vpack.c.b16 %v1531, %v1529
    %v1592 = vpack.c.b16 %v1534, %v1532
    %v1593 = vpack.c.b16 %v1535, %v1533
    %v1594 = vpack.c.b16 %v1538, %v1536
    %v1595 = vpack.c.b16 %v1539, %v1537
    %v1596 = vpack.c.b16 %v1542, %v1540
    %v1597 = vpack.c.b16 %v1543, %v1541
    %v1598 = vpack.c.b16 %v1546, %v1544
    %v1599 = vpack.c.b16 %v1547, %v1545
    %v1600 = vpack.c.b16 %v1550, %v1548
    %v1601 = vpack.c.b16 %v1551, %v1549
    %v1602 = vpack.c.b16 %v1554, %v1552
    %v1603 = vpack.c.b16 %v1555, %v1553
    %v1604 = vpack.c.b16 %v1558, %v1556
    %v1605 = vpack.c.b16 %v1559, %v1557
    %v1606 = vpack.c.b16 %v1562, %v1560
    %v1607 = vpack.c.b16 %v1563, %v1561
    %v1608 = vpack.c.b16 %v1566, %v1564
    %v1609 = vpack.c.b16 %v1567, %v1565
    %v1610 = vpack.c.b16 %v1570, %v1568
    %v1611 = vpack.c.b16 %v1571, %v1569
    %v1612 = vpack.c.b16 %v1574, %v1572
    %v1613 = vpack.c.b16 %v1575, %v1573
    %v1614 = vpack.c.b16 %v1578, %v1576
    %v1615 = vpack.c.b16 %v1579, %v1577
    %v1616 = vpack.c.b16 %v1582, %v1580
    %v1617 = vpack.c.b16 %v1583, %v1581
    %v1618 = vpack.c.b16 %v1586, %v1584
    %v1619 = vpack.c.b16 %v1587, %v1585
    %1652 = vmatpush.bf16.msra.mxu0 %v1602
    %1653 = vmatpush.bf16.msra.mxu0 %v1600
    %1654 = vmatpush.bf16.msra.mxu0 %v1598
    %1655 = vmatpush.bf16.msra.mxu0 %v1596
    %1656 = vmatpush.bf16.msra.mxu0 %v1594
    %1657 = vmatpush.bf16.msra.mxu0 %v1592
    %1658 = vmatpush.bf16.msra.mxu0 %v1590
    %1659 = vmatpush.bf16.msra.mxu0 %v1588
    %1660 = vmatmul.bf16.gmra.mxu0 %v1456
    %v1661 = vpop.f32.mrf.mxu0
    %v1662 = vadd.f32 0.0, %v1661
    %v1663 = vpop.f32.mrf.mxu0
    %v1664 = vadd.f32 0.0, %v1663
    %1665 = vmatmul.bf16.gmra.mxu0 %v1458
    %v1666 = vpop.f32.mrf.mxu0
    %v1667 = vadd.f32 0.0, %v1666
    %v1668 = vpop.f32.mrf.mxu0
    %v1669 = vadd.f32 0.0, %v1668
    %1670 = vdwg.mxu0
    %1671 = vmatpush.bf16.msra.mxu0 %v1618
    %1672 = vmatpush.bf16.msra.mxu0 %v1616
    %1673 = vmatpush.bf16.msra.mxu0 %v1614
    %1674 = vmatpush.bf16.msra.mxu0 %v1612
    %1675 = vmatpush.bf16.msra.mxu0 %v1610
    %1676 = vmatpush.bf16.msra.mxu0 %v1608
    %1677 = vmatpush.bf16.msra.mxu0 %v1606
    %1678 = vmatpush.bf16.msra.mxu0 %v1604
    %1679 = vmatmul.bf16.gmra.mxu0 %v1457
    %v1680 = vpop.f32.mrf.mxu0
    %v1681 = vadd.f32 %v1662, %v1680
    %v1682 = vpop.f32.mrf.mxu0
    %v1683 = vadd.f32 %v1664, %v1682
    %1684 = vmatmul.bf16.gmra.mxu0 %v1459
    %v1685 = vpop.f32.mrf.mxu0
    %v1686 = vadd.f32 %v1667, %v1685
    %v1687 = vpop.f32.mrf.mxu0
    %v1688 = vadd.f32 %v1669, %v1687
    %1689 = vdwg.mxu0
    %1690 = vmatpush.bf16.msra.mxu0 %v1603
    %1691 = vmatpush.bf16.msra.mxu0 %v1601
    %1692 = vmatpush.bf16.msra.mxu0 %v1599
    %1693 = vmatpush.bf16.msra.mxu0 %v1597
    %1694 = vmatpush.bf16.msra.mxu0 %v1595
    %1695 = vmatpush.bf16.msra.mxu0 %v1593
    %1696 = vmatpush.bf16.msra.mxu0 %v1591
    %1697 = vmatpush.bf16.msra.mxu0 %v1589
    %1698 = vmatmul.bf16.gmra.mxu0 %v1456
    %v1699 = vpop.f32.mrf.mxu0
    %v1700 = vadd.f32 0.0, %v1699
    %v1701 = vpop.f32.mrf.mxu0
    %v1702 = vadd.f32 0.0, %v1701
    %1703 = vmatmul.bf16.gmra.mxu0 %v1458
    %v1704 = vpop.f32.mrf.mxu0
    %v1705 = vadd.f32 0.0, %v1704
    %v1706 = vpop.f32.mrf.mxu0
    %v1707 = vadd.f32 0.0, %v1706
    %1708 = vdwg.mxu0
    %1709 = vmatpush.bf16.msra.mxu0 %v1619
    %1710 = vmatpush.bf16.msra.mxu0 %v1617
    %1711 = vmatpush.bf16.msra.mxu0 %v1615
    %1712 = vmatpush.bf16.msra.mxu0 %v1613
    %1713 = vmatpush.bf16.msra.mxu0 %v1611
    %1714 = vmatpush.bf16.msra.mxu0 %v1609
    %1715 = vmatpush.bf16.msra.mxu0 %v1607
    %1716 = vmatpush.bf16.msra.mxu0 %v1605
    %1717 = vmatmul.bf16.gmra.mxu0 %v1457
    %v1718 = vpop.f32.mrf.mxu0
    %v1719 = vadd.f32 %v1700, %v1718
    %v1720 = vpop.f32.mrf.mxu0
    %v1721 = vadd.f32 %v1702, %v1720
    %1722 = vmatmul.bf16.gmra.mxu0 %v1459
    %v1723 = vpop.f32.mrf.mxu0
    %v1724 = vadd.f32 %v1705, %v1723
    %v1725 = vpop.f32.mrf.mxu0
    %v1726 = vadd.f32 %v1707, %v1725
    %1727 = vdwg.mxu0
    %v1728 = vadd.f32 %v1390, %v1681
    %v1729 = vadd.f32 %v1391, %v1719
    %v1730 = vadd.f32 %v1392, %v1683
    %v1731 = vadd.f32 %v1393, %v1721
    %v1732 = vadd.f32 %v1394, %v1686
    %v1733 = vadd.f32 %v1395, %v1724
    %v1734 = vadd.f32 %v1396, %v1688
    %v1735 = vadd.f32 %v1397, %v1726
    %s1736 = scalar_lea.vmem %s33, 16
    %v1737 = vld [vmem:[%s1736] sm:$0xf]
    %v1738 = vld [vmem:[%s1736 + $0x4] sm:$0xf]
    %v1739 = vld [vmem:[%s1736 + $0x8] sm:$0xf]
    %v1740 = vld [vmem:[%s1736 + $0xc] sm:$0xf]
    %v1745 = vunpack.c.l.b16 %v1737
    %v1746 = vunpack.c.l.b16 %v1738
    %v1747 = vunpack.c.l.b16 %v1739
    %v1748 = vunpack.c.l.b16 %v1740
    %v1749 = vpack.c.b16 %v1746, %v1745
    %v1750 = vpack.c.b16 %v1748, %v1747
    %v1752 = vsel %vm838, %v1749, 0
    %v1755 = vsel %vm838, %v1750, 0
    %1757 = vmatpush.bf16.msra.mxu0 0
    %1758 = vmatpush.bf16.msra.mxu0 0
    %1759 = vmatpush.bf16.msra.mxu0 0
    %1760 = vmatpush.bf16.msra.mxu0 0
    %1761 = vmatpush.bf16.msra.mxu0 0
    %1762 = vmatpush.bf16.msra.mxu0 0
    %1763 = vmatpush.bf16.msra.mxu0 %v1113
    %1764 = vmatpush.bf16.msra.mxu0 %v1111
    %1765 = vmatmul.bf16.gmra.mxu0 %v1752
    %v1766 = vpop.f32.mrf.mxu0
    %v1767 = vadd.f32 0.0, %v1766
    %v1768 = vpop.f32.mrf.mxu0
    %v1769 = vadd.f32 0.0, %v1768
    %1770 = vmatmul.bf16.gmra.mxu0 %v1755
    %v1771 = vpop.f32.mrf.mxu0
    %v1772 = vadd.f32 0.0, %v1771
    %v1773 = vpop.f32.mrf.mxu0
    %v1774 = vadd.f32 0.0, %v1773
    %1775 = vdwg.mxu0
    %1776 = vmatpush.bf16.msra.mxu0 0
    %1777 = vmatpush.bf16.msra.mxu0 0
    %1778 = vmatpush.bf16.msra.mxu0 0
    %1779 = vmatpush.bf16.msra.mxu0 0
    %1780 = vmatpush.bf16.msra.mxu0 0
    %1781 = vmatpush.bf16.msra.mxu0 0
    %1782 = vmatpush.bf16.msra.mxu0 %v1114
    %1783 = vmatpush.bf16.msra.mxu0 %v1112
    %1784 = vmatmul.bf16.gmra.mxu0 %v1752
    %v1785 = vpop.f32.mrf.mxu0
    %v1786 = vadd.f32 0.0, %v1785
    %v1787 = vpop.f32.mrf.mxu0
    %v1788 = vadd.f32 0.0, %v1787
    %1789 = vmatmul.bf16.gmra.mxu0 %v1755
    %v1790 = vpop.f32.mrf.mxu0
    %v1791 = vadd.f32 0.0, %v1790
    %v1792 = vpop.f32.mrf.mxu0
    %v1793 = vadd.f32 0.0, %v1792
    %1794 = vdwg.mxu0
    %v1795 = vpack.c.bf16 %v1769, %v1767
    %v1796 = vpack.c.bf16 %v1788, %v1786
    %v1797 = vpack.c.bf16 %v1774, %v1772
    %v1798 = vpack.c.bf16 %v1793, %v1791
    %s1799 = scalar_lea.vmem [#allocation6], 512
    %v1800 = vld [vmem:[%s1799] sm:$0xff]
    %v1801 = vld [vmem:[%s1799 + $0x8] sm:$0xff]
    %v1802 = vld [vmem:[%s1799 + $0x10] sm:$0xff]
    %v1803 = vld [vmem:[%s1799 + $0x18] sm:$0xff]
    %v1804 = vld [vmem:[%s1799 + $0x20] sm:$0xff]
    %v1805 = vld [vmem:[%s1799 + $0x28] sm:$0xff]
    %v1806 = vld [vmem:[%s1799 + $0x30] sm:$0xff]
    %v1807 = vld [vmem:[%s1799 + $0x38] sm:$0xff]
    %v1808 = vld [vmem:[%s1799 + $0x40] sm:$0xff]
    %v1809 = vld [vmem:[%s1799 + $0x48] sm:$0xff]
    %v1810 = vld [vmem:[%s1799 + $0x50] sm:$0xff]
    %v1811 = vld [vmem:[%s1799 + $0x58] sm:$0xff]
    %v1812 = vld [vmem:[%s1799 + $0x60] sm:$0xff]
    %v1813 = vld [vmem:[%s1799 + $0x68] sm:$0xff]
    %v1814 = vld [vmem:[%s1799 + $0x70] sm:$0xff]
    %v1815 = vld [vmem:[%s1799 + $0x78] sm:$0xff]
    %v1816 = vld [vmem:[%s1799 + $0x80] sm:$0xff]
    %v1817 = vld [vmem:[%s1799 + $0x88] sm:$0xff]
    %v1818 = vld [vmem:[%s1799 + $0x90] sm:$0xff]
    %v1819 = vld [vmem:[%s1799 + $0x98] sm:$0xff]
    %v1820 = vld [vmem:[%s1799 + $0xa0] sm:$0xff]
    %v1821 = vld [vmem:[%s1799 + $0xa8] sm:$0xff]
    %v1822 = vld [vmem:[%s1799 + $0xb0] sm:$0xff]
    %v1823 = vld [vmem:[%s1799 + $0xb8] sm:$0xff]
    %v1824 = vld [vmem:[%s1799 + $0xc0] sm:$0xff]
    %v1825 = vld [vmem:[%s1799 + $0xc8] sm:$0xff]
    %v1826 = vld [vmem:[%s1799 + $0xd0] sm:$0xff]
    %v1827 = vld [vmem:[%s1799 + $0xd8] sm:$0xff]
    %v1828 = vld [vmem:[%s1799 + $0xe0] sm:$0xff]
    %v1829 = vld [vmem:[%s1799 + $0xe8] sm:$0xff]
    %v1830 = vld [vmem:[%s1799 + $0xf0] sm:$0xff]
    %v1831 = vld [vmem:[%s1799 + $0xf8] sm:$0xff]
    %v1864 = vunpack.c.l.b16 %v1800
    %v1865 = vunpack.c.h.b16 %v1800
    %v1866 = vunpack.c.l.b16 %v1801
    %v1867 = vunpack.c.h.b16 %v1801
    %v1868 = vunpack.c.l.b16 %v1802
    %v1869 = vunpack.c.h.b16 %v1802
    %v1870 = vunpack.c.l.b16 %v1803
    %v1871 = vunpack.c.h.b16 %v1803
    %v1872 = vunpack.c.l.b16 %v1804
    %v1873 = vunpack.c.h.b16 %v1804
    %v1874 = vunpack.c.l.b16 %v1805
    %v1875 = vunpack.c.h.b16 %v1805
    %v1876 = vunpack.c.l.b16 %v1806
    %v1877 = vunpack.c.h.b16 %v1806
    %v1878 = vunpack.c.l.b16 %v1807
    %v1879 = vunpack.c.h.b16 %v1807
    %v1880 = vunpack.c.l.b16 %v1808
    %v1881 = vunpack.c.h.b16 %v1808
    %v1882 = vunpack.c.l.b16 %v1809
    %v1883 = vunpack.c.h.b16 %v1809
    %v1884 = vunpack.c.l.b16 %v1810
    %v1885 = vunpack.c.h.b16 %v1810
    %v1886 = vunpack.c.l.b16 %v1811
    %v1887 = vunpack.c.h.b16 %v1811
    %v1888 = vunpack.c.l.b16 %v1812
    %v1889 = vunpack.c.h.b16 %v1812
    %v1890 = vunpack.c.l.b16 %v1813
    %v1891 = vunpack.c.h.b16 %v1813
    %v1892 = vunpack.c.l.b16 %v1814
    %v1893 = vunpack.c.h.b16 %v1814
    %v1894 = vunpack.c.l.b16 %v1815
    %v1895 = vunpack.c.h.b16 %v1815
    %v1896 = vunpack.c.l.b16 %v1816
    %v1897 = vunpack.c.h.b16 %v1816
    %v1898 = vunpack.c.l.b16 %v1817
    %v1899 = vunpack.c.h.b16 %v1817
    %v1900 = vunpack.c.l.b16 %v1818
    %v1901 = vunpack.c.h.b16 %v1818
    %v1902 = vunpack.c.l.b16 %v1819
    %v1903 = vunpack.c.h.b16 %v1819
    %v1904 = vunpack.c.l.b16 %v1820
    %v1905 = vunpack.c.h.b16 %v1820
    %v1906 = vunpack.c.l.b16 %v1821
    %v1907 = vunpack.c.h.b16 %v1821
    %v1908 = vunpack.c.l.b16 %v1822
    %v1909 = vunpack.c.h.b16 %v1822
    %v1910 = vunpack.c.l.b16 %v1823
    %v1911 = vunpack.c.h.b16 %v1823
    %v1912 = vunpack.c.l.b16 %v1824
    %v1913 = vunpack.c.h.b16 %v1824
    %v1914 = vunpack.c.l.b16 %v1825
    %v1915 = vunpack.c.h.b16 %v1825
    %v1916 = vunpack.c.l.b16 %v1826
    %v1917 = vunpack.c.h.b16 %v1826
    %v1918 = vunpack.c.l.b16 %v1827
    %v1919 = vunpack.c.h.b16 %v1827
    %v1920 = vunpack.c.l.b16 %v1828
    %v1921 = vunpack.c.h.b16 %v1828
    %v1922 = vunpack.c.l.b16 %v1829
    %v1923 = vunpack.c.h.b16 %v1829
    %v1924 = vunpack.c.l.b16 %v1830
    %v1925 = vunpack.c.h.b16 %v1830
    %v1926 = vunpack.c.l.b16 %v1831
    %v1927 = vunpack.c.h.b16 %v1831
    %v1928 = vpack.c.b16 %v1866, %v1864
    %v1929 = vpack.c.b16 %v1867, %v1865
    %v1930 = vpack.c.b16 %v1870, %v1868
    %v1931 = vpack.c.b16 %v1871, %v1869
    %v1932 = vpack.c.b16 %v1874, %v1872
    %v1933 = vpack.c.b16 %v1875, %v1873
    %v1934 = vpack.c.b16 %v1878, %v1876
    %v1935 = vpack.c.b16 %v1879, %v1877
    %v1936 = vpack.c.b16 %v1882, %v1880
    %v1937 = vpack.c.b16 %v1883, %v1881
    %v1938 = vpack.c.b16 %v1886, %v1884
    %v1939 = vpack.c.b16 %v1887, %v1885
    %v1940 = vpack.c.b16 %v1890, %v1888
    %v1941 = vpack.c.b16 %v1891, %v1889
    %v1942 = vpack.c.b16 %v1894, %v1892
    %v1943 = vpack.c.b16 %v1895, %v1893
    %v1944 = vpack.c.b16 %v1898, %v1896
    %v1945 = vpack.c.b16 %v1899, %v1897
    %v1946 = vpack.c.b16 %v1902, %v1900
    %v1947 = vpack.c.b16 %v1903, %v1901
    %v1948 = vpack.c.b16 %v1906, %v1904
    %v1949 = vpack.c.b16 %v1907, %v1905
    %v1950 = vpack.c.b16 %v1910, %v1908
    %v1951 = vpack.c.b16 %v1911, %v1909
    %v1952 = vpack.c.b16 %v1914, %v1912
    %v1953 = vpack.c.b16 %v1915, %v1913
    %v1954 = vpack.c.b16 %v1918, %v1916
    %v1955 = vpack.c.b16 %v1919, %v1917
    %v1956 = vpack.c.b16 %v1922, %v1920
    %v1957 = vpack.c.b16 %v1923, %v1921
    %v1958 = vpack.c.b16 %v1926, %v1924
    %v1959 = vpack.c.b16 %v1927, %v1925
    %1992 = vmatpush.bf16.msra.mxu0 %v1942
    %1993 = vmatpush.bf16.msra.mxu0 %v1940
    %1994 = vmatpush.bf16.msra.mxu0 %v1938
    %1995 = vmatpush.bf16.msra.mxu0 %v1936
    %1996 = vmatpush.bf16.msra.mxu0 %v1934
    %1997 = vmatpush.bf16.msra.mxu0 %v1932
    %1998 = vmatpush.bf16.msra.mxu0 %v1930
    %1999 = vmatpush.bf16.msra.mxu0 %v1928
    %2000 = vmatmul.bf16.gmra.mxu0 %v1795
    %v2001 = vpop.f32.mrf.mxu0
    %v2002 = vadd.f32 0.0, %v2001
    %v2003 = vpop.f32.mrf.mxu0
    %v2004 = vadd.f32 0.0, %v2003
    %2005 = vmatmul.bf16.gmra.mxu0 %v1797
    %v2006 = vpop.f32.mrf.mxu0
    %v2007 = vadd.f32 0.0, %v2006
    %v2008 = vpop.f32.mrf.mxu0
    %v2009 = vadd.f32 0.0, %v2008
    %2010 = vdwg.mxu0
    %2011 = vmatpush.bf16.msra.mxu0 %v1958
    %2012 = vmatpush.bf16.msra.mxu0 %v1956
    %2013 = vmatpush.bf16.msra.mxu0 %v1954
    %2014 = vmatpush.bf16.msra.mxu0 %v1952
    %2015 = vmatpush.bf16.msra.mxu0 %v1950
    %2016 = vmatpush.bf16.msra.mxu0 %v1948
    %2017 = vmatpush.bf16.msra.mxu0 %v1946
    %2018 = vmatpush.bf16.msra.mxu0 %v1944
    %2019 = vmatmul.bf16.gmra.mxu0 %v1796
    %v2020 = vpop.f32.mrf.mxu0
    %v2021 = vadd.f32 %v2002, %v2020
    %v2022 = vpop.f32.mrf.mxu0
    %v2023 = vadd.f32 %v2004, %v2022
    %2024 = vmatmul.bf16.gmra.mxu0 %v1798
    %v2025 = vpop.f32.mrf.mxu0
    %v2026 = vadd.f32 %v2007, %v2025
    %v2027 = vpop.f32.mrf.mxu0
    %v2028 = vadd.f32 %v2009, %v2027
    %2029 = vdwg.mxu0
    %2030 = vmatpush.bf16.msra.mxu0 %v1943
    %2031 = vmatpush.bf16.msra.mxu0 %v1941
    %2032 = vmatpush.bf16.msra.mxu0 %v1939
    %2033 = vmatpush.bf16.msra.mxu0 %v1937
    %2034 = vmatpush.bf16.msra.mxu0 %v1935
    %2035 = vmatpush.bf16.msra.mxu0 %v1933
    %2036 = vmatpush.bf16.msra.mxu0 %v1931
    %2037 = vmatpush.bf16.msra.mxu0 %v1929
    %2038 = vmatmul.bf16.gmra.mxu0 %v1795
    %v2039 = vpop.f32.mrf.mxu0
    %v2040 = vadd.f32 0.0, %v2039
    %v2041 = vpop.f32.mrf.mxu0
    %v2042 = vadd.f32 0.0, %v2041
    %2043 = vmatmul.bf16.gmra.mxu0 %v1797
    %v2044 = vpop.f32.mrf.mxu0
    %v2045 = vadd.f32 0.0, %v2044
    %v2046 = vpop.f32.mrf.mxu0
    %v2047 = vadd.f32 0.0, %v2046
    %2048 = vdwg.mxu0
    %2049 = vmatpush.bf16.msra.mxu0 %v1959
    %2050 = vmatpush.bf16.msra.mxu0 %v1957
    %2051 = vmatpush.bf16.msra.mxu0 %v1955
    %2052 = vmatpush.bf16.msra.mxu0 %v1953
    %2053 = vmatpush.bf16.msra.mxu0 %v1951
    %2054 = vmatpush.bf16.msra.mxu0 %v1949
    %2055 = vmatpush.bf16.msra.mxu0 %v1947
    %2056 = vmatpush.bf16.msra.mxu0 %v1945
    %2057 = vmatmul.bf16.gmra.mxu0 %v1796
    %v2058 = vpop.f32.mrf.mxu0
    %v2059 = vadd.f32 %v2040, %v2058
    %v2060 = vpop.f32.mrf.mxu0
    %v2061 = vadd.f32 %v2042, %v2060
    %2062 = vmatmul.bf16.gmra.mxu0 %v1798
    %v2063 = vpop.f32.mrf.mxu0
    %v2064 = vadd.f32 %v2045, %v2063
    %v2065 = vpop.f32.mrf.mxu0
    %v2066 = vadd.f32 %v2047, %v2065
    %2067 = vdwg.mxu0
    %v2068 = vadd.f32 %v1728, %v2021
    %v2069 = vadd.f32 %v1729, %v2059
    %v2070 = vadd.f32 %v1730, %v2023
    %v2071 = vadd.f32 %v1731, %v2061
    %v2072 = vadd.f32 %v1732, %v2026
    %v2073 = vadd.f32 %v1733, %v2064
    %v2074 = vadd.f32 %v1734, %v2028
    %v2075 = vadd.f32 %v1735, %v2066
    %v2076 = vpack.c.bf16 %v933, %v931
    %v2077 = vld [vmem:[#allocation9] sm:$0x1]
    %s2078 = scalar_lea.vmem %s43, 64
    %v2079 = vld [vmem:[%s2078] sm:$0xf]
    %v2080 = vld [vmem:[%s2078 + $0x4] sm:$0xf]
    %v2081 = vld [vmem:[%s2078 + $0x8] sm:$0xf]
    %v2082 = vld [vmem:[%s2078 + $0xc] sm:$0xf]
    %v2083 = vld [vmem:[%s2078 + $0x10] sm:$0xf]
    %v2084 = vld [vmem:[%s2078 + $0x14] sm:$0xf]
    %v2085 = vld [vmem:[%s2078 + $0x18] sm:$0xf]
    %v2086 = vld [vmem:[%s2078 + $0x1c] sm:$0xf]
    %v2087 = vld [vmem:[%s2078 + $0x20] sm:$0xf]
    %v2088 = vld [vmem:[%s2078 + $0x24] sm:$0xf]
    %v2089 = vld [vmem:[%s2078 + $0x28] sm:$0xf]
    %v2090 = vld [vmem:[%s2078 + $0x2c] sm:$0xf]
    %v2091 = vld [vmem:[%s2078 + $0x30] sm:$0xf]
    %v2092 = vld [vmem:[%s2078 + $0x34] sm:$0xf]
    %v2093 = vld [vmem:[%s2078 + $0x38] sm:$0xf]
    %v2094 = vld [vmem:[%s2078 + $0x3c] sm:$0xf]
    %v2111 = vunpack.c.l.b16 %v2079
    %v2112 = vunpack.c.l.b16 %v2080
    %v2113 = vunpack.c.l.b16 %v2081
    %v2114 = vunpack.c.l.b16 %v2082
    %v2115 = vunpack.c.l.b16 %v2083
    %v2116 = vunpack.c.l.b16 %v2084
    %v2117 = vunpack.c.l.b16 %v2085
    %v2118 = vunpack.c.l.b16 %v2086
    %v2119 = vunpack.c.l.b16 %v2087
    %v2120 = vunpack.c.l.b16 %v2088
    %v2121 = vunpack.c.l.b16 %v2089
    %v2122 = vunpack.c.l.b16 %v2090
    %v2123 = vunpack.c.l.b16 %v2091
    %v2124 = vunpack.c.l.b16 %v2092
    %v2125 = vunpack.c.l.b16 %v2093
    %v2126 = vunpack.c.l.b16 %v2094
    %v2127 = vpack.c.b16 %v2112, %v2111
    %v2128 = vpack.c.b16 %v2114, %v2113
    %v2129 = vpack.c.b16 %v2116, %v2115
    %v2130 = vpack.c.b16 %v2118, %v2117
    %v2131 = vpack.c.b16 %v2120, %v2119
    %v2132 = vpack.c.b16 %v2122, %v2121
    %v2133 = vpack.c.b16 %v2124, %v2123
    %v2134 = vpack.c.b16 %v2126, %v2125
    %2143 = vmatpush.bf16.msra.mxu0 %v2134
    %2144 = vmatpush.bf16.msra.mxu0 %v2133
    %2145 = vmatpush.bf16.msra.mxu0 %v2132
    %2146 = vmatpush.bf16.msra.mxu0 %v2131
    %2147 = vmatpush.bf16.msra.mxu0 %v2130
    %2148 = vmatpush.bf16.msra.mxu0 %v2129
    %2149 = vmatpush.bf16.msra.mxu0 %v2128
    %2150 = vmatpush.bf16.msra.mxu0 %v2127
    %2151 = vmatmul.bf16.gmra.mxu0 %v2076
    %v2152 = vpop.f32.mrf.mxu0
    %v2153 = vadd.f32 0.0, %v2152
    %v2154 = vpop.f32.mrf.mxu0
    %v2155 = vadd.f32 0.0, %v2154
    %2156 = vdwg.mxu0
    %v2158 = vperm.slane %v2077, 0
    %v2160 = vadd.f32 %v2158, %v2153
    %v2161 = vadd.f32 %v2158, %v2155
    %v2162 = vld [vmem:[%s35] sm:$0xf]
    %v2163 = vld [vmem:[%s35 + $0x4] sm:$0xf]
    %v2166 = vunpack.c.l.b16 %v2162
    %v2167 = vunpack.c.l.b16 %v2163
    %v2168 = vpack.c.b16 %v2167, %v2166
    %v2170 = vsel %vm949, %v2168, 0
    %2172 = vmatpush.bf16.msra.mxu0 0
    %2173 = vmatpush.bf16.msra.mxu0 0
    %2174 = vmatpush.bf16.msra.mxu0 0
    %2175 = vmatpush.bf16.msra.mxu0 0
    %2176 = vmatpush.bf16.msra.mxu0 0
    %2177 = vmatpush.bf16.msra.mxu0 0
    %2178 = vmatpush.bf16.msra.mxu0 0
    %2179 = vmatpush.bf16.msra.mxu0 %v2076
    %2180 = vmatmul.bf16.gmra.mxu0 %v2170
    %v2181 = vpop.f32.mrf.mxu0
    %v2182 = vadd.f32 0.0, %v2181
    %v2183 = vpop.f32.mrf.mxu0
    %v2184 = vadd.f32 0.0, %v2183
    %2185 = vdwg.mxu0
    %v2186 = vpack.c.bf16 %v2184, %v2182
    %v2187 = vld [vmem:[%s43] sm:$0xf]
    %v2188 = vld [vmem:[%s43 + $0x4] sm:$0xf]
    %v2189 = vld [vmem:[%s43 + $0x8] sm:$0xf]
    %v2190 = vld [vmem:[%s43 + $0xc] sm:$0xf]
    %v2191 = vld [vmem:[%s43 + $0x10] sm:$0xf]
    %v2192 = vld [vmem:[%s43 + $0x14] sm:$0xf]
    %v2193 = vld [vmem:[%s43 + $0x18] sm:$0xf]
    %v2194 = vld [vmem:[%s43 + $0x1c] sm:$0xf]
    %v2195 = vld [vmem:[%s43 + $0x20] sm:$0xf]
    %v2196 = vld [vmem:[%s43 + $0x24] sm:$0xf]
    %v2197 = vld [vmem:[%s43 + $0x28] sm:$0xf]
    %v2198 = vld [vmem:[%s43 + $0x2c] sm:$0xf]
    %v2199 = vld [vmem:[%s43 + $0x30] sm:$0xf]
    %v2200 = vld [vmem:[%s43 + $0x34] sm:$0xf]
    %v2201 = vld [vmem:[%s43 + $0x38] sm:$0xf]
    %v2202 = vld [vmem:[%s43 + $0x3c] sm:$0xf]
    %v2219 = vunpack.c.l.b16 %v2187
    %v2220 = vunpack.c.l.b16 %v2188
    %v2221 = vunpack.c.l.b16 %v2189
    %v2222 = vunpack.c.l.b16 %v2190
    %v2223 = vunpack.c.l.b16 %v2191
    %v2224 = vunpack.c.l.b16 %v2192
    %v2225 = vunpack.c.l.b16 %v2193
    %v2226 = vunpack.c.l.b16 %v2194
    %v2227 = vunpack.c.l.b16 %v2195
    %v2228 = vunpack.c.l.b16 %v2196
    %v2229 = vunpack.c.l.b16 %v2197
    %v2230 = vunpack.c.l.b16 %v2198
    %v2231 = vunpack.c.l.b16 %v2199
    %v2232 = vunpack.c.l.b16 %v2200
    %v2233 = vunpack.c.l.b16 %v2201
    %v2234 = vunpack.c.l.b16 %v2202
    %v2235 = vpack.c.b16 %v2220, %v2219
    %v2236 = vpack.c.b16 %v2222, %v2221
    %v2237 = vpack.c.b16 %v2224, %v2223
    %v2238 = vpack.c.b16 %v2226, %v2225
    %v2239 = vpack.c.b16 %v2228, %v2227
    %v2240 = vpack.c.b16 %v2230, %v2229
    %v2241 = vpack.c.b16 %v2232, %v2231
    %v2242 = vpack.c.b16 %v2234, %v2233
    %2251 = vmatpush.bf16.msra.mxu0 %v2242
    %2252 = vmatpush.bf16.msra.mxu0 %v2241
    %2253 = vmatpush.bf16.msra.mxu0 %v2240
    %2254 = vmatpush.bf16.msra.mxu0 %v2239
    %2255 = vmatpush.bf16.msra.mxu0 %v2238
    %2256 = vmatpush.bf16.msra.mxu0 %v2237
    %2257 = vmatpush.bf16.msra.mxu0 %v2236
    %2258 = vmatpush.bf16.msra.mxu0 %v2235
    %2259 = vmatmul.bf16.gmra.mxu0 %v2186
    %v2260 = vpop.f32.mrf.mxu0
    %v2261 = vadd.f32 0.0, %v2260
    %v2262 = vpop.f32.mrf.mxu0
    %v2263 = vadd.f32 0.0, %v2262
    %2264 = vdwg.mxu0
    %v2265 = vadd.f32 %v2160, %v2261
    %v2266 = vadd.f32 %v2161, %v2263
    %s2267 = scalar_lea.vmem %s35, 8
    %v2268 = vld [vmem:[%s2267] sm:$0xf]
    %v2269 = vld [vmem:[%s2267 + $0x4] sm:$0xf]
    %v2272 = vunpack.c.l.b16 %v2268
    %v2273 = vunpack.c.l.b16 %v2269
    %v2274 = vpack.c.b16 %v2273, %v2272
    %v2276 = vsel %vm949, %v2274, 0
    %2278 = vmatpush.bf16.msra.mxu0 0
    %2279 = vmatpush.bf16.msra.mxu0 0
    %2280 = vmatpush.bf16.msra.mxu0 0
    %2281 = vmatpush.bf16.msra.mxu0 0
    %2282 = vmatpush.bf16.msra.mxu0 0
    %2283 = vmatpush.bf16.msra.mxu0 0
    %2284 = vmatpush.bf16.msra.mxu0 0
    %2285 = vmatpush.bf16.msra.mxu0 %v2076
    %2286 = vmatmul.bf16.gmra.mxu0 %v2276
    %v2287 = vpop.f32.mrf.mxu0
    %v2288 = vadd.f32 0.0, %v2287
    %v2289 = vpop.f32.mrf.mxu0
    %v2290 = vadd.f32 0.0, %v2289
    %2291 = vdwg.mxu0
    %v2292 = vpack.c.bf16 %v2290, %v2288
    %s2293 = scalar_lea.vmem %s43, 128
    %v2294 = vld [vmem:[%s2293] sm:$0xf]
    %v2295 = vld [vmem:[%s2293 + $0x4] sm:$0xf]
    %v2296 = vld [vmem:[%s2293 + $0x8] sm:$0xf]
    %v2297 = vld [vmem:[%s2293 + $0xc] sm:$0xf]
    %v2298 = vld [vmem:[%s2293 + $0x10] sm:$0xf]
    %v2299 = vld [vmem:[%s2293 + $0x14] sm:$0xf]
    %v2300 = vld [vmem:[%s2293 + $0x18] sm:$0xf]
    %v2301 = vld [vmem:[%s2293 + $0x1c] sm:$0xf]
    %v2302 = vld [vmem:[%s2293 + $0x20] sm:$0xf]
    %v2303 = vld [vmem:[%s2293 + $0x24] sm:$0xf]
    %v2304 = vld [vmem:[%s2293 + $0x28] sm:$0xf]
    %v2305 = vld [vmem:[%s2293 + $0x2c] sm:$0xf]
    %v2306 = vld [vmem:[%s2293 + $0x30] sm:$0xf]
    %v2307 = vld [vmem:[%s2293 + $0x34] sm:$0xf]
    %v2308 = vld [vmem:[%s2293 + $0x38] sm:$0xf]
    %v2309 = vld [vmem:[%s2293 + $0x3c] sm:$0xf]
    %v2326 = vunpack.c.l.b16 %v2294
    %v2327 = vunpack.c.l.b16 %v2295
    %v2328 = vunpack.c.l.b16 %v2296
    %v2329 = vunpack.c.l.b16 %v2297
    %v2330 = vunpack.c.l.b16 %v2298
    %v2331 = vunpack.c.l.b16 %v2299
    %v2332 = vunpack.c.l.b16 %v2300
    %v2333 = vunpack.c.l.b16 %v2301
    %v2334 = vunpack.c.l.b16 %v2302
    %v2335 = vunpack.c.l.b16 %v2303
    %v2336 = vunpack.c.l.b16 %v2304
    %v2337 = vunpack.c.l.b16 %v2305
    %v2338 = vunpack.c.l.b16 %v2306
    %v2339 = vunpack.c.l.b16 %v2307
    %v2340 = vunpack.c.l.b16 %v2308
    %v2341 = vunpack.c.l.b16 %v2309
    %v2342 = vpack.c.b16 %v2327, %v2326
    %v2343 = vpack.c.b16 %v2329, %v2328
    %v2344 = vpack.c.b16 %v2331, %v2330
    %v2345 = vpack.c.b16 %v2333, %v2332
    %v2346 = vpack.c.b16 %v2335, %v2334
    %v2347 = vpack.c.b16 %v2337, %v2336
    %v2348 = vpack.c.b16 %v2339, %v2338
    %v2349 = vpack.c.b16 %v2341, %v2340
    %2358 = vmatpush.bf16.msra.mxu0 %v2349
    %2359 = vmatpush.bf16.msra.mxu0 %v2348
    %2360 = vmatpush.bf16.msra.mxu0 %v2347
    %2361 = vmatpush.bf16.msra.mxu0 %v2346
    %2362 = vmatpush.bf16.msra.mxu0 %v2345
    %2363 = vmatpush.bf16.msra.mxu0 %v2344
    %2364 = vmatpush.bf16.msra.mxu0 %v2343
    %2365 = vmatpush.bf16.msra.mxu0 %v2342
    %2366 = vmatmul.bf16.gmra.mxu0 %v2292
    %v2367 = vpop.f32.mrf.mxu0
    %v2368 = vadd.f32 0.0, %v2367
    %v2369 = vpop.f32.mrf.mxu0
    %v2370 = vadd.f32 0.0, %v2369
    %2371 = vdwg.mxu0
    %v2372 = vadd.f32 %v2265, %v2368
    %v2373 = vadd.f32 %v2266, %v2370
    %v2374 = vpack.c.bf16 %v852, %v852
    %v2375 = vld [vmem:[#allocation10] sm:$0x1]
    %s2376 = scalar_lea.vmem %s47, 32
    %v2377 = vld [vmem:[%s2376] sm:$0xf]
    %v2378 = vld [vmem:[%s2376 + $0x4] sm:$0xf]
    %v2379 = vld [vmem:[%s2376 + $0x8] sm:$0xf]
    %v2380 = vld [vmem:[%s2376 + $0xc] sm:$0xf]
    %v2381 = vld [vmem:[%s2376 + $0x10] sm:$0xf]
    %v2382 = vld [vmem:[%s2376 + $0x14] sm:$0xf]
    %v2383 = vld [vmem:[%s2376 + $0x18] sm:$0xf]
    %v2384 = vld [vmem:[%s2376 + $0x1c] sm:$0xf]
    %v2393 = vunpack.c.l.b16 %v2377
    %v2394 = vunpack.c.l.b16 %v2378
    %v2395 = vunpack.c.l.b16 %v2379
    %v2396 = vunpack.c.l.b16 %v2380
    %v2397 = vunpack.c.l.b16 %v2381
    %v2398 = vunpack.c.l.b16 %v2382
    %v2399 = vunpack.c.l.b16 %v2383
    %v2400 = vunpack.c.l.b16 %v2384
    %v2401 = vpack.c.b16 %v2394, %v2393
    %v2402 = vpack.c.b16 %v2396, %v2395
    %v2403 = vpack.c.b16 %v2398, %v2397
    %v2404 = vpack.c.b16 %v2400, %v2399
    %v2410 = vsel %vm917, %v2374, 0
    %2412 = vmatpush.bf16.msra.mxu0 0
    %2413 = vmatpush.bf16.msra.mxu0 0
    %2414 = vmatpush.bf16.msra.mxu0 0
    %2415 = vmatpush.bf16.msra.mxu0 0
    %2416 = vmatpush.bf16.msra.mxu0 %v2404
    %2417 = vmatpush.bf16.msra.mxu0 %v2403
    %2418 = vmatpush.bf16.msra.mxu0 %v2402
    %2419 = vmatpush.bf16.msra.mxu0 %v2401
    %2420 = vmatmul.bf16.gmra.mxu0 %v2410
    %v2421 = vpop.f32.mrf.mxu0
    %v2422 = vadd.f32 0.0, %v2421
    %v2423 = vpop.f32.mrf.mxu0
    %2424 = vdwg.mxu0
    %v2426 = vperm.slane %v2375, 0
    %v2428 = vadd.f32 %v2426, %v2422
    %v2429 = vld [vmem:[%s37] sm:$0xf]
    %v2431 = vsel %vm862, %v2429, 0
    %v2433 = vsel %vm866, %v2374, 0
    %2435 = vmatpush.bf16.msra.mxu0 0
    %2436 = vmatpush.bf16.msra.mxu0 0
    %2437 = vmatpush.bf16.msra.mxu0 0
    %2438 = vmatpush.bf16.msra.mxu0 0
    %2439 = vmatpush.bf16.msra.mxu0 0
    %2440 = vmatpush.bf16.msra.mxu0 0
    %2441 = vmatpush.bf16.msra.mxu0 0
    %2442 = vmatpush.bf16.msra.mxu0 %v2433
    %2443 = vmatmul.bf16.gmra.mxu0 %v2431
    %v2444 = vpop.f32.mrf.mxu0
    %v2445 = vadd.f32 0.0, %v2444
    %v2446 = vpop.f32.mrf.mxu0
    %2447 = vdwg.mxu0
    %v2448 = vpack.c.bf16 %v2445, %v2445
    %v2449 = vld [vmem:[%s47] sm:$0xf]
    %v2450 = vld [vmem:[%s47 + $0x4] sm:$0xf]
    %v2451 = vld [vmem:[%s47 + $0x8] sm:$0xf]
    %v2452 = vld [vmem:[%s47 + $0xc] sm:$0xf]
    %v2453 = vld [vmem:[%s47 + $0x10] sm:$0xf]
    %v2454 = vld [vmem:[%s47 + $0x14] sm:$0xf]
    %v2455 = vld [vmem:[%s47 + $0x18] sm:$0xf]
    %v2456 = vld [vmem:[%s47 + $0x1c] sm:$0xf]
    %v2465 = vunpack.c.l.b16 %v2449
    %v2466 = vunpack.c.l.b16 %v2450
    %v2467 = vunpack.c.l.b16 %v2451
    %v2468 = vunpack.c.l.b16 %v2452
    %v2469 = vunpack.c.l.b16 %v2453
    %v2470 = vunpack.c.l.b16 %v2454
    %v2471 = vunpack.c.l.b16 %v2455
    %v2472 = vunpack.c.l.b16 %v2456
    %v2473 = vpack.c.b16 %v2466, %v2465
    %v2474 = vpack.c.b16 %v2468, %v2467
    %v2475 = vpack.c.b16 %v2470, %v2469
    %v2476 = vpack.c.b16 %v2472, %v2471
    %v2482 = vsel %vm917, %v2448, 0
    %2484 = vmatpush.bf16.msra.mxu0 0
    %2485 = vmatpush.bf16.msra.mxu0 0
    %2486 = vmatpush.bf16.msra.mxu0 0
    %2487 = vmatpush.bf16.msra.mxu0 0
    %2488 = vmatpush.bf16.msra.mxu0 %v2476
    %2489 = vmatpush.bf16.msra.mxu0 %v2475
    %2490 = vmatpush.bf16.msra.mxu0 %v2474
    %2491 = vmatpush.bf16.msra.mxu0 %v2473
    %2492 = vmatmul.bf16.gmra.mxu0 %v2482
    %v2493 = vpop.f32.mrf.mxu0
    %v2494 = vadd.f32 0.0, %v2493
    %v2495 = vpop.f32.mrf.mxu0
    %2496 = vdwg.mxu0
    %v2497 = vadd.f32 %v2428, %v2494
    %s2498 = scalar_lea.vmem %s37, 4
    %v2499 = vld [vmem:[%s2498] sm:$0xf]
    %v2501 = vsel %vm862, %v2499, 0
    %2503 = vmatpush.bf16.msra.mxu0 0
    %2504 = vmatpush.bf16.msra.mxu0 0
    %2505 = vmatpush.bf16.msra.mxu0 0
    %2506 = vmatpush.bf16.msra.mxu0 0
    %2507 = vmatpush.bf16.msra.mxu0 0
    %2508 = vmatpush.bf16.msra.mxu0 0
    %2509 = vmatpush.bf16.msra.mxu0 0
    %2510 = vmatpush.bf16.msra.mxu0 %v2433
    %2511 = vmatmul.bf16.gmra.mxu0 %v2501
    %v2512 = vpop.f32.mrf.mxu0
    %v2513 = vadd.f32 0.0, %v2512
    %v2514 = vpop.f32.mrf.mxu0
    %2515 = vdwg.mxu0
    %v2516 = vpack.c.bf16 %v2513, %v2513
    %s2517 = scalar_lea.vmem %s47, 64
    %v2518 = vld [vmem:[%s2517] sm:$0xf]
    %v2519 = vld [vmem:[%s2517 + $0x4] sm:$0xf]
    %v2520 = vld [vmem:[%s2517 + $0x8] sm:$0xf]
    %v2521 = vld [vmem:[%s2517 + $0xc] sm:$0xf]
    %v2522 = vld [vmem:[%s2517 + $0x10] sm:$0xf]
    %v2523 = vld [vmem:[%s2517 + $0x14] sm:$0xf]
    %v2524 = vld [vmem:[%s2517 + $0x18] sm:$0xf]
    %v2525 = vld [vmem:[%s2517 + $0x1c] sm:$0xf]
    %v2534 = vunpack.c.l.b16 %v2518
    %v2535 = vunpack.c.l.b16 %v2519
    %v2536 = vunpack.c.l.b16 %v2520
    %v2537 = vunpack.c.l.b16 %v2521
    %v2538 = vunpack.c.l.b16 %v2522
    %v2539 = vunpack.c.l.b16 %v2523
    %v2540 = vunpack.c.l.b16 %v2524
    %v2541 = vunpack.c.l.b16 %v2525
    %v2542 = vpack.c.b16 %v2535, %v2534
    %v2543 = vpack.c.b16 %v2537, %v2536
    %v2544 = vpack.c.b16 %v2539, %v2538
    %v2545 = vpack.c.b16 %v2541, %v2540
    %v2551 = vsel %vm917, %v2516, 0
    %2553 = vmatpush.bf16.msra.mxu0 0
    %2554 = vmatpush.bf16.msra.mxu0 0
    %2555 = vmatpush.bf16.msra.mxu0 0
    %2556 = vmatpush.bf16.msra.mxu0 0
    %2557 = vmatpush.bf16.msra.mxu0 %v2545
    %2558 = vmatpush.bf16.msra.mxu0 %v2544
    %2559 = vmatpush.bf16.msra.mxu0 %v2543
    %2560 = vmatpush.bf16.msra.mxu0 %v2542
    %2561 = vmatmul.bf16.gmra.mxu0 %v2551
    %v2562 = vpop.f32.mrf.mxu0
    %v2563 = vadd.f32 0.0, %v2562
    %v2564 = vpop.f32.mrf.mxu0
    %2565 = vdwg.mxu0
    %v2566 = vadd.f32 %v2497, %v2563
    %v2567 = vpack.c.bf16 %v2070, %v2068
    %v2568 = vpack.c.bf16 %v2071, %v2069
    %v2569 = vpack.c.bf16 %v2074, %v2072
    %v2570 = vpack.c.bf16 %v2075, %v2073
    %s2571 = scalar_lea.vmem [#allocation12], 256
    %v2572 = vld [vmem:[%s2571] sm:$0xff]
    %v2573 = vld [vmem:[%s2571 + $0x8] sm:$0xff]
    %v2574 = vld [vmem:[%s2571 + $0x10] sm:$0xff]
    %v2575 = vld [vmem:[%s2571 + $0x18] sm:$0xff]
    %v2576 = vld [vmem:[%s2571 + $0x20] sm:$0xff]
    %v2577 = vld [vmem:[%s2571 + $0x28] sm:$0xff]
    %v2578 = vld [vmem:[%s2571 + $0x30] sm:$0xff]
    %v2579 = vld [vmem:[%s2571 + $0x38] sm:$0xff]
    %v2580 = vld [vmem:[%s2571 + $0x40] sm:$0xff]
    %v2581 = vld [vmem:[%s2571 + $0x48] sm:$0xff]
    %v2582 = vld [vmem:[%s2571 + $0x50] sm:$0xff]
    %v2583 = vld [vmem:[%s2571 + $0x58] sm:$0xff]
    %v2584 = vld [vmem:[%s2571 + $0x60] sm:$0xff]
    %v2585 = vld [vmem:[%s2571 + $0x68] sm:$0xff]
    %v2586 = vld [vmem:[%s2571 + $0x70] sm:$0xff]
    %v2587 = vld [vmem:[%s2571 + $0x78] sm:$0xff]
    %v2588 = vld [vmem:[%s2571 + $0x80] sm:$0xff]
    %v2589 = vld [vmem:[%s2571 + $0x88] sm:$0xff]
    %v2590 = vld [vmem:[%s2571 + $0x90] sm:$0xff]
    %v2591 = vld [vmem:[%s2571 + $0x98] sm:$0xff]
    %v2592 = vld [vmem:[%s2571 + $0xa0] sm:$0xff]
    %v2593 = vld [vmem:[%s2571 + $0xa8] sm:$0xff]
    %v2594 = vld [vmem:[%s2571 + $0xb0] sm:$0xff]
    %v2595 = vld [vmem:[%s2571 + $0xb8] sm:$0xff]
    %v2596 = vld [vmem:[%s2571 + $0xc0] sm:$0xff]
    %v2597 = vld [vmem:[%s2571 + $0xc8] sm:$0xff]
    %v2598 = vld [vmem:[%s2571 + $0xd0] sm:$0xff]
    %v2599 = vld [vmem:[%s2571 + $0xd8] sm:$0xff]
    %v2600 = vld [vmem:[%s2571 + $0xe0] sm:$0xff]
    %v2601 = vld [vmem:[%s2571 + $0xe8] sm:$0xff]
    %v2602 = vld [vmem:[%s2571 + $0xf0] sm:$0xff]
    %v2603 = vld [vmem:[%s2571 + $0xf8] sm:$0xff]
    %2604 = vmatpush.bf16.msra.mxu0 0
    %2605 = vmatpush.bf16.msra.mxu0 0
    %2606 = vmatpush.bf16.msra.mxu0 0
    %2607 = vmatpush.bf16.msra.mxu0 0
    %2608 = vmatpush.bf16.msra.mxu0 0
    %2609 = vmatpush.bf16.msra.mxu0 0
    %2610 = vmatpush.bf16.msra.mxu0 %v2569
    %2611 = vmatpush.bf16.msra.mxu0 %v2567
    %2612 = vmatmul.bf16.gmra.mxu0 %v1413
    %v2613 = vpop.f32.mrf.mxu0
    %v2614 = vadd.f32 0.0, %v2613
    %v2615 = vpop.f32.mrf.mxu0
    %v2616 = vadd.f32 0.0, %v2615
    %2617 = vmatmul.bf16.gmra.mxu0 %v1416
    %v2618 = vpop.f32.mrf.mxu0
    %v2619 = vadd.f32 0.0, %v2618
    %v2620 = vpop.f32.mrf.mxu0
    %v2621 = vadd.f32 0.0, %v2620
    %2622 = vdwg.mxu0
    %2623 = vmatpush.bf16.msra.mxu0 0
    %2624 = vmatpush.bf16.msra.mxu0 0
    %2625 = vmatpush.bf16.msra.mxu0 0
    %2626 = vmatpush.bf16.msra.mxu0 0
    %2627 = vmatpush.bf16.msra.mxu0 0
    %2628 = vmatpush.bf16.msra.mxu0 0
    %2629 = vmatpush.bf16.msra.mxu0 %v2570
    %2630 = vmatpush.bf16.msra.mxu0 %v2568
    %2631 = vmatmul.bf16.gmra.mxu0 %v1413
    %v2632 = vpop.f32.mrf.mxu0
    %v2633 = vadd.f32 0.0, %v2632
    %v2634 = vpop.f32.mrf.mxu0
    %v2635 = vadd.f32 0.0, %v2634
    %2636 = vmatmul.bf16.gmra.mxu0 %v1416
    %v2637 = vpop.f32.mrf.mxu0
    %v2638 = vadd.f32 0.0, %v2637
    %v2639 = vpop.f32.mrf.mxu0
    %v2640 = vadd.f32 0.0, %v2639
    %2641 = vdwg.mxu0
    %v2642 = vpack.c.bf16 %v2616, %v2614
    %v2643 = vpack.c.bf16 %v2635, %v2633
    %v2644 = vpack.c.bf16 %v2621, %v2619
    %v2645 = vpack.c.bf16 %v2640, %v2638
    %v2646 = vld [vmem:[#allocation12] sm:$0xff]
    %v2647 = vld [vmem:[#allocation12 + $0x8] sm:$0xff]
    %v2648 = vld [vmem:[#allocation12 + $0x10] sm:$0xff]
    %v2649 = vld [vmem:[#allocation12 + $0x18] sm:$0xff]
    %v2650 = vld [vmem:[#allocation12 + $0x20] sm:$0xff]
    %v2651 = vld [vmem:[#allocation12 + $0x28] sm:$0xff]
    %v2652 = vld [vmem:[#allocation12 + $0x30] sm:$0xff]
    %v2653 = vld [vmem:[#allocation12 + $0x38] sm:$0xff]
    %v2654 = vld [vmem:[#allocation12 + $0x40] sm:$0xff]
    %v2655 = vld [vmem:[#allocation12 + $0x48] sm:$0xff]
    %v2656 = vld [vmem:[#allocation12 + $0x50] sm:$0xff]
    %v2657 = vld [vmem:[#allocation12 + $0x58] sm:$0xff]
    %v2658 = vld [vmem:[#allocation12 + $0x60] sm:$0xff]
    %v2659 = vld [vmem:[#allocation12 + $0x68] sm:$0xff]
    %v2660 = vld [vmem:[#allocation12 + $0x70] sm:$0xff]
    %v2661 = vld [vmem:[#allocation12 + $0x78] sm:$0xff]
    %v2662 = vld [vmem:[#allocation12 + $0x80] sm:$0xff]
    %v2663 = vld [vmem:[#allocation12 + $0x88] sm:$0xff]
    %v2664 = vld [vmem:[#allocation12 + $0x90] sm:$0xff]
    %v2665 = vld [vmem:[#allocation12 + $0x98] sm:$0xff]
    %v2666 = vld [vmem:[#allocation12 + $0xa0] sm:$0xff]
    %v2667 = vld [vmem:[#allocation12 + $0xa8] sm:$0xff]
    %v2668 = vld [vmem:[#allocation12 + $0xb0] sm:$0xff]
    %v2669 = vld [vmem:[#allocation12 + $0xb8] sm:$0xff]
    %v2670 = vld [vmem:[#allocation12 + $0xc0] sm:$0xff]
    %v2671 = vld [vmem:[#allocation12 + $0xc8] sm:$0xff]
    %v2672 = vld [vmem:[#allocation12 + $0xd0] sm:$0xff]
    %v2673 = vld [vmem:[#allocation12 + $0xd8] sm:$0xff]
    %v2674 = vld [vmem:[#allocation12 + $0xe0] sm:$0xff]
    %v2675 = vld [vmem:[#allocation12 + $0xe8] sm:$0xff]
    %v2676 = vld [vmem:[#allocation12 + $0xf0] sm:$0xff]
    %v2677 = vld [vmem:[#allocation12 + $0xf8] sm:$0xff]
    %v2710 = vunpack.c.l.b16 %v2646
    %v2711 = vunpack.c.h.b16 %v2646
    %v2712 = vunpack.c.l.b16 %v2647
    %v2713 = vunpack.c.h.b16 %v2647
    %v2714 = vunpack.c.l.b16 %v2648
    %v2715 = vunpack.c.h.b16 %v2648
    %v2716 = vunpack.c.l.b16 %v2649
    %v2717 = vunpack.c.h.b16 %v2649
    %v2718 = vunpack.c.l.b16 %v2650
    %v2719 = vunpack.c.h.b16 %v2650
    %v2720 = vunpack.c.l.b16 %v2651
    %v2721 = vunpack.c.h.b16 %v2651
    %v2722 = vunpack.c.l.b16 %v2652
    %v2723 = vunpack.c.h.b16 %v2652
    %v2724 = vunpack.c.l.b16 %v2653
    %v2725 = vunpack.c.h.b16 %v2653
    %v2726 = vunpack.c.l.b16 %v2654
    %v2727 = vunpack.c.h.b16 %v2654
    %v2728 = vunpack.c.l.b16 %v2655
    %v2729 = vunpack.c.h.b16 %v2655
    %v2730 = vunpack.c.l.b16 %v2656
    %v2731 = vunpack.c.h.b16 %v2656
    %v2732 = vunpack.c.l.b16 %v2657
    %v2733 = vunpack.c.h.b16 %v2657
    %v2734 = vunpack.c.l.b16 %v2658
    %v2735 = vunpack.c.h.b16 %v2658
    %v2736 = vunpack.c.l.b16 %v2659
    %v2737 = vunpack.c.h.b16 %v2659
    %v2738 = vunpack.c.l.b16 %v2660
    %v2739 = vunpack.c.h.b16 %v2660
    %v2740 = vunpack.c.l.b16 %v2661
    %v2741 = vunpack.c.h.b16 %v2661
    %v2742 = vunpack.c.l.b16 %v2662
    %v2743 = vunpack.c.h.b16 %v2662
    %v2744 = vunpack.c.l.b16 %v2663
    %v2745 = vunpack.c.h.b16 %v2663
    %v2746 = vunpack.c.l.b16 %v2664
    %v2747 = vunpack.c.h.b16 %v2664
    %v2748 = vunpack.c.l.b16 %v2665
    %v2749 = vunpack.c.h.b16 %v2665
    %v2750 = vunpack.c.l.b16 %v2666
    %v2751 = vunpack.c.h.b16 %v2666
    %v2752 = vunpack.c.l.b16 %v2667
    %v2753 = vunpack.c.h.b16 %v2667
    %v2754 = vunpack.c.l.b16 %v2668
    %v2755 = vunpack.c.h.b16 %v2668
    %v2756 = vunpack.c.l.b16 %v2669
    %v2757 = vunpack.c.h.b16 %v2669
    %v2758 = vunpack.c.l.b16 %v2670
    %v2759 = vunpack.c.h.b16 %v2670
    %v2760 = vunpack.c.l.b16 %v2671
    %v2761 = vunpack.c.h.b16 %v2671
    %v2762 = vunpack.c.l.b16 %v2672
    %v2763 = vunpack.c.h.b16 %v2672
    %v2764 = vunpack.c.l.b16 %v2673
    %v2765 = vunpack.c.h.b16 %v2673
    %v2766 = vunpack.c.l.b16 %v2674
    %v2767 = vunpack.c.h.b16 %v2674
    %v2768 = vunpack.c.l.b16 %v2675
    %v2769 = vunpack.c.h.b16 %v2675
    %v2770 = vunpack.c.l.b16 %v2676
    %v2771 = vunpack.c.h.b16 %v2676
    %v2772 = vunpack.c.l.b16 %v2677
    %v2773 = vunpack.c.h.b16 %v2677
    %v2774 = vpack.c.b16 %v2712, %v2710
    %v2775 = vpack.c.b16 %v2713, %v2711
    %v2776 = vpack.c.b16 %v2716, %v2714
    %v2777 = vpack.c.b16 %v2717, %v2715
    %v2778 = vpack.c.b16 %v2720, %v2718
    %v2779 = vpack.c.b16 %v2721, %v2719
    %v2780 = vpack.c.b16 %v2724, %v2722
    %v2781 = vpack.c.b16 %v2725, %v2723
    %v2782 = vpack.c.b16 %v2728, %v2726
    %v2783 = vpack.c.b16 %v2729, %v2727
    %v2784 = vpack.c.b16 %v2732, %v2730
    %v2785 = vpack.c.b16 %v2733, %v2731
    %v2786 = vpack.c.b16 %v2736, %v2734
    %v2787 = vpack.c.b16 %v2737, %v2735
    %v2788 = vpack.c.b16 %v2740, %v2738
    %v2789 = vpack.c.b16 %v2741, %v2739
    %v2790 = vpack.c.b16 %v2744, %v2742
    %v2791 = vpack.c.b16 %v2745, %v2743
    %v2792 = vpack.c.b16 %v2748, %v2746
    %v2793 = vpack.c.b16 %v2749, %v2747
    %v2794 = vpack.c.b16 %v2752, %v2750
    %v2795 = vpack.c.b16 %v2753, %v2751
    %v2796 = vpack.c.b16 %v2756, %v2754
    %v2797 = vpack.c.b16 %v2757, %v2755
    %v2798 = vpack.c.b16 %v2760, %v2758
    %v2799 = vpack.c.b16 %v2761, %v2759
    %v2800 = vpack.c.b16 %v2764, %v2762
    %v2801 = vpack.c.b16 %v2765, %v2763
    %v2802 = vpack.c.b16 %v2768, %v2766
    %v2803 = vpack.c.b16 %v2769, %v2767
    %v2804 = vpack.c.b16 %v2772, %v2770
    %v2805 = vpack.c.b16 %v2773, %v2771
    %2838 = vmatpush.bf16.msra.mxu0 %v2788
    %2839 = vmatpush.bf16.msra.mxu0 %v2786
    %2840 = vmatpush.bf16.msra.mxu0 %v2784
    %2841 = vmatpush.bf16.msra.mxu0 %v2782
    %2842 = vmatpush.bf16.msra.mxu0 %v2780
    %2843 = vmatpush.bf16.msra.mxu0 %v2778
    %2844 = vmatpush.bf16.msra.mxu0 %v2776
    %2845 = vmatpush.bf16.msra.mxu0 %v2774
    %2846 = vmatmul.bf16.gmra.mxu0 %v2642
    %v2847 = vpop.f32.mrf.mxu0
    %v2848 = vadd.f32 0.0, %v2847
    %v2849 = vpop.f32.mrf.mxu0
    %v2850 = vadd.f32 0.0, %v2849
    %2851 = vmatmul.bf16.gmra.mxu0 %v2644
    %v2852 = vpop.f32.mrf.mxu0
    %v2853 = vadd.f32 0.0, %v2852
    %v2854 = vpop.f32.mrf.mxu0
    %v2855 = vadd.f32 0.0, %v2854
    %2856 = vdwg.mxu0
    %2857 = vmatpush.bf16.msra.mxu0 %v2804
    %2858 = vmatpush.bf16.msra.mxu0 %v2802
    %2859 = vmatpush.bf16.msra.mxu0 %v2800
    %2860 = vmatpush.bf16.msra.mxu0 %v2798
    %2861 = vmatpush.bf16.msra.mxu0 %v2796
    %2862 = vmatpush.bf16.msra.mxu0 %v2794
    %2863 = vmatpush.bf16.msra.mxu0 %v2792
    %2864 = vmatpush.bf16.msra.mxu0 %v2790
    %2865 = vmatmul.bf16.gmra.mxu0 %v2643
    %v2866 = vpop.f32.mrf.mxu0
    %v2867 = vadd.f32 %v2848, %v2866
    %v2868 = vpop.f32.mrf.mxu0
    %v2869 = vadd.f32 %v2850, %v2868
    %2870 = vmatmul.bf16.gmra.mxu0 %v2645
    %v2871 = vpop.f32.mrf.mxu0
    %v2872 = vadd.f32 %v2853, %v2871
    %v2873 = vpop.f32.mrf.mxu0
    %v2874 = vadd.f32 %v2855, %v2873
    %2875 = vdwg.mxu0
    %2876 = vmatpush.bf16.msra.mxu0 %v2789
    %2877 = vmatpush.bf16.msra.mxu0 %v2787
    %2878 = vmatpush.bf16.msra.mxu0 %v2785
    %2879 = vmatpush.bf16.msra.mxu0 %v2783
    %2880 = vmatpush.bf16.msra.mxu0 %v2781
    %2881 = vmatpush.bf16.msra.mxu0 %v2779
    %2882 = vmatpush.bf16.msra.mxu0 %v2777
    %2883 = vmatpush.bf16.msra.mxu0 %v2775
    %2884 = vmatmul.bf16.gmra.mxu0 %v2642
    %v2885 = vpop.f32.mrf.mxu0
    %v2886 = vadd.f32 0.0, %v2885
    %v2887 = vpop.f32.mrf.mxu0
    %v2888 = vadd.f32 0.0, %v2887
    %2889 = vmatmul.bf16.gmra.mxu0 %v2644
    %v2890 = vpop.f32.mrf.mxu0
    %v2891 = vadd.f32 0.0, %v2890
    %v2892 = vpop.f32.mrf.mxu0
    %v2893 = vadd.f32 0.0, %v2892
    %2894 = vdwg.mxu0
    %2895 = vmatpush.bf16.msra.mxu0 %v2805
    %2896 = vmatpush.bf16.msra.mxu0 %v2803
    %2897 = vmatpush.bf16.msra.mxu0 %v2801
    %2898 = vmatpush.bf16.msra.mxu0 %v2799
    %2899 = vmatpush.bf16.msra.mxu0 %v2797
    %2900 = vmatpush.bf16.msra.mxu0 %v2795
    %2901 = vmatpush.bf16.msra.mxu0 %v2793
    %2902 = vmatpush.bf16.msra.mxu0 %v2791
    %2903 = vmatmul.bf16.gmra.mxu0 %v2643
    %v2904 = vpop.f32.mrf.mxu0
    %v2905 = vadd.f32 %v2886, %v2904
    %v2906 = vpop.f32.mrf.mxu0
    %v2907 = vadd.f32 %v2888, %v2906
    %2908 = vmatmul.bf16.gmra.mxu0 %v2645
    %v2909 = vpop.f32.mrf.mxu0
    %v2910 = vadd.f32 %v2891, %v2909
    %v2911 = vpop.f32.mrf.mxu0
    %v2912 = vadd.f32 %v2893, %v2911
    %2913 = vdwg.mxu0
    %v2946 = vunpack.c.l.b16 %v2572
    %v2947 = vunpack.c.h.b16 %v2572
    %v2948 = vunpack.c.l.b16 %v2573
    %v2949 = vunpack.c.h.b16 %v2573
    %v2950 = vunpack.c.l.b16 %v2574
    %v2951 = vunpack.c.h.b16 %v2574
    %v2952 = vunpack.c.l.b16 %v2575
    %v2953 = vunpack.c.h.b16 %v2575
    %v2954 = vunpack.c.l.b16 %v2576
    %v2955 = vunpack.c.h.b16 %v2576
    %v2956 = vunpack.c.l.b16 %v2577
    %v2957 = vunpack.c.h.b16 %v2577
    %v2958 = vunpack.c.l.b16 %v2578
    %v2959 = vunpack.c.h.b16 %v2578
    %v2960 = vunpack.c.l.b16 %v2579
    %v2961 = vunpack.c.h.b16 %v2579
    %v2962 = vunpack.c.l.b16 %v2580
    %v2963 = vunpack.c.h.b16 %v2580
    %v2964 = vunpack.c.l.b16 %v2581
    %v2965 = vunpack.c.h.b16 %v2581
    %v2966 = vunpack.c.l.b16 %v2582
    %v2967 = vunpack.c.h.b16 %v2582
    %v2968 = vunpack.c.l.b16 %v2583
    %v2969 = vunpack.c.h.b16 %v2583
    %v2970 = vunpack.c.l.b16 %v2584
    %v2971 = vunpack.c.h.b16 %v2584
    %v2972 = vunpack.c.l.b16 %v2585
    %v2973 = vunpack.c.h.b16 %v2585
    %v2974 = vunpack.c.l.b16 %v2586
    %v2975 = vunpack.c.h.b16 %v2586
    %v2976 = vunpack.c.l.b16 %v2587
    %v2977 = vunpack.c.h.b16 %v2587
    %v2978 = vunpack.c.l.b16 %v2588
    %v2979 = vunpack.c.h.b16 %v2588
    %v2980 = vunpack.c.l.b16 %v2589
    %v2981 = vunpack.c.h.b16 %v2589
    %v2982 = vunpack.c.l.b16 %v2590
    %v2983 = vunpack.c.h.b16 %v2590
    %v2984 = vunpack.c.l.b16 %v2591
    %v2985 = vunpack.c.h.b16 %v2591
    %v2986 = vunpack.c.l.b16 %v2592
    %v2987 = vunpack.c.h.b16 %v2592
    %v2988 = vunpack.c.l.b16 %v2593
    %v2989 = vunpack.c.h.b16 %v2593
    %v2990 = vunpack.c.l.b16 %v2594
    %v2991 = vunpack.c.h.b16 %v2594
    %v2992 = vunpack.c.l.b16 %v2595
    %v2993 = vunpack.c.h.b16 %v2595
    %v2994 = vunpack.c.l.b16 %v2596
    %v2995 = vunpack.c.h.b16 %v2596
    %v2996 = vunpack.c.l.b16 %v2597
    %v2997 = vunpack.c.h.b16 %v2597
    %v2998 = vunpack.c.l.b16 %v2598
    %v2999 = vunpack.c.h.b16 %v2598
    %v3000 = vunpack.c.l.b16 %v2599
    %v3001 = vunpack.c.h.b16 %v2599
    %v3002 = vunpack.c.l.b16 %v2600
    %v3003 = vunpack.c.h.b16 %v2600
    %v3004 = vunpack.c.l.b16 %v2601
    %v3005 = vunpack.c.h.b16 %v2601
    %v3006 = vunpack.c.l.b16 %v2602
    %v3007 = vunpack.c.h.b16 %v2602
    %v3008 = vunpack.c.l.b16 %v2603
    %v3009 = vunpack.c.h.b16 %v2603
    %v3010 = vpack.c.b16 %v2948, %v2946
    %v3011 = vpack.c.b16 %v2949, %v2947
    %v3012 = vpack.c.b16 %v2952, %v2950
    %v3013 = vpack.c.b16 %v2953, %v2951
    %v3014 = vpack.c.b16 %v2956, %v2954
    %v3015 = vpack.c.b16 %v2957, %v2955
    %v3016 = vpack.c.b16 %v2960, %v2958
    %v3017 = vpack.c.b16 %v2961, %v2959
    %v3018 = vpack.c.b16 %v2964, %v2962
    %v3019 = vpack.c.b16 %v2965, %v2963
    %v3020 = vpack.c.b16 %v2968, %v2966
    %v3021 = vpack.c.b16 %v2969, %v2967
    %v3022 = vpack.c.b16 %v2972, %v2970
    %v3023 = vpack.c.b16 %v2973, %v2971
    %v3024 = vpack.c.b16 %v2976, %v2974
    %v3025 = vpack.c.b16 %v2977, %v2975
    %v3026 = vpack.c.b16 %v2980, %v2978
    %v3027 = vpack.c.b16 %v2981, %v2979
    %v3028 = vpack.c.b16 %v2984, %v2982
    %v3029 = vpack.c.b16 %v2985, %v2983
    %v3030 = vpack.c.b16 %v2988, %v2986
    %v3031 = vpack.c.b16 %v2989, %v2987
    %v3032 = vpack.c.b16 %v2992, %v2990
    %v3033 = vpack.c.b16 %v2993, %v2991
    %v3034 = vpack.c.b16 %v2996, %v2994
    %v3035 = vpack.c.b16 %v2997, %v2995
    %v3036 = vpack.c.b16 %v3000, %v2998
    %v3037 = vpack.c.b16 %v3001, %v2999
    %v3038 = vpack.c.b16 %v3004, %v3002
    %v3039 = vpack.c.b16 %v3005, %v3003
    %v3040 = vpack.c.b16 %v3008, %v3006
    %v3041 = vpack.c.b16 %v3009, %v3007
    %3074 = vmatpush.bf16.msra.mxu0 %v3024
    %3075 = vmatpush.bf16.msra.mxu0 %v3022
    %3076 = vmatpush.bf16.msra.mxu0 %v3020
    %3077 = vmatpush.bf16.msra.mxu0 %v3018
    %3078 = vmatpush.bf16.msra.mxu0 %v3016
    %3079 = vmatpush.bf16.msra.mxu0 %v3014
    %3080 = vmatpush.bf16.msra.mxu0 %v3012
    %3081 = vmatpush.bf16.msra.mxu0 %v3010
    %3082 = vmatmul.bf16.gmra.mxu0 %v2567
    %v3083 = vpop.f32.mrf.mxu0
    %v3084 = vadd.f32 %v2867, %v3083
    %v3085 = vpop.f32.mrf.mxu0
    %v3086 = vadd.f32 %v2869, %v3085
    %3087 = vmatmul.bf16.gmra.mxu0 %v2569
    %v3088 = vpop.f32.mrf.mxu0
    %v3089 = vadd.f32 %v2872, %v3088
    %v3090 = vpop.f32.mrf.mxu0
    %v3091 = vadd.f32 %v2874, %v3090
    %3092 = vdwg.mxu0
    %3093 = vmatpush.bf16.msra.mxu0 %v3040
    %3094 = vmatpush.bf16.msra.mxu0 %v3038
    %3095 = vmatpush.bf16.msra.mxu0 %v3036
    %3096 = vmatpush.bf16.msra.mxu0 %v3034
    %3097 = vmatpush.bf16.msra.mxu0 %v3032
    %3098 = vmatpush.bf16.msra.mxu0 %v3030
    %3099 = vmatpush.bf16.msra.mxu0 %v3028
    %3100 = vmatpush.bf16.msra.mxu0 %v3026
    %3101 = vmatmul.bf16.gmra.mxu0 %v2568
    %v3102 = vpop.f32.mrf.mxu0
    %v3103 = vadd.f32 %v3084, %v3102
    %v3104 = vpop.f32.mrf.mxu0
    %v3105 = vadd.f32 %v3086, %v3104
    %3106 = vmatmul.bf16.gmra.mxu0 %v2570
    %v3107 = vpop.f32.mrf.mxu0
    %v3108 = vadd.f32 %v3089, %v3107
    %v3109 = vpop.f32.mrf.mxu0
    %v3110 = vadd.f32 %v3091, %v3109
    %3111 = vdwg.mxu0
    %3112 = vmatpush.bf16.msra.mxu0 %v3025
    %3113 = vmatpush.bf16.msra.mxu0 %v3023
    %3114 = vmatpush.bf16.msra.mxu0 %v3021
    %3115 = vmatpush.bf16.msra.mxu0 %v3019
    %3116 = vmatpush.bf16.msra.mxu0 %v3017
    %3117 = vmatpush.bf16.msra.mxu0 %v3015
    %3118 = vmatpush.bf16.msra.mxu0 %v3013
    %3119 = vmatpush.bf16.msra.mxu0 %v3011
    %3120 = vmatmul.bf16.gmra.mxu0 %v2567
    %v3121 = vpop.f32.mrf.mxu0
    %v3122 = vadd.f32 %v2905, %v3121
    %v3123 = vpop.f32.mrf.mxu0
    %v3124 = vadd.f32 %v2907, %v3123
    %3125 = vmatmul.bf16.gmra.mxu0 %v2569
    %v3126 = vpop.f32.mrf.mxu0
    %v3127 = vadd.f32 %v2910, %v3126
    %v3128 = vpop.f32.mrf.mxu0
    %v3129 = vadd.f32 %v2912, %v3128
    %3130 = vdwg.mxu0
    %3131 = vmatpush.bf16.msra.mxu0 %v3041
    %3132 = vmatpush.bf16.msra.mxu0 %v3039
    %3133 = vmatpush.bf16.msra.mxu0 %v3037
    %3134 = vmatpush.bf16.msra.mxu0 %v3035
    %3135 = vmatpush.bf16.msra.mxu0 %v3033
    %3136 = vmatpush.bf16.msra.mxu0 %v3031
    %3137 = vmatpush.bf16.msra.mxu0 %v3029
    %3138 = vmatpush.bf16.msra.mxu0 %v3027
    %3139 = vmatmul.bf16.gmra.mxu0 %v2568
    %v3140 = vpop.f32.mrf.mxu0
    %v3141 = vadd.f32 %v3122, %v3140
    %v3142 = vpop.f32.mrf.mxu0
    %v3143 = vadd.f32 %v3124, %v3142
    %3144 = vmatmul.bf16.gmra.mxu0 %v2570
    %v3145 = vpop.f32.mrf.mxu0
    %v3146 = vadd.f32 %v3127, %v3145
    %v3147 = vpop.f32.mrf.mxu0
    %v3148 = vadd.f32 %v3129, %v3147
    %3149 = vdwg.mxu0
    %3150 = vmatpush.bf16.msra.mxu0 0
    %3151 = vmatpush.bf16.msra.mxu0 0
    %3152 = vmatpush.bf16.msra.mxu0 0
    %3153 = vmatpush.bf16.msra.mxu0 0
    %3154 = vmatpush.bf16.msra.mxu0 0
    %3155 = vmatpush.bf16.msra.mxu0 0
    %3156 = vmatpush.bf16.msra.mxu0 %v2569
    %3157 = vmatpush.bf16.msra.mxu0 %v2567
    %3158 = vmatmul.bf16.gmra.mxu0 %v1752
    %v3159 = vpop.f32.mrf.mxu0
    %v3160 = vadd.f32 0.0, %v3159
    %v3161 = vpop.f32.mrf.mxu0
    %v3162 = vadd.f32 0.0, %v3161
    %3163 = vmatmul.bf16.gmra.mxu0 %v1755
    %v3164 = vpop.f32.mrf.mxu0
    %v3165 = vadd.f32 0.0, %v3164
    %v3166 = vpop.f32.mrf.mxu0
    %v3167 = vadd.f32 0.0, %v3166
    %3168 = vdwg.mxu0
    %3169 = vmatpush.bf16.msra.mxu0 0
    %3170 = vmatpush.bf16.msra.mxu0 0
    %3171 = vmatpush.bf16.msra.mxu0 0
    %3172 = vmatpush.bf16.msra.mxu0 0
    %3173 = vmatpush.bf16.msra.mxu0 0
    %3174 = vmatpush.bf16.msra.mxu0 0
    %3175 = vmatpush.bf16.msra.mxu0 %v2570
    %3176 = vmatpush.bf16.msra.mxu0 %v2568
    %3177 = vmatmul.bf16.gmra.mxu0 %v1752
    %v3178 = vpop.f32.mrf.mxu0
    %v3179 = vadd.f32 0.0, %v3178
    %v3180 = vpop.f32.mrf.mxu0
    %v3181 = vadd.f32 0.0, %v3180
    %3182 = vmatmul.bf16.gmra.mxu0 %v1755
    %v3183 = vpop.f32.mrf.mxu0
    %v3184 = vadd.f32 0.0, %v3183
    %v3185 = vpop.f32.mrf.mxu0
    %v3186 = vadd.f32 0.0, %v3185
    %3187 = vdwg.mxu0
    %v3188 = vpack.c.bf16 %v3162, %v3160
    %v3189 = vpack.c.bf16 %v3181, %v3179
    %v3190 = vpack.c.bf16 %v3167, %v3165
    %v3191 = vpack.c.bf16 %v3186, %v3184
    %s3192 = scalar_lea.vmem [#allocation12], 512
    %v3193 = vld [vmem:[%s3192] sm:$0xff]
    %v3194 = vld [vmem:[%s3192 + $0x8] sm:$0xff]
    %v3195 = vld [vmem:[%s3192 + $0x10] sm:$0xff]
    %v3196 = vld [vmem:[%s3192 + $0x18] sm:$0xff]
    %v3197 = vld [vmem:[%s3192 + $0x20] sm:$0xff]
    %v3198 = vld [vmem:[%s3192 + $0x28] sm:$0xff]
    %v3199 = vld [vmem:[%s3192 + $0x30] sm:$0xff]
    %v3200 = vld [vmem:[%s3192 + $0x38] sm:$0xff]
    %v3201 = vld [vmem:[%s3192 + $0x40] sm:$0xff]
    %v3202 = vld [vmem:[%s3192 + $0x48] sm:$0xff]
    %v3203 = vld [vmem:[%s3192 + $0x50] sm:$0xff]
    %v3204 = vld [vmem:[%s3192 + $0x58] sm:$0xff]
    %v3205 = vld [vmem:[%s3192 + $0x60] sm:$0xff]
    %v3206 = vld [vmem:[%s3192 + $0x68] sm:$0xff]
    %v3207 = vld [vmem:[%s3192 + $0x70] sm:$0xff]
    %v3208 = vld [vmem:[%s3192 + $0x78] sm:$0xff]
    %v3209 = vld [vmem:[%s3192 + $0x80] sm:$0xff]
    %v3210 = vld [vmem:[%s3192 + $0x88] sm:$0xff]
    %v3211 = vld [vmem:[%s3192 + $0x90] sm:$0xff]
    %v3212 = vld [vmem:[%s3192 + $0x98] sm:$0xff]
    %v3213 = vld [vmem:[%s3192 + $0xa0] sm:$0xff]
    %v3214 = vld [vmem:[%s3192 + $0xa8] sm:$0xff]
    %v3215 = vld [vmem:[%s3192 + $0xb0] sm:$0xff]
    %v3216 = vld [vmem:[%s3192 + $0xb8] sm:$0xff]
    %v3217 = vld [vmem:[%s3192 + $0xc0] sm:$0xff]
    %v3218 = vld [vmem:[%s3192 + $0xc8] sm:$0xff]
    %v3219 = vld [vmem:[%s3192 + $0xd0] sm:$0xff]
    %v3220 = vld [vmem:[%s3192 + $0xd8] sm:$0xff]
    %v3221 = vld [vmem:[%s3192 + $0xe0] sm:$0xff]
    %v3222 = vld [vmem:[%s3192 + $0xe8] sm:$0xff]
    %v3223 = vld [vmem:[%s3192 + $0xf0] sm:$0xff]
    %v3224 = vld [vmem:[%s3192 + $0xf8] sm:$0xff]
    %v3257 = vunpack.c.l.b16 %v3193
    %v3258 = vunpack.c.h.b16 %v3193
    %v3259 = vunpack.c.l.b16 %v3194
    %v3260 = vunpack.c.h.b16 %v3194
    %v3261 = vunpack.c.l.b16 %v3195
    %v3262 = vunpack.c.h.b16 %v3195
    %v3263 = vunpack.c.l.b16 %v3196
    %v3264 = vunpack.c.h.b16 %v3196
    %v3265 = vunpack.c.l.b16 %v3197
    %v3266 = vunpack.c.h.b16 %v3197
    %v3267 = vunpack.c.l.b16 %v3198
    %v3268 = vunpack.c.h.b16 %v3198
    %v3269 = vunpack.c.l.b16 %v3199
    %v3270 = vunpack.c.h.b16 %v3199
    %v3271 = vunpack.c.l.b16 %v3200
    %v3272 = vunpack.c.h.b16 %v3200
    %v3273 = vunpack.c.l.b16 %v3201
    %v3274 = vunpack.c.h.b16 %v3201
    %v3275 = vunpack.c.l.b16 %v3202
    %v3276 = vunpack.c.h.b16 %v3202
    %v3277 = vunpack.c.l.b16 %v3203
    %v3278 = vunpack.c.h.b16 %v3203
    %v3279 = vunpack.c.l.b16 %v3204
    %v3280 = vunpack.c.h.b16 %v3204
    %v3281 = vunpack.c.l.b16 %v3205
    %v3282 = vunpack.c.h.b16 %v3205
    %v3283 = vunpack.c.l.b16 %v3206
    %v3284 = vunpack.c.h.b16 %v3206
    %v3285 = vunpack.c.l.b16 %v3207
    %v3286 = vunpack.c.h.b16 %v3207
    %v3287 = vunpack.c.l.b16 %v3208
    %v3288 = vunpack.c.h.b16 %v3208
    %v3289 = vunpack.c.l.b16 %v3209
    %v3290 = vunpack.c.h.b16 %v3209
    %v3291 = vunpack.c.l.b16 %v3210
    %v3292 = vunpack.c.h.b16 %v3210
    %v3293 = vunpack.c.l.b16 %v3211
    %v3294 = vunpack.c.h.b16 %v3211
    %v3295 = vunpack.c.l.b16 %v3212
    %v3296 = vunpack.c.h.b16 %v3212
    %v3297 = vunpack.c.l.b16 %v3213
    %v3298 = vunpack.c.h.b16 %v3213
    %v3299 = vunpack.c.l.b16 %v3214
    %v3300 = vunpack.c.h.b16 %v3214
    %v3301 = vunpack.c.l.b16 %v3215
    %v3302 = vunpack.c.h.b16 %v3215
    %v3303 = vunpack.c.l.b16 %v3216
    %v3304 = vunpack.c.h.b16 %v3216
    %v3305 = vunpack.c.l.b16 %v3217
    %v3306 = vunpack.c.h.b16 %v3217
    %v3307 = vunpack.c.l.b16 %v3218
    %v3308 = vunpack.c.h.b16 %v3218
    %v3309 = vunpack.c.l.b16 %v3219
    %v3310 = vunpack.c.h.b16 %v3219
    %v3311 = vunpack.c.l.b16 %v3220
    %v3312 = vunpack.c.h.b16 %v3220
    %v3313 = vunpack.c.l.b16 %v3221
    %v3314 = vunpack.c.h.b16 %v3221
    %v3315 = vunpack.c.l.b16 %v3222
    %v3316 = vunpack.c.h.b16 %v3222
    %v3317 = vunpack.c.l.b16 %v3223
    %v3318 = vunpack.c.h.b16 %v3223
    %v3319 = vunpack.c.l.b16 %v3224
    %v3320 = vunpack.c.h.b16 %v3224
    %v3321 = vpack.c.b16 %v3259, %v3257
    %v3322 = vpack.c.b16 %v3260, %v3258
    %v3323 = vpack.c.b16 %v3263, %v3261
    %v3324 = vpack.c.b16 %v3264, %v3262
    %v3325 = vpack.c.b16 %v3267, %v3265
    %v3326 = vpack.c.b16 %v3268, %v3266
    %v3327 = vpack.c.b16 %v3271, %v3269
    %v3328 = vpack.c.b16 %v3272, %v3270
    %v3329 = vpack.c.b16 %v3275, %v3273
    %v3330 = vpack.c.b16 %v3276, %v3274
    %v3331 = vpack.c.b16 %v3279, %v3277
    %v3332 = vpack.c.b16 %v3280, %v3278
    %v3333 = vpack.c.b16 %v3283, %v3281
    %v3334 = vpack.c.b16 %v3284, %v3282
    %v3335 = vpack.c.b16 %v3287, %v3285
    %v3336 = vpack.c.b16 %v3288, %v3286
    %v3337 = vpack.c.b16 %v3291, %v3289
    %v3338 = vpack.c.b16 %v3292, %v3290
    %v3339 = vpack.c.b16 %v3295, %v3293
    %v3340 = vpack.c.b16 %v3296, %v3294
    %v3341 = vpack.c.b16 %v3299, %v3297
    %v3342 = vpack.c.b16 %v3300, %v3298
    %v3343 = vpack.c.b16 %v3303, %v3301
    %v3344 = vpack.c.b16 %v3304, %v3302
    %v3345 = vpack.c.b16 %v3307, %v3305
    %v3346 = vpack.c.b16 %v3308, %v3306
    %v3347 = vpack.c.b16 %v3311, %v3309
    %v3348 = vpack.c.b16 %v3312, %v3310
    %v3349 = vpack.c.b16 %v3315, %v3313
    %v3350 = vpack.c.b16 %v3316, %v3314
    %v3351 = vpack.c.b16 %v3319, %v3317
    %v3352 = vpack.c.b16 %v3320, %v3318
    %3385 = vmatpush.bf16.msra.mxu0 %v3335
    %3386 = vmatpush.bf16.msra.mxu0 %v3333
    %3387 = vmatpush.bf16.msra.mxu0 %v3331
    %3388 = vmatpush.bf16.msra.mxu0 %v3329
    %3389 = vmatpush.bf16.msra.mxu0 %v3327
    %3390 = vmatpush.bf16.msra.mxu0 %v3325
    %3391 = vmatpush.bf16.msra.mxu0 %v3323
    %3392 = vmatpush.bf16.msra.mxu0 %v3321
    %3393 = vmatmul.bf16.gmra.mxu0 %v3188
    %v3394 = vpop.f32.mrf.mxu0
    %v3395 = vadd.f32 0.0, %v3394
    %v3396 = vpop.f32.mrf.mxu0
    %v3397 = vadd.f32 0.0, %v3396
    %3398 = vmatmul.bf16.gmra.mxu0 %v3190
    %v3399 = vpop.f32.mrf.mxu0
    %v3400 = vadd.f32 0.0, %v3399
    %v3401 = vpop.f32.mrf.mxu0
    %v3402 = vadd.f32 0.0, %v3401
    %3403 = vdwg.mxu0
    %3404 = vmatpush.bf16.msra.mxu0 %v3351
    %3405 = vmatpush.bf16.msra.mxu0 %v3349
    %3406 = vmatpush.bf16.msra.mxu0 %v3347
    %3407 = vmatpush.bf16.msra.mxu0 %v3345
    %3408 = vmatpush.bf16.msra.mxu0 %v3343
    %3409 = vmatpush.bf16.msra.mxu0 %v3341
    %3410 = vmatpush.bf16.msra.mxu0 %v3339
    %3411 = vmatpush.bf16.msra.mxu0 %v3337
    %3412 = vmatmul.bf16.gmra.mxu0 %v3189
    %v3413 = vpop.f32.mrf.mxu0
    %v3414 = vadd.f32 %v3395, %v3413
    %v3415 = vpop.f32.mrf.mxu0
    %v3416 = vadd.f32 %v3397, %v3415
    %3417 = vmatmul.bf16.gmra.mxu0 %v3191
    %v3418 = vpop.f32.mrf.mxu0
    %v3419 = vadd.f32 %v3400, %v3418
    %v3420 = vpop.f32.mrf.mxu0
    %v3421 = vadd.f32 %v3402, %v3420
    %3422 = vdwg.mxu0
    %3423 = vmatpush.bf16.msra.mxu0 %v3336
    %3424 = vmatpush.bf16.msra.mxu0 %v3334
    %3425 = vmatpush.bf16.msra.mxu0 %v3332
    %3426 = vmatpush.bf16.msra.mxu0 %v3330
    %3427 = vmatpush.bf16.msra.mxu0 %v3328
    %3428 = vmatpush.bf16.msra.mxu0 %v3326
    %3429 = vmatpush.bf16.msra.mxu0 %v3324
    %3430 = vmatpush.bf16.msra.mxu0 %v3322
    %3431 = vmatmul.bf16.gmra.mxu0 %v3188
    %v3432 = vpop.f32.mrf.mxu0
    %v3433 = vadd.f32 0.0, %v3432
    %v3434 = vpop.f32.mrf.mxu0
    %v3435 = vadd.f32 0.0, %v3434
    %3436 = vmatmul.bf16.gmra.mxu0 %v3190
    %v3437 = vpop.f32.mrf.mxu0
    %v3438 = vadd.f32 0.0, %v3437
    %v3439 = vpop.f32.mrf.mxu0
    %v3440 = vadd.f32 0.0, %v3439
    %3441 = vdwg.mxu0
    %3442 = vmatpush.bf16.msra.mxu0 %v3352
    %3443 = vmatpush.bf16.msra.mxu0 %v3350
    %3444 = vmatpush.bf16.msra.mxu0 %v3348
    %3445 = vmatpush.bf16.msra.mxu0 %v3346
    %3446 = vmatpush.bf16.msra.mxu0 %v3344
    %3447 = vmatpush.bf16.msra.mxu0 %v3342
    %3448 = vmatpush.bf16.msra.mxu0 %v3340
    %3449 = vmatpush.bf16.msra.mxu0 %v3338
    %3450 = vmatmul.bf16.gmra.mxu0 %v3189
    %v3451 = vpop.f32.mrf.mxu0
    %v3452 = vadd.f32 %v3433, %v3451
    %v3453 = vpop.f32.mrf.mxu0
    %v3454 = vadd.f32 %v3435, %v3453
    %3455 = vmatmul.bf16.gmra.mxu0 %v3191
    %v3456 = vpop.f32.mrf.mxu0
    %v3457 = vadd.f32 %v3438, %v3456
    %v3458 = vpop.f32.mrf.mxu0
    %v3459 = vadd.f32 %v3440, %v3458
    %3460 = vdwg.mxu0
    %v3461 = vadd.f32 %v3103, %v3414
    %v3462 = vadd.f32 %v3141, %v3452
    %v3463 = vadd.f32 %v3105, %v3416
    %v3464 = vadd.f32 %v3143, %v3454
    %v3465 = vadd.f32 %v3108, %v3419
    %v3466 = vadd.f32 %v3146, %v3457
    %v3467 = vadd.f32 %v3110, %v3421
    %v3468 = vadd.f32 %v3148, %v3459
    %v3469 = vpack.c.bf16 %v2373, %v2372
    %v3470 = vpack.c.bf16 %v2566, %v2566
    %v3471 = vld [vmem:[%s53] sm:$0xf]
    %v3472 = vld [vmem:[%s53 + $0x4] sm:$0xf]
    %v3473 = vld [vmem:[%s53 + $0x8] sm:$0xf]
    %v3474 = vld [vmem:[%s53 + $0xc] sm:$0xf]
    %v3479 = vunpack.c.l.b16 %v3471
    %v3480 = vunpack.c.l.b16 %v3472
    %v3481 = vunpack.c.l.b16 %v3473
    %v3482 = vunpack.c.l.b16 %v3474
    %v3483 = vpack.c.b16 %v3480, %v3479
    %v3484 = vpack.c.b16 %v3482, %v3481
    %v3486 = vsel %vm949, %v3483, 0
    %v3489 = vsel %vm949, %v3484, 0
    %3491 = vmatpush.bf16.msra.mxu0 0
    %3492 = vmatpush.bf16.msra.mxu0 0
    %3493 = vmatpush.bf16.msra.mxu0 0
    %3494 = vmatpush.bf16.msra.mxu0 0
    %3495 = vmatpush.bf16.msra.mxu0 0
    %3496 = vmatpush.bf16.msra.mxu0 0
    %3497 = vmatpush.bf16.msra.mxu0 0
    %3498 = vmatpush.bf16.msra.mxu0 %v3469
    %3499 = vmatmul.bf16.gmra.mxu0 %v3486
    %v3500 = vpop.f32.mrf.mxu0
    %v3501 = vadd.f32 0.0, %v3500
    %v3502 = vpop.f32.mrf.mxu0
    %v3503 = vadd.f32 0.0, %v3502
    %3504 = vmatmul.bf16.gmra.mxu0 %v3489
    %v3505 = vpop.f32.mrf.mxu0
    %v3506 = vadd.f32 0.0, %v3505
    %v3507 = vpop.f32.mrf.mxu0
    %v3508 = vadd.f32 0.0, %v3507
    %3509 = vdwg.mxu0
    %v3510 = vpack.c.bf16 %v3503, %v3501
    %v3511 = vpack.c.bf16 %v3508, %v3506
    %v3512 = vld [vmem:[%s55] sm:$0xff]
    %v3513 = vld [vmem:[%s55 + $0x8] sm:$0xff]
    %v3514 = vld [vmem:[%s55 + $0x10] sm:$0xff]
    %v3515 = vld [vmem:[%s55 + $0x18] sm:$0xff]
    %v3516 = vld [vmem:[%s55 + $0x20] sm:$0xff]
    %v3517 = vld [vmem:[%s55 + $0x28] sm:$0xff]
    %v3518 = vld [vmem:[%s55 + $0x30] sm:$0xff]
    %v3519 = vld [vmem:[%s55 + $0x38] sm:$0xff]
    %v3520 = vld [vmem:[%s55 + $0x40] sm:$0xff]
    %v3521 = vld [vmem:[%s55 + $0x48] sm:$0xff]
    %v3522 = vld [vmem:[%s55 + $0x50] sm:$0xff]
    %v3523 = vld [vmem:[%s55 + $0x58] sm:$0xff]
    %v3524 = vld [vmem:[%s55 + $0x60] sm:$0xff]
    %v3525 = vld [vmem:[%s55 + $0x68] sm:$0xff]
    %v3526 = vld [vmem:[%s55 + $0x70] sm:$0xff]
    %v3527 = vld [vmem:[%s55 + $0x78] sm:$0xff]
    %v3544 = vunpack.c.l.b16 %v3512
    %v3545 = vunpack.c.h.b16 %v3512
    %v3546 = vunpack.c.l.b16 %v3513
    %v3547 = vunpack.c.h.b16 %v3513
    %v3548 = vunpack.c.l.b16 %v3514
    %v3549 = vunpack.c.h.b16 %v3514
    %v3550 = vunpack.c.l.b16 %v3515
    %v3551 = vunpack.c.h.b16 %v3515
    %v3552 = vunpack.c.l.b16 %v3516
    %v3553 = vunpack.c.h.b16 %v3516
    %v3554 = vunpack.c.l.b16 %v3517
    %v3555 = vunpack.c.h.b16 %v3517
    %v3556 = vunpack.c.l.b16 %v3518
    %v3557 = vunpack.c.h.b16 %v3518
    %v3558 = vunpack.c.l.b16 %v3519
    %v3559 = vunpack.c.h.b16 %v3519
    %v3560 = vunpack.c.l.b16 %v3520
    %v3561 = vunpack.c.h.b16 %v3520
    %v3562 = vunpack.c.l.b16 %v3521
    %v3563 = vunpack.c.h.b16 %v3521
    %v3564 = vunpack.c.l.b16 %v3522
    %v3565 = vunpack.c.h.b16 %v3522
    %v3566 = vunpack.c.l.b16 %v3523
    %v3567 = vunpack.c.h.b16 %v3523
    %v3568 = vunpack.c.l.b16 %v3524
    %v3569 = vunpack.c.h.b16 %v3524
    %v3570 = vunpack.c.l.b16 %v3525
    %v3571 = vunpack.c.h.b16 %v3525
    %v3572 = vunpack.c.l.b16 %v3526
    %v3573 = vunpack.c.h.b16 %v3526
    %v3574 = vunpack.c.l.b16 %v3527
    %v3575 = vunpack.c.h.b16 %v3527
    %v3576 = vpack.c.b16 %v3546, %v3544
    %v3577 = vpack.c.b16 %v3547, %v3545
    %v3578 = vpack.c.b16 %v3550, %v3548
    %v3579 = vpack.c.b16 %v3551, %v3549
    %v3580 = vpack.c.b16 %v3554, %v3552
    %v3581 = vpack.c.b16 %v3555, %v3553
    %v3582 = vpack.c.b16 %v3558, %v3556
    %v3583 = vpack.c.b16 %v3559, %v3557
    %v3584 = vpack.c.b16 %v3562, %v3560
    %v3585 = vpack.c.b16 %v3563, %v3561
    %v3586 = vpack.c.b16 %v3566, %v3564
    %v3587 = vpack.c.b16 %v3567, %v3565
    %v3588 = vpack.c.b16 %v3570, %v3568
    %v3589 = vpack.c.b16 %v3571, %v3569
    %v3590 = vpack.c.b16 %v3574, %v3572
    %v3591 = vpack.c.b16 %v3575, %v3573
    %3608 = vmatpush.bf16.msra.mxu0 %v3590
    %3609 = vmatpush.bf16.msra.mxu0 %v3588
    %3610 = vmatpush.bf16.msra.mxu0 %v3586
    %3611 = vmatpush.bf16.msra.mxu0 %v3584
    %3612 = vmatpush.bf16.msra.mxu0 %v3582
    %3613 = vmatpush.bf16.msra.mxu0 %v3580
    %3614 = vmatpush.bf16.msra.mxu0 %v3578
    %3615 = vmatpush.bf16.msra.mxu0 %v3576
    %3616 = vmatmul.bf16.gmra.mxu0 %v3510
    %v3617 = vpop.f32.mrf.mxu0
    %v3618 = vadd.f32 0.0, %v3617
    %v3619 = vpop.f32.mrf.mxu0
    %v3620 = vadd.f32 0.0, %v3619
    %3621 = vmatmul.bf16.gmra.mxu0 %v3511
    %v3622 = vpop.f32.mrf.mxu0
    %v3623 = vadd.f32 0.0, %v3622
    %v3624 = vpop.f32.mrf.mxu0
    %v3625 = vadd.f32 0.0, %v3624
    %3626 = vdwg.mxu0
    %3627 = vmatpush.bf16.msra.mxu0 %v3591
    %3628 = vmatpush.bf16.msra.mxu0 %v3589
    %3629 = vmatpush.bf16.msra.mxu0 %v3587
    %3630 = vmatpush.bf16.msra.mxu0 %v3585
    %3631 = vmatpush.bf16.msra.mxu0 %v3583
    %3632 = vmatpush.bf16.msra.mxu0 %v3581
    %3633 = vmatpush.bf16.msra.mxu0 %v3579
    %3634 = vmatpush.bf16.msra.mxu0 %v3577
    %3635 = vmatmul.bf16.gmra.mxu0 %v3510
    %v3636 = vpop.f32.mrf.mxu0
    %v3637 = vadd.f32 0.0, %v3636
    %v3638 = vpop.f32.mrf.mxu0
    %v3639 = vadd.f32 0.0, %v3638
    %3640 = vmatmul.bf16.gmra.mxu0 %v3511
    %v3641 = vpop.f32.mrf.mxu0
    %v3642 = vadd.f32 0.0, %v3641
    %v3643 = vpop.f32.mrf.mxu0
    %v3644 = vadd.f32 0.0, %v3643
    %3645 = vdwg.mxu0
    %v3646 = vadd.f32 %v3461, %v3618
    %v3647 = vadd.f32 %v3462, %v3637
    %v3648 = vadd.f32 %v3463, %v3620
    %v3649 = vadd.f32 %v3464, %v3639
    %v3650 = vadd.f32 %v3465, %v3623
    %v3651 = vadd.f32 %v3466, %v3642
    %v3652 = vadd.f32 %v3467, %v3625
    %v3653 = vadd.f32 %v3468, %v3644
    %s3654 = scalar_lea.vmem %s53, 16
    %v3655 = vld [vmem:[%s3654] sm:$0xf]
    %v3656 = vld [vmem:[%s3654 + $0x4] sm:$0xf]
    %v3657 = vld [vmem:[%s3654 + $0x8] sm:$0xf]
    %v3658 = vld [vmem:[%s3654 + $0xc] sm:$0xf]
    %v3663 = vunpack.c.l.b16 %v3655
    %v3664 = vunpack.c.l.b16 %v3656
    %v3665 = vunpack.c.l.b16 %v3657
    %v3666 = vunpack.c.l.b16 %v3658
    %v3667 = vpack.c.b16 %v3664, %v3663
    %v3668 = vpack.c.b16 %v3666, %v3665
    %v3670 = vsel %vm949, %v3667, 0
    %v3673 = vsel %vm949, %v3668, 0
    %3675 = vmatpush.bf16.msra.mxu0 0
    %3676 = vmatpush.bf16.msra.mxu0 0
    %3677 = vmatpush.bf16.msra.mxu0 0
    %3678 = vmatpush.bf16.msra.mxu0 0
    %3679 = vmatpush.bf16.msra.mxu0 0
    %3680 = vmatpush.bf16.msra.mxu0 0
    %3681 = vmatpush.bf16.msra.mxu0 0
    %3682 = vmatpush.bf16.msra.mxu0 %v3469
    %3683 = vmatmul.bf16.gmra.mxu0 %v3670
    %v3684 = vpop.f32.mrf.mxu0
    %v3685 = vadd.f32 0.0, %v3684
    %v3686 = vpop.f32.mrf.mxu0
    %v3687 = vadd.f32 0.0, %v3686
    %3688 = vmatmul.bf16.gmra.mxu0 %v3673
    %v3689 = vpop.f32.mrf.mxu0
    %v3690 = vadd.f32 0.0, %v3689
    %v3691 = vpop.f32.mrf.mxu0
    %v3692 = vadd.f32 0.0, %v3691
    %3693 = vdwg.mxu0
    %v3694 = vpack.c.bf16 %v3687, %v3685
    %v3695 = vpack.c.bf16 %v3692, %v3690
    %s3696 = scalar_lea.vmem %s55, 128
    %v3697 = vld [vmem:[%s3696] sm:$0xff]
    %v3698 = vld [vmem:[%s3696 + $0x8] sm:$0xff]
    %v3699 = vld [vmem:[%s3696 + $0x10] sm:$0xff]
    %v3700 = vld [vmem:[%s3696 + $0x18] sm:$0xff]
    %v3701 = vld [vmem:[%s3696 + $0x20] sm:$0xff]
    %v3702 = vld [vmem:[%s3696 + $0x28] sm:$0xff]
    %v3703 = vld [vmem:[%s3696 + $0x30] sm:$0xff]
    %v3704 = vld [vmem:[%s3696 + $0x38] sm:$0xff]
    %v3705 = vld [vmem:[%s3696 + $0x40] sm:$0xff]
    %v3706 = vld [vmem:[%s3696 + $0x48] sm:$0xff]
    %v3707 = vld [vmem:[%s3696 + $0x50] sm:$0xff]
    %v3708 = vld [vmem:[%s3696 + $0x58] sm:$0xff]
    %v3709 = vld [vmem:[%s3696 + $0x60] sm:$0xff]
    %v3710 = vld [vmem:[%s3696 + $0x68] sm:$0xff]
    %v3711 = vld [vmem:[%s3696 + $0x70] sm:$0xff]
    %v3712 = vld [vmem:[%s3696 + $0x78] sm:$0xff]
    %v3729 = vunpack.c.l.b16 %v3697
    %v3730 = vunpack.c.h.b16 %v3697
    %v3731 = vunpack.c.l.b16 %v3698
    %v3732 = vunpack.c.h.b16 %v3698
    %v3733 = vunpack.c.l.b16 %v3699
    %v3734 = vunpack.c.h.b16 %v3699
    %v3735 = vunpack.c.l.b16 %v3700
    %v3736 = vunpack.c.h.b16 %v3700
    %v3737 = vunpack.c.l.b16 %v3701
    %v3738 = vunpack.c.h.b16 %v3701
    %v3739 = vunpack.c.l.b16 %v3702
    %v3740 = vunpack.c.h.b16 %v3702
    %v3741 = vunpack.c.l.b16 %v3703
    %v3742 = vunpack.c.h.b16 %v3703
    %v3743 = vunpack.c.l.b16 %v3704
    %v3744 = vunpack.c.h.b16 %v3704
    %v3745 = vunpack.c.l.b16 %v3705
    %v3746 = vunpack.c.h.b16 %v3705
    %v3747 = vunpack.c.l.b16 %v3706
    %v3748 = vunpack.c.h.b16 %v3706
    %v3749 = vunpack.c.l.b16 %v3707
    %v3750 = vunpack.c.h.b16 %v3707
    %v3751 = vunpack.c.l.b16 %v3708
    %v3752 = vunpack.c.h.b16 %v3708
    %v3753 = vunpack.c.l.b16 %v3709
    %v3754 = vunpack.c.h.b16 %v3709
    %v3755 = vunpack.c.l.b16 %v3710
    %v3756 = vunpack.c.h.b16 %v3710
    %v3757 = vunpack.c.l.b16 %v3711
    %v3758 = vunpack.c.h.b16 %v3711
    %v3759 = vunpack.c.l.b16 %v3712
    %v3760 = vunpack.c.h.b16 %v3712
    %v3761 = vpack.c.b16 %v3731, %v3729
    %v3762 = vpack.c.b16 %v3732, %v3730
    %v3763 = vpack.c.b16 %v3735, %v3733
    %v3764 = vpack.c.b16 %v3736, %v3734
    %v3765 = vpack.c.b16 %v3739, %v3737
    %v3766 = vpack.c.b16 %v3740, %v3738
    %v3767 = vpack.c.b16 %v3743, %v3741
    %v3768 = vpack.c.b16 %v3744, %v3742
    %v3769 = vpack.c.b16 %v3747, %v3745
    %v3770 = vpack.c.b16 %v3748, %v3746
    %v3771 = vpack.c.b16 %v3751, %v3749
    %v3772 = vpack.c.b16 %v3752, %v3750
    %v3773 = vpack.c.b16 %v3755, %v3753
    %v3774 = vpack.c.b16 %v3756, %v3754
    %v3775 = vpack.c.b16 %v3759, %v3757
    %v3776 = vpack.c.b16 %v3760, %v3758
    %3793 = vmatpush.bf16.msra.mxu0 %v3775
    %3794 = vmatpush.bf16.msra.mxu0 %v3773
    %3795 = vmatpush.bf16.msra.mxu0 %v3771
    %3796 = vmatpush.bf16.msra.mxu0 %v3769
    %3797 = vmatpush.bf16.msra.mxu0 %v3767
    %3798 = vmatpush.bf16.msra.mxu0 %v3765
    %3799 = vmatpush.bf16.msra.mxu0 %v3763
    %3800 = vmatpush.bf16.msra.mxu0 %v3761
    %3801 = vmatmul.bf16.gmra.mxu0 %v3694
    %v3802 = vpop.f32.mrf.mxu0
    %v3803 = vadd.f32 0.0, %v3802
    %v3804 = vpop.f32.mrf.mxu0
    %v3805 = vadd.f32 0.0, %v3804
    %3806 = vmatmul.bf16.gmra.mxu0 %v3695
    %v3807 = vpop.f32.mrf.mxu0
    %v3808 = vadd.f32 0.0, %v3807
    %v3809 = vpop.f32.mrf.mxu0
    %v3810 = vadd.f32 0.0, %v3809
    %3811 = vdwg.mxu0
    %3812 = vmatpush.bf16.msra.mxu0 %v3776
    %3813 = vmatpush.bf16.msra.mxu0 %v3774
    %3814 = vmatpush.bf16.msra.mxu0 %v3772
    %3815 = vmatpush.bf16.msra.mxu0 %v3770
    %3816 = vmatpush.bf16.msra.mxu0 %v3768
    %3817 = vmatpush.bf16.msra.mxu0 %v3766
    %3818 = vmatpush.bf16.msra.mxu0 %v3764
    %3819 = vmatpush.bf16.msra.mxu0 %v3762
    %3820 = vmatmul.bf16.gmra.mxu0 %v3694
    %v3821 = vpop.f32.mrf.mxu0
    %v3822 = vadd.f32 0.0, %v3821
    %v3823 = vpop.f32.mrf.mxu0
    %v3824 = vadd.f32 0.0, %v3823
    %3825 = vmatmul.bf16.gmra.mxu0 %v3695
    %v3826 = vpop.f32.mrf.mxu0
    %v3827 = vadd.f32 0.0, %v3826
    %v3828 = vpop.f32.mrf.mxu0
    %v3829 = vadd.f32 0.0, %v3828
    %3830 = vdwg.mxu0
    %v3831 = vadd.f32 %v3646, %v3803
    %v3832 = vadd.f32 %v3647, %v3822
    %v3833 = vadd.f32 %v3648, %v3805
    %v3834 = vadd.f32 %v3649, %v3824
    %v3835 = vadd.f32 %v3650, %v3808
    %v3836 = vadd.f32 %v3651, %v3827
    %v3837 = vadd.f32 %v3652, %v3810
    %v3838 = vadd.f32 %v3653, %v3829
    %s3839 = scalar_lea.vmem %s53, 32
    %v3840 = vld [vmem:[%s3839] sm:$0xf]
    %v3841 = vld [vmem:[%s3839 + $0x4] sm:$0xf]
    %v3842 = vld [vmem:[%s3839 + $0x8] sm:$0xf]
    %v3843 = vld [vmem:[%s3839 + $0xc] sm:$0xf]
    %v3848 = vunpack.c.l.b16 %v3840
    %v3849 = vunpack.c.l.b16 %v3841
    %v3850 = vunpack.c.l.b16 %v3842
    %v3851 = vunpack.c.l.b16 %v3843
    %v3852 = vpack.c.b16 %v3849, %v3848
    %v3853 = vpack.c.b16 %v3851, %v3850
    %v3855 = vsel %vm949, %v3852, 0
    %v3858 = vsel %vm949, %v3853, 0
    %3860 = vmatpush.bf16.msra.mxu0 0
    %3861 = vmatpush.bf16.msra.mxu0 0
    %3862 = vmatpush.bf16.msra.mxu0 0
    %3863 = vmatpush.bf16.msra.mxu0 0
    %3864 = vmatpush.bf16.msra.mxu0 0
    %3865 = vmatpush.bf16.msra.mxu0 0
    %3866 = vmatpush.bf16.msra.mxu0 0
    %3867 = vmatpush.bf16.msra.mxu0 %v3469
    %3868 = vmatmul.bf16.gmra.mxu0 %v3855
    %v3869 = vpop.f32.mrf.mxu0
    %v3870 = vadd.f32 0.0, %v3869
    %v3871 = vpop.f32.mrf.mxu0
    %v3872 = vadd.f32 0.0, %v3871
    %3873 = vmatmul.bf16.gmra.mxu0 %v3858
    %v3874 = vpop.f32.mrf.mxu0
    %v3875 = vadd.f32 0.0, %v3874
    %v3876 = vpop.f32.mrf.mxu0
    %v3877 = vadd.f32 0.0, %v3876
    %3878 = vdwg.mxu0
    %v3879 = vpack.c.bf16 %v3872, %v3870
    %v3880 = vpack.c.bf16 %v3877, %v3875
    %s3881 = scalar_lea.vmem %s55, 256
    %v3882 = vld [vmem:[%s3881] sm:$0xff]
    %v3883 = vld [vmem:[%s3881 + $0x8] sm:$0xff]
    %v3884 = vld [vmem:[%s3881 + $0x10] sm:$0xff]
    %v3885 = vld [vmem:[%s3881 + $0x18] sm:$0xff]
    %v3886 = vld [vmem:[%s3881 + $0x20] sm:$0xff]
    %v3887 = vld [vmem:[%s3881 + $0x28] sm:$0xff]
    %v3888 = vld [vmem:[%s3881 + $0x30] sm:$0xff]
    %v3889 = vld [vmem:[%s3881 + $0x38] sm:$0xff]
    %v3890 = vld [vmem:[%s3881 + $0x40] sm:$0xff]
    %v3891 = vld [vmem:[%s3881 + $0x48] sm:$0xff]
    %v3892 = vld [vmem:[%s3881 + $0x50] sm:$0xff]
    %v3893 = vld [vmem:[%s3881 + $0x58] sm:$0xff]
    %v3894 = vld [vmem:[%s3881 + $0x60] sm:$0xff]
    %v3895 = vld [vmem:[%s3881 + $0x68] sm:$0xff]
    %v3896 = vld [vmem:[%s3881 + $0x70] sm:$0xff]
    %v3897 = vld [vmem:[%s3881 + $0x78] sm:$0xff]
    %v3914 = vunpack.c.l.b16 %v3882
    %v3915 = vunpack.c.h.b16 %v3882
    %v3916 = vunpack.c.l.b16 %v3883
    %v3917 = vunpack.c.h.b16 %v3883
    %v3918 = vunpack.c.l.b16 %v3884
    %v3919 = vunpack.c.h.b16 %v3884
    %v3920 = vunpack.c.l.b16 %v3885
    %v3921 = vunpack.c.h.b16 %v3885
    %v3922 = vunpack.c.l.b16 %v3886
    %v3923 = vunpack.c.h.b16 %v3886
    %v3924 = vunpack.c.l.b16 %v3887
    %v3925 = vunpack.c.h.b16 %v3887
    %v3926 = vunpack.c.l.b16 %v3888
    %v3927 = vunpack.c.h.b16 %v3888
    %v3928 = vunpack.c.l.b16 %v3889
    %v3929 = vunpack.c.h.b16 %v3889
    %v3930 = vunpack.c.l.b16 %v3890
    %v3931 = vunpack.c.h.b16 %v3890
    %v3932 = vunpack.c.l.b16 %v3891
    %v3933 = vunpack.c.h.b16 %v3891
    %v3934 = vunpack.c.l.b16 %v3892
    %v3935 = vunpack.c.h.b16 %v3892
    %v3936 = vunpack.c.l.b16 %v3893
    %v3937 = vunpack.c.h.b16 %v3893
    %v3938 = vunpack.c.l.b16 %v3894
    %v3939 = vunpack.c.h.b16 %v3894
    %v3940 = vunpack.c.l.b16 %v3895
    %v3941 = vunpack.c.h.b16 %v3895
    %v3942 = vunpack.c.l.b16 %v3896
    %v3943 = vunpack.c.h.b16 %v3896
    %v3944 = vunpack.c.l.b16 %v3897
    %v3945 = vunpack.c.h.b16 %v3897
    %v3946 = vpack.c.b16 %v3916, %v3914
    %v3947 = vpack.c.b16 %v3917, %v3915
    %v3948 = vpack.c.b16 %v3920, %v3918
    %v3949 = vpack.c.b16 %v3921, %v3919
    %v3950 = vpack.c.b16 %v3924, %v3922
    %v3951 = vpack.c.b16 %v3925, %v3923
    %v3952 = vpack.c.b16 %v3928, %v3926
    %v3953 = vpack.c.b16 %v3929, %v3927
    %v3954 = vpack.c.b16 %v3932, %v3930
    %v3955 = vpack.c.b16 %v3933, %v3931
    %v3956 = vpack.c.b16 %v3936, %v3934
    %v3957 = vpack.c.b16 %v3937, %v3935
    %v3958 = vpack.c.b16 %v3940, %v3938
    %v3959 = vpack.c.b16 %v3941, %v3939
    %v3960 = vpack.c.b16 %v3944, %v3942
    %v3961 = vpack.c.b16 %v3945, %v3943
    %3978 = vmatpush.bf16.msra.mxu0 %v3960
    %3979 = vmatpush.bf16.msra.mxu0 %v3958
    %3980 = vmatpush.bf16.msra.mxu0 %v3956
    %3981 = vmatpush.bf16.msra.mxu0 %v3954
    %3982 = vmatpush.bf16.msra.mxu0 %v3952
    %3983 = vmatpush.bf16.msra.mxu0 %v3950
    %3984 = vmatpush.bf16.msra.mxu0 %v3948
    %3985 = vmatpush.bf16.msra.mxu0 %v3946
    %3986 = vmatmul.bf16.gmra.mxu0 %v3879
    %v3987 = vpop.f32.mrf.mxu0
    %v3988 = vadd.f32 0.0, %v3987
    %v3989 = vpop.f32.mrf.mxu0
    %v3990 = vadd.f32 0.0, %v3989
    %3991 = vmatmul.bf16.gmra.mxu0 %v3880
    %v3992 = vpop.f32.mrf.mxu0
    %v3993 = vadd.f32 0.0, %v3992
    %v3994 = vpop.f32.mrf.mxu0
    %v3995 = vadd.f32 0.0, %v3994
    %3996 = vdwg.mxu0
    %3997 = vmatpush.bf16.msra.mxu0 %v3961
    %3998 = vmatpush.bf16.msra.mxu0 %v3959
    %3999 = vmatpush.bf16.msra.mxu0 %v3957
    %4000 = vmatpush.bf16.msra.mxu0 %v3955
    %4001 = vmatpush.bf16.msra.mxu0 %v3953
    %4002 = vmatpush.bf16.msra.mxu0 %v3951
    %4003 = vmatpush.bf16.msra.mxu0 %v3949
    %4004 = vmatpush.bf16.msra.mxu0 %v3947
    %4005 = vmatmul.bf16.gmra.mxu0 %v3879
    %v4006 = vpop.f32.mrf.mxu0
    %v4007 = vadd.f32 0.0, %v4006
    %v4008 = vpop.f32.mrf.mxu0
    %v4009 = vadd.f32 0.0, %v4008
    %4010 = vmatmul.bf16.gmra.mxu0 %v3880
    %v4011 = vpop.f32.mrf.mxu0
    %v4012 = vadd.f32 0.0, %v4011
    %v4013 = vpop.f32.mrf.mxu0
    %v4014 = vadd.f32 0.0, %v4013
    %4015 = vdwg.mxu0
    %v4016 = vadd.f32 %v3831, %v3988
    %v4017 = vadd.f32 %v3832, %v4007
    %v4018 = vadd.f32 %v3833, %v3990
    %v4019 = vadd.f32 %v3834, %v4009
    %v4020 = vadd.f32 %v3835, %v3993
    %v4021 = vadd.f32 %v3836, %v4012
    %v4022 = vadd.f32 %v3837, %v3995
    %v4023 = vadd.f32 %v3838, %v4014
    %v4024 = vld [vmem:[%s57] sm:$0xf]
    %v4025 = vld [vmem:[%s57 + $0x4] sm:$0xf]
    %v4026 = vld [vmem:[%s57 + $0x8] sm:$0xf]
    %v4027 = vld [vmem:[%s57 + $0xc] sm:$0xf]
    %v4032 = vunpack.c.l.b16 %v4024
    %v4033 = vunpack.c.l.b16 %v4025
    %v4034 = vunpack.c.l.b16 %v4026
    %v4035 = vunpack.c.l.b16 %v4027
    %v4036 = vpack.c.b16 %v4033, %v4032
    %v4037 = vpack.c.b16 %v4035, %v4034
    %v4039 = vsel %vm862, %v4036, 0
    %v4042 = vsel %vm862, %v4037, 0
    %v4045 = vsel %vm866, %v3470, 0
    %4047 = vmatpush.bf16.msra.mxu0 0
    %4048 = vmatpush.bf16.msra.mxu0 0
    %4049 = vmatpush.bf16.msra.mxu0 0
    %4050 = vmatpush.bf16.msra.mxu0 0
    %4051 = vmatpush.bf16.msra.mxu0 0
    %4052 = vmatpush.bf16.msra.mxu0 0
    %4053 = vmatpush.bf16.msra.mxu0 0
    %4054 = vmatpush.bf16.msra.mxu0 %v4045
    %4055 = vmatmul.bf16.gmra.mxu0 %v4039
    %v4056 = vpop.f32.mrf.mxu0
    %v4057 = vadd.f32 0.0, %v4056
    %v4058 = vpop.f32.mrf.mxu0
    %v4059 = vadd.f32 0.0, %v4058
    %4060 = vmatmul.bf16.gmra.mxu0 %v4042
    %v4061 = vpop.f32.mrf.mxu0
    %v4062 = vadd.f32 0.0, %v4061
    %v4063 = vpop.f32.mrf.mxu0
    %v4064 = vadd.f32 0.0, %v4063
    %4065 = vdwg.mxu0
    %v4066 = vpack.c.bf16 %v4059, %v4057
    %v4067 = vpack.c.bf16 %v4064, %v4062
    %v4068 = vld [vmem:[%s59] sm:$0xff]
    %v4069 = vld [vmem:[%s59 + $0x8] sm:$0xff]
    %v4070 = vld [vmem:[%s59 + $0x10] sm:$0xff]
    %v4071 = vld [vmem:[%s59 + $0x18] sm:$0xff]
    %v4072 = vld [vmem:[%s59 + $0x20] sm:$0xff]
    %v4073 = vld [vmem:[%s59 + $0x28] sm:$0xff]
    %v4074 = vld [vmem:[%s59 + $0x30] sm:$0xff]
    %v4075 = vld [vmem:[%s59 + $0x38] sm:$0xff]
    %v4084 = vunpack.c.l.b16 %v4068
    %v4085 = vunpack.c.h.b16 %v4068
    %v4086 = vunpack.c.l.b16 %v4069
    %v4087 = vunpack.c.h.b16 %v4069
    %v4088 = vunpack.c.l.b16 %v4070
    %v4089 = vunpack.c.h.b16 %v4070
    %v4090 = vunpack.c.l.b16 %v4071
    %v4091 = vunpack.c.h.b16 %v4071
    %v4092 = vunpack.c.l.b16 %v4072
    %v4093 = vunpack.c.h.b16 %v4072
    %v4094 = vunpack.c.l.b16 %v4073
    %v4095 = vunpack.c.h.b16 %v4073
    %v4096 = vunpack.c.l.b16 %v4074
    %v4097 = vunpack.c.h.b16 %v4074
    %v4098 = vunpack.c.l.b16 %v4075
    %v4099 = vunpack.c.h.b16 %v4075
    %v4100 = vpack.c.b16 %v4086, %v4084
    %v4101 = vpack.c.b16 %v4087, %v4085
    %v4102 = vpack.c.b16 %v4090, %v4088
    %v4103 = vpack.c.b16 %v4091, %v4089
    %v4104 = vpack.c.b16 %v4094, %v4092
    %v4105 = vpack.c.b16 %v4095, %v4093
    %v4106 = vpack.c.b16 %v4098, %v4096
    %v4107 = vpack.c.b16 %v4099, %v4097
    %v4117 = vsel %vm917, %v4066, 0
    %v4120 = vsel %vm917, %v4067, 0
    %4122 = vmatpush.bf16.msra.mxu0 0
    %4123 = vmatpush.bf16.msra.mxu0 0
    %4124 = vmatpush.bf16.msra.mxu0 0
    %4125 = vmatpush.bf16.msra.mxu0 0
    %4126 = vmatpush.bf16.msra.mxu0 %v4106
    %4127 = vmatpush.bf16.msra.mxu0 %v4104
    %4128 = vmatpush.bf16.msra.mxu0 %v4102
    %4129 = vmatpush.bf16.msra.mxu0 %v4100
    %4130 = vmatmul.bf16.gmra.mxu0 %v4117
    %v4131 = vpop.f32.mrf.mxu0
    %v4132 = vadd.f32 0.0, %v4131
    %v4133 = vpop.f32.mrf.mxu0
    %v4134 = vadd.f32 0.0, %v4133
    %4135 = vmatmul.bf16.gmra.mxu0 %v4120
    %v4136 = vpop.f32.mrf.mxu0
    %v4137 = vadd.f32 0.0, %v4136
    %v4138 = vpop.f32.mrf.mxu0
    %v4139 = vadd.f32 0.0, %v4138
    %4140 = vdwg.mxu0
    %4141 = vmatpush.bf16.msra.mxu0 0
    %4142 = vmatpush.bf16.msra.mxu0 0
    %4143 = vmatpush.bf16.msra.mxu0 0
    %4144 = vmatpush.bf16.msra.mxu0 0
    %4145 = vmatpush.bf16.msra.mxu0 %v4107
    %4146 = vmatpush.bf16.msra.mxu0 %v4105
    %4147 = vmatpush.bf16.msra.mxu0 %v4103
    %4148 = vmatpush.bf16.msra.mxu0 %v4101
    %4149 = vmatmul.bf16.gmra.mxu0 %v4117
    %v4150 = vpop.f32.mrf.mxu0
    %v4151 = vadd.f32 0.0, %v4150
    %v4152 = vpop.f32.mrf.mxu0
    %v4153 = vadd.f32 0.0, %v4152
    %4154 = vmatmul.bf16.gmra.mxu0 %v4120
    %v4155 = vpop.f32.mrf.mxu0
    %v4156 = vadd.f32 0.0, %v4155
    %v4157 = vpop.f32.mrf.mxu0
    %v4158 = vadd.f32 0.0, %v4157
    %4159 = vdwg.mxu0
    %v4160 = vadd.f32 %v4016, %v4132
    %v4161 = vadd.f32 %v4017, %v4151
    %v4162 = vadd.f32 %v4018, %v4134
    %v4163 = vadd.f32 %v4019, %v4153
    %v4164 = vadd.f32 %v4020, %v4137
    %v4165 = vadd.f32 %v4021, %v4156
    %v4166 = vadd.f32 %v4022, %v4139
    %v4167 = vadd.f32 %v4023, %v4158
    %s4168 = scalar_lea.vmem %s57, 16
    %v4169 = vld [vmem:[%s4168] sm:$0xf]
    %v4170 = vld [vmem:[%s4168 + $0x4] sm:$0xf]
    %v4171 = vld [vmem:[%s4168 + $0x8] sm:$0xf]
    %v4172 = vld [vmem:[%s4168 + $0xc] sm:$0xf]
    %v4177 = vunpack.c.l.b16 %v4169
    %v4178 = vunpack.c.l.b16 %v4170
    %v4179 = vunpack.c.l.b16 %v4171
    %v4180 = vunpack.c.l.b16 %v4172
    %v4181 = vpack.c.b16 %v4178, %v4177
    %v4182 = vpack.c.b16 %v4180, %v4179
    %v4184 = vsel %vm862, %v4181, 0
    %v4187 = vsel %vm862, %v4182, 0
    %4189 = vmatpush.bf16.msra.mxu0 0
    %4190 = vmatpush.bf16.msra.mxu0 0
    %4191 = vmatpush.bf16.msra.mxu0 0
    %4192 = vmatpush.bf16.msra.mxu0 0
    %4193 = vmatpush.bf16.msra.mxu0 0
    %4194 = vmatpush.bf16.msra.mxu0 0
    %4195 = vmatpush.bf16.msra.mxu0 0
    %4196 = vmatpush.bf16.msra.mxu0 %v4045
    %4197 = vmatmul.bf16.gmra.mxu0 %v4184
    %v4198 = vpop.f32.mrf.mxu0
    %v4199 = vadd.f32 0.0, %v4198
    %v4200 = vpop.f32.mrf.mxu0
    %v4201 = vadd.f32 0.0, %v4200
    %4202 = vmatmul.bf16.gmra.mxu0 %v4187
    %v4203 = vpop.f32.mrf.mxu0
    %v4204 = vadd.f32 0.0, %v4203
    %v4205 = vpop.f32.mrf.mxu0
    %v4206 = vadd.f32 0.0, %v4205
    %4207 = vdwg.mxu0
    %v4208 = vpack.c.bf16 %v4201, %v4199
    %v4209 = vpack.c.bf16 %v4206, %v4204
    %s4210 = scalar_lea.vmem %s59, 64
    %v4211 = vld [vmem:[%s4210] sm:$0xff]
    %v4212 = vld [vmem:[%s4210 + $0x8] sm:$0xff]
    %v4213 = vld [vmem:[%s4210 + $0x10] sm:$0xff]
    %v4214 = vld [vmem:[%s4210 + $0x18] sm:$0xff]
    %v4215 = vld [vmem:[%s4210 + $0x20] sm:$0xff]
    %v4216 = vld [vmem:[%s4210 + $0x28] sm:$0xff]
    %v4217 = vld [vmem:[%s4210 + $0x30] sm:$0xff]
    %v4218 = vld [vmem:[%s4210 + $0x38] sm:$0xff]
    %v4227 = vunpack.c.l.b16 %v4211
    %v4228 = vunpack.c.h.b16 %v4211
    %v4229 = vunpack.c.l.b16 %v4212
    %v4230 = vunpack.c.h.b16 %v4212
    %v4231 = vunpack.c.l.b16 %v4213
    %v4232 = vunpack.c.h.b16 %v4213
    %v4233 = vunpack.c.l.b16 %v4214
    %v4234 = vunpack.c.h.b16 %v4214
    %v4235 = vunpack.c.l.b16 %v4215
    %v4236 = vunpack.c.h.b16 %v4215
    %v4237 = vunpack.c.l.b16 %v4216
    %v4238 = vunpack.c.h.b16 %v4216
    %v4239 = vunpack.c.l.b16 %v4217
    %v4240 = vunpack.c.h.b16 %v4217
    %v4241 = vunpack.c.l.b16 %v4218
    %v4242 = vunpack.c.h.b16 %v4218
    %v4243 = vpack.c.b16 %v4229, %v4227
    %v4244 = vpack.c.b16 %v4230, %v4228
    %v4245 = vpack.c.b16 %v4233, %v4231
    %v4246 = vpack.c.b16 %v4234, %v4232
    %v4247 = vpack.c.b16 %v4237, %v4235
    %v4248 = vpack.c.b16 %v4238, %v4236
    %v4249 = vpack.c.b16 %v4241, %v4239
    %v4250 = vpack.c.b16 %v4242, %v4240
    %v4260 = vsel %vm917, %v4208, 0
    %v4263 = vsel %vm917, %v4209, 0
    %4265 = vmatpush.bf16.msra.mxu0 0
    %4266 = vmatpush.bf16.msra.mxu0 0
    %4267 = vmatpush.bf16.msra.mxu0 0
    %4268 = vmatpush.bf16.msra.mxu0 0
    %4269 = vmatpush.bf16.msra.mxu0 %v4249
    %4270 = vmatpush.bf16.msra.mxu0 %v4247
    %4271 = vmatpush.bf16.msra.mxu0 %v4245
    %4272 = vmatpush.bf16.msra.mxu0 %v4243
    %4273 = vmatmul.bf16.gmra.mxu0 %v4260
    %v4274 = vpop.f32.mrf.mxu0
    %v4275 = vadd.f32 0.0, %v4274
    %v4276 = vpop.f32.mrf.mxu0
    %v4277 = vadd.f32 0.0, %v4276
    %4278 = vmatmul.bf16.gmra.mxu0 %v4263
    %v4279 = vpop.f32.mrf.mxu0
    %v4280 = vadd.f32 0.0, %v4279
    %v4281 = vpop.f32.mrf.mxu0
    %v4282 = vadd.f32 0.0, %v4281
    %4283 = vdwg.mxu0
    %4284 = vmatpush.bf16.msra.mxu0 0
    %4285 = vmatpush.bf16.msra.mxu0 0
    %4286 = vmatpush.bf16.msra.mxu0 0
    %4287 = vmatpush.bf16.msra.mxu0 0
    %4288 = vmatpush.bf16.msra.mxu0 %v4250
    %4289 = vmatpush.bf16.msra.mxu0 %v4248
    %4290 = vmatpush.bf16.msra.mxu0 %v4246
    %4291 = vmatpush.bf16.msra.mxu0 %v4244
    %4292 = vmatmul.bf16.gmra.mxu0 %v4260
    %v4293 = vpop.f32.mrf.mxu0
    %v4294 = vadd.f32 0.0, %v4293
    %v4295 = vpop.f32.mrf.mxu0
    %v4296 = vadd.f32 0.0, %v4295
    %4297 = vmatmul.bf16.gmra.mxu0 %v4263
    %v4298 = vpop.f32.mrf.mxu0
    %v4299 = vadd.f32 0.0, %v4298
    %v4300 = vpop.f32.mrf.mxu0
    %v4301 = vadd.f32 0.0, %v4300
    %4302 = vdwg.mxu0
    %v4303 = vadd.f32 %v4160, %v4275
    %v4304 = vadd.f32 %v4161, %v4294
    %v4305 = vadd.f32 %v4162, %v4277
    %v4306 = vadd.f32 %v4163, %v4296
    %v4307 = vadd.f32 %v4164, %v4280
    %v4308 = vadd.f32 %v4165, %v4299
    %v4309 = vadd.f32 %v4166, %v4282
    %v4310 = vadd.f32 %v4167, %v4301
    %s4311 = scalar_lea.vmem %s57, 32
    %v4312 = vld [vmem:[%s4311] sm:$0xf]
    %v4313 = vld [vmem:[%s4311 + $0x4] sm:$0xf]
    %v4314 = vld [vmem:[%s4311 + $0x8] sm:$0xf]
    %v4315 = vld [vmem:[%s4311 + $0xc] sm:$0xf]
    %v4320 = vunpack.c.l.b16 %v4312
    %v4321 = vunpack.c.l.b16 %v4313
    %v4322 = vunpack.c.l.b16 %v4314
    %v4323 = vunpack.c.l.b16 %v4315
    %v4324 = vpack.c.b16 %v4321, %v4320
    %v4325 = vpack.c.b16 %v4323, %v4322
    %v4327 = vsel %vm862, %v4324, 0
    %v4330 = vsel %vm862, %v4325, 0
    %4332 = vmatpush.bf16.msra.mxu0 0
    %4333 = vmatpush.bf16.msra.mxu0 0
    %4334 = vmatpush.bf16.msra.mxu0 0
    %4335 = vmatpush.bf16.msra.mxu0 0
    %4336 = vmatpush.bf16.msra.mxu0 0
    %4337 = vmatpush.bf16.msra.mxu0 0
    %4338 = vmatpush.bf16.msra.mxu0 0
    %4339 = vmatpush.bf16.msra.mxu0 %v4045
    %4340 = vmatmul.bf16.gmra.mxu0 %v4327
    %v4341 = vpop.f32.mrf.mxu0
    %v4342 = vadd.f32 0.0, %v4341
    %v4343 = vpop.f32.mrf.mxu0
    %v4344 = vadd.f32 0.0, %v4343
    %4345 = vmatmul.bf16.gmra.mxu0 %v4330
    %v4346 = vpop.f32.mrf.mxu0
    %v4347 = vadd.f32 0.0, %v4346
    %v4348 = vpop.f32.mrf.mxu0
    %v4349 = vadd.f32 0.0, %v4348
    %4350 = vdwg.mxu0
    %v4351 = vpack.c.bf16 %v4344, %v4342
    %v4352 = vpack.c.bf16 %v4349, %v4347
    %s4353 = scalar_lea.vmem %s59, 128
    %v4354 = vld [vmem:[%s4353] sm:$0xff]
    %v4355 = vld [vmem:[%s4353 + $0x8] sm:$0xff]
    %v4356 = vld [vmem:[%s4353 + $0x10] sm:$0xff]
    %v4357 = vld [vmem:[%s4353 + $0x18] sm:$0xff]
    %v4358 = vld [vmem:[%s4353 + $0x20] sm:$0xff]
    %v4359 = vld [vmem:[%s4353 + $0x28] sm:$0xff]
    %v4360 = vld [vmem:[%s4353 + $0x30] sm:$0xff]
    %v4361 = vld [vmem:[%s4353 + $0x38] sm:$0xff]
    %v4370 = vunpack.c.l.b16 %v4354
    %v4371 = vunpack.c.h.b16 %v4354
    %v4372 = vunpack.c.l.b16 %v4355
    %v4373 = vunpack.c.h.b16 %v4355
    %v4374 = vunpack.c.l.b16 %v4356
    %v4375 = vunpack.c.h.b16 %v4356
    %v4376 = vunpack.c.l.b16 %v4357
    %v4377 = vunpack.c.h.b16 %v4357
    %v4378 = vunpack.c.l.b16 %v4358
    %v4379 = vunpack.c.h.b16 %v4358
    %v4380 = vunpack.c.l.b16 %v4359
    %v4381 = vunpack.c.h.b16 %v4359
    %v4382 = vunpack.c.l.b16 %v4360
    %v4383 = vunpack.c.h.b16 %v4360
    %v4384 = vunpack.c.l.b16 %v4361
    %v4385 = vunpack.c.h.b16 %v4361
    %v4386 = vpack.c.b16 %v4372, %v4370
    %v4387 = vpack.c.b16 %v4373, %v4371
    %v4388 = vpack.c.b16 %v4376, %v4374
    %v4389 = vpack.c.b16 %v4377, %v4375
    %v4390 = vpack.c.b16 %v4380, %v4378
    %v4391 = vpack.c.b16 %v4381, %v4379
    %v4392 = vpack.c.b16 %v4384, %v4382
    %v4393 = vpack.c.b16 %v4385, %v4383
    %v4403 = vsel %vm917, %v4351, 0
    %v4406 = vsel %vm917, %v4352, 0
    %4408 = vmatpush.bf16.msra.mxu0 0
    %4409 = vmatpush.bf16.msra.mxu0 0
    %4410 = vmatpush.bf16.msra.mxu0 0
    %4411 = vmatpush.bf16.msra.mxu0 0
    %4412 = vmatpush.bf16.msra.mxu0 %v4392
    %4413 = vmatpush.bf16.msra.mxu0 %v4390
    %4414 = vmatpush.bf16.msra.mxu0 %v4388
    %4415 = vmatpush.bf16.msra.mxu0 %v4386
    %4416 = vmatmul.bf16.gmra.mxu0 %v4403
    %v4417 = vpop.f32.mrf.mxu0
    %v4418 = vadd.f32 0.0, %v4417
    %v4419 = vpop.f32.mrf.mxu0
    %v4420 = vadd.f32 0.0, %v4419
    %4421 = vmatmul.bf16.gmra.mxu0 %v4406
    %v4422 = vpop.f32.mrf.mxu0
    %v4423 = vadd.f32 0.0, %v4422
    %v4424 = vpop.f32.mrf.mxu0
    %v4425 = vadd.f32 0.0, %v4424
    %4426 = vdwg.mxu0
    %4427 = vmatpush.bf16.msra.mxu0 0
    %4428 = vmatpush.bf16.msra.mxu0 0
    %4429 = vmatpush.bf16.msra.mxu0 0
    %4430 = vmatpush.bf16.msra.mxu0 0
    %4431 = vmatpush.bf16.msra.mxu0 %v4393
    %4432 = vmatpush.bf16.msra.mxu0 %v4391
    %4433 = vmatpush.bf16.msra.mxu0 %v4389
    %4434 = vmatpush.bf16.msra.mxu0 %v4387
    %4435 = vmatmul.bf16.gmra.mxu0 %v4403
    %v4436 = vpop.f32.mrf.mxu0
    %v4437 = vadd.f32 0.0, %v4436
    %v4438 = vpop.f32.mrf.mxu0
    %v4439 = vadd.f32 0.0, %v4438
    %4440 = vmatmul.bf16.gmra.mxu0 %v4406
    %v4441 = vpop.f32.mrf.mxu0
    %v4442 = vadd.f32 0.0, %v4441
    %v4443 = vpop.f32.mrf.mxu0
    %v4444 = vadd.f32 0.0, %v4443
    %4445 = vdwg.mxu0
    %v4446 = vadd.f32 %v4303, %v4418
    %v4447 = vadd.f32 %v4304, %v4437
    %v4448 = vadd.f32 %v4305, %v4420
    %v4449 = vadd.f32 %v4306, %v4439
    %v4450 = vadd.f32 %v4307, %v4423
    %v4451 = vadd.f32 %v4308, %v4442
    %v4452 = vadd.f32 %v4309, %v4425
    %v4453 = vadd.f32 %v4310, %v4444
    %v4454 = vld [vmem:[%s61] sm:$0xf]
    %v4455 = vld [vmem:[%s61 + $0x4] sm:$0xf]
    %v4456 = vld [vmem:[%s61 + $0x8] sm:$0xf]
    %v4457 = vld [vmem:[%s61 + $0xc] sm:$0xf]
    %v4462 = vunpack.c.l.b16 %v4454
    %v4463 = vunpack.c.l.b16 %v4455
    %v4464 = vunpack.c.l.b16 %v4456
    %v4465 = vunpack.c.l.b16 %v4457
    %v4466 = vpack.c.b16 %v4463, %v4462
    %v4467 = vpack.c.b16 %v4465, %v4464
    %v4469 = vsel %vm800, %v4466, 0
    %v4472 = vsel %vm800, %v4467, 0
    %4474 = vmatpush.bf16.msra.mxu0 0
    %4475 = vmatpush.bf16.msra.mxu0 0
    %4476 = vmatpush.bf16.msra.mxu0 0
    %4477 = vmatpush.bf16.msra.mxu0 0
    %4478 = vmatpush.bf16.msra.mxu0 0
    %4479 = vmatpush.bf16.msra.mxu0 0
    %4480 = vmatpush.bf16.msra.mxu0 0
    %4481 = vmatpush.bf16.msra.mxu0 %v806
    %4482 = vmatmul.bf16.gmra.mxu0 %v4469
    %v4483 = vpop.f32.mrf.mxu0
    %v4484 = vadd.f32 0.0, %v4483
    %v4485 = vpop.f32.mrf.mxu0
    %v4486 = vadd.f32 0.0, %v4485
    %4487 = vmatmul.bf16.gmra.mxu0 %v4472
    %v4488 = vpop.f32.mrf.mxu0
    %v4489 = vadd.f32 0.0, %v4488
    %v4490 = vpop.f32.mrf.mxu0
    %v4491 = vadd.f32 0.0, %v4490
    %4492 = vdwg.mxu0
    %v4493 = vpack.c.bf16 %v4486, %v4484
    %v4494 = vpack.c.bf16 %v4491, %v4489
    %v4495 = vld [vmem:[#allocation13] sm:$0xff]
    %v4496 = vld [vmem:[#allocation13 + $0x8] sm:$0xff]
    %v4497 = vld [vmem:[#allocation13 + $0x10] sm:$0xff]
    %v4498 = vld [vmem:[#allocation13 + $0x18] sm:$0xff]
    %v4503 = vunpack.c.l.b16 %v4495
    %v4504 = vunpack.c.h.b16 %v4495
    %v4505 = vunpack.c.l.b16 %v4496
    %v4506 = vunpack.c.h.b16 %v4496
    %v4507 = vunpack.c.l.b16 %v4497
    %v4508 = vunpack.c.h.b16 %v4497
    %v4509 = vunpack.c.l.b16 %v4498
    %v4510 = vunpack.c.h.b16 %v4498
    %v4511 = vpack.c.b16 %v4505, %v4503
    %v4512 = vpack.c.b16 %v4506, %v4504
    %v4513 = vpack.c.b16 %v4509, %v4507
    %v4514 = vpack.c.b16 %v4510, %v4508
    %v4520 = vsel %vm838, %v4493, 0
    %v4523 = vsel %vm838, %v4494, 0
    %4525 = vmatpush.bf16.msra.mxu0 0
    %4526 = vmatpush.bf16.msra.mxu0 0
    %4527 = vmatpush.bf16.msra.mxu0 0
    %4528 = vmatpush.bf16.msra.mxu0 0
    %4529 = vmatpush.bf16.msra.mxu0 0
    %4530 = vmatpush.bf16.msra.mxu0 0
    %4531 = vmatpush.bf16.msra.mxu0 %v4513
    %4532 = vmatpush.bf16.msra.mxu0 %v4511
    %4533 = vmatmul.bf16.gmra.mxu0 %v4520
    %v4534 = vpop.f32.mrf.mxu0
    %v4535 = vadd.f32 0.0, %v4534
    %v4536 = vpop.f32.mrf.mxu0
    %v4537 = vadd.f32 0.0, %v4536
    %4538 = vmatmul.bf16.gmra.mxu0 %v4523
    %v4539 = vpop.f32.mrf.mxu0
    %v4540 = vadd.f32 0.0, %v4539
    %v4541 = vpop.f32.mrf.mxu0
    %v4542 = vadd.f32 0.0, %v4541
    %4543 = vdwg.mxu0
    %4544 = vmatpush.bf16.msra.mxu0 0
    %4545 = vmatpush.bf16.msra.mxu0 0
    %4546 = vmatpush.bf16.msra.mxu0 0
    %4547 = vmatpush.bf16.msra.mxu0 0
    %4548 = vmatpush.bf16.msra.mxu0 0
    %4549 = vmatpush.bf16.msra.mxu0 0
    %4550 = vmatpush.bf16.msra.mxu0 %v4514
    %4551 = vmatpush.bf16.msra.mxu0 %v4512
    %4552 = vmatmul.bf16.gmra.mxu0 %v4520
    %v4553 = vpop.f32.mrf.mxu0
    %v4554 = vadd.f32 0.0, %v4553
    %v4555 = vpop.f32.mrf.mxu0
    %v4556 = vadd.f32 0.0, %v4555
    %4557 = vmatmul.bf16.gmra.mxu0 %v4523
    %v4558 = vpop.f32.mrf.mxu0
    %v4559 = vadd.f32 0.0, %v4558
    %v4560 = vpop.f32.mrf.mxu0
    %v4561 = vadd.f32 0.0, %v4560
    %4562 = vdwg.mxu0
    %v4563 = vadd.f32 %v4446, %v4535
    %v4564 = vadd.f32 %v4447, %v4554
    %v4565 = vadd.f32 %v4448, %v4537
    %v4566 = vadd.f32 %v4449, %v4556
    %v4567 = vadd.f32 %v4450, %v4540
    %v4568 = vadd.f32 %v4451, %v4559
    %v4569 = vadd.f32 %v4452, %v4542
    %v4570 = vadd.f32 %v4453, %v4561
    %s4571 = scalar_lea.vmem %s61, 16
    %v4572 = vld [vmem:[%s4571] sm:$0xf]
    %v4573 = vld [vmem:[%s4571 + $0x4] sm:$0xf]
    %v4574 = vld [vmem:[%s4571 + $0x8] sm:$0xf]
    %v4575 = vld [vmem:[%s4571 + $0xc] sm:$0xf]
    %v4580 = vunpack.c.l.b16 %v4572
    %v4581 = vunpack.c.l.b16 %v4573
    %v4582 = vunpack.c.l.b16 %v4574
    %v4583 = vunpack.c.l.b16 %v4575
    %v4584 = vpack.c.b16 %v4581, %v4580
    %v4585 = vpack.c.b16 %v4583, %v4582
    %v4587 = vsel %vm800, %v4584, 0
    %v4590 = vsel %vm800, %v4585, 0
    %4592 = vmatpush.bf16.msra.mxu0 0
    %4593 = vmatpush.bf16.msra.mxu0 0
    %4594 = vmatpush.bf16.msra.mxu0 0
    %4595 = vmatpush.bf16.msra.mxu0 0
    %4596 = vmatpush.bf16.msra.mxu0 0
    %4597 = vmatpush.bf16.msra.mxu0 0
    %4598 = vmatpush.bf16.msra.mxu0 0
    %4599 = vmatpush.bf16.msra.mxu0 %v806
    %4600 = vmatmul.bf16.gmra.mxu0 %v4587
    %v4601 = vpop.f32.mrf.mxu0
    %v4602 = vadd.f32 0.0, %v4601
    %v4603 = vpop.f32.mrf.mxu0
    %v4604 = vadd.f32 0.0, %v4603
    %4605 = vmatmul.bf16.gmra.mxu0 %v4590
    %v4606 = vpop.f32.mrf.mxu0
    %v4607 = vadd.f32 0.0, %v4606
    %v4608 = vpop.f32.mrf.mxu0
    %v4609 = vadd.f32 0.0, %v4608
    %4610 = vdwg.mxu0
    %v4611 = vpack.c.bf16 %v4604, %v4602
    %v4612 = vpack.c.bf16 %v4609, %v4607
    %s4613 = scalar_lea.vmem [#allocation13], 32
    %v4614 = vld [vmem:[%s4613] sm:$0xff]
    %v4615 = vld [vmem:[%s4613 + $0x8] sm:$0xff]
    %v4616 = vld [vmem:[%s4613 + $0x10] sm:$0xff]
    %v4617 = vld [vmem:[%s4613 + $0x18] sm:$0xff]
    %v4622 = vunpack.c.l.b16 %v4614
    %v4623 = vunpack.c.h.b16 %v4614
    %v4624 = vunpack.c.l.b16 %v4615
    %v4625 = vunpack.c.h.b16 %v4615
    %v4626 = vunpack.c.l.b16 %v4616
    %v4627 = vunpack.c.h.b16 %v4616
    %v4628 = vunpack.c.l.b16 %v4617
    %v4629 = vunpack.c.h.b16 %v4617
    %v4630 = vpack.c.b16 %v4624, %v4622
    %v4631 = vpack.c.b16 %v4625, %v4623
    %v4632 = vpack.c.b16 %v4628, %v4626
    %v4633 = vpack.c.b16 %v4629, %v4627
    %v4639 = vsel %vm838, %v4611, 0
    %v4642 = vsel %vm838, %v4612, 0
    %4644 = vmatpush.bf16.msra.mxu0 0
    %4645 = vmatpush.bf16.msra.mxu0 0
    %4646 = vmatpush.bf16.msra.mxu0 0
    %4647 = vmatpush.bf16.msra.mxu0 0
    %4648 = vmatpush.bf16.msra.mxu0 0
    %4649 = vmatpush.bf16.msra.mxu0 0
    %4650 = vmatpush.bf16.msra.mxu0 %v4632
    %4651 = vmatpush.bf16.msra.mxu0 %v4630
    %4652 = vmatmul.bf16.gmra.mxu0 %v4639
    %v4653 = vpop.f32.mrf.mxu0
    %v4654 = vadd.f32 0.0, %v4653
    %v4655 = vpop.f32.mrf.mxu0
    %v4656 = vadd.f32 0.0, %v4655
    %4657 = vmatmul.bf16.gmra.mxu0 %v4642
    %v4658 = vpop.f32.mrf.mxu0
    %v4659 = vadd.f32 0.0, %v4658
    %v4660 = vpop.f32.mrf.mxu0
    %v4661 = vadd.f32 0.0, %v4660
    %4662 = vdwg.mxu0
    %4663 = vmatpush.bf16.msra.mxu0 0
    %4664 = vmatpush.bf16.msra.mxu0 0
    %4665 = vmatpush.bf16.msra.mxu0 0
    %4666 = vmatpush.bf16.msra.mxu0 0
    %4667 = vmatpush.bf16.msra.mxu0 0
    %4668 = vmatpush.bf16.msra.mxu0 0
    %4669 = vmatpush.bf16.msra.mxu0 %v4633
    %4670 = vmatpush.bf16.msra.mxu0 %v4631
    %4671 = vmatmul.bf16.gmra.mxu0 %v4639
    %v4672 = vpop.f32.mrf.mxu0
    %v4673 = vadd.f32 0.0, %v4672
    %v4674 = vpop.f32.mrf.mxu0
    %v4675 = vadd.f32 0.0, %v4674
    %4676 = vmatmul.bf16.gmra.mxu0 %v4642
    %v4677 = vpop.f32.mrf.mxu0
    %v4678 = vadd.f32 0.0, %v4677
    %v4679 = vpop.f32.mrf.mxu0
    %v4680 = vadd.f32 0.0, %v4679
    %4681 = vdwg.mxu0
    %v4682 = vadd.f32 %v4563, %v4654
    %v4683 = vadd.f32 %v4564, %v4673
    %v4684 = vadd.f32 %v4565, %v4656
    %v4685 = vadd.f32 %v4566, %v4675
    %v4686 = vadd.f32 %v4567, %v4659
    %v4687 = vadd.f32 %v4568, %v4678
    %v4688 = vadd.f32 %v4569, %v4661
    %v4689 = vadd.f32 %v4570, %v4680
    %s4690 = scalar_lea.vmem %s61, 32
    %v4691 = vld [vmem:[%s4690] sm:$0xf]
    %v4692 = vld [vmem:[%s4690 + $0x4] sm:$0xf]
    %v4693 = vld [vmem:[%s4690 + $0x8] sm:$0xf]
    %v4694 = vld [vmem:[%s4690 + $0xc] sm:$0xf]
    %v4699 = vunpack.c.l.b16 %v4691
    %v4700 = vunpack.c.l.b16 %v4692
    %v4701 = vunpack.c.l.b16 %v4693
    %v4702 = vunpack.c.l.b16 %v4694
    %v4703 = vpack.c.b16 %v4700, %v4699
    %v4704 = vpack.c.b16 %v4702, %v4701
    %v4706 = vsel %vm800, %v4703, 0
    %v4709 = vsel %vm800, %v4704, 0
    %4711 = vmatpush.bf16.msra.mxu0 0
    %4712 = vmatpush.bf16.msra.mxu0 0
    %4713 = vmatpush.bf16.msra.mxu0 0
    %4714 = vmatpush.bf16.msra.mxu0 0
    %4715 = vmatpush.bf16.msra.mxu0 0
    %4716 = vmatpush.bf16.msra.mxu0 0
    %4717 = vmatpush.bf16.msra.mxu0 0
    %4718 = vmatpush.bf16.msra.mxu0 %v806
    %4719 = vmatmul.bf16.gmra.mxu0 %v4706
    %v4720 = vpop.f32.mrf.mxu0
    %v4721 = vadd.f32 0.0, %v4720
    %v4722 = vpop.f32.mrf.mxu0
    %v4723 = vadd.f32 0.0, %v4722
    %4724 = vmatmul.bf16.gmra.mxu0 %v4709
    %v4725 = vpop.f32.mrf.mxu0
    %v4726 = vadd.f32 0.0, %v4725
    %v4727 = vpop.f32.mrf.mxu0
    %v4728 = vadd.f32 0.0, %v4727
    %4729 = vdwg.mxu0
    %v4730 = vpack.c.bf16 %v4723, %v4721
    %v4731 = vpack.c.bf16 %v4728, %v4726
    %s4732 = scalar_lea.vmem [#allocation13], 64
    %v4733 = vld [vmem:[%s4732] sm:$0xff]
    %v4734 = vld [vmem:[%s4732 + $0x8] sm:$0xff]
    %v4735 = vld [vmem:[%s4732 + $0x10] sm:$0xff]
    %v4736 = vld [vmem:[%s4732 + $0x18] sm:$0xff]
    %v4741 = vunpack.c.l.b16 %v4733
    %v4742 = vunpack.c.h.b16 %v4733
    %v4743 = vunpack.c.l.b16 %v4734
    %v4744 = vunpack.c.h.b16 %v4734
    %v4745 = vunpack.c.l.b16 %v4735
    %v4746 = vunpack.c.h.b16 %v4735
    %v4747 = vunpack.c.l.b16 %v4736
    %v4748 = vunpack.c.h.b16 %v4736
    %v4749 = vpack.c.b16 %v4743, %v4741
    %v4750 = vpack.c.b16 %v4744, %v4742
    %v4751 = vpack.c.b16 %v4747, %v4745
    %v4752 = vpack.c.b16 %v4748, %v4746
    %v4758 = vsel %vm838, %v4730, 0
    %v4761 = vsel %vm838, %v4731, 0
    %4763 = vmatpush.bf16.msra.mxu0 0
    %4764 = vmatpush.bf16.msra.mxu0 0
    %4765 = vmatpush.bf16.msra.mxu0 0
    %4766 = vmatpush.bf16.msra.mxu0 0
    %4767 = vmatpush.bf16.msra.mxu0 0
    %4768 = vmatpush.bf16.msra.mxu0 0
    %4769 = vmatpush.bf16.msra.mxu0 %v4751
    %4770 = vmatpush.bf16.msra.mxu0 %v4749
    %4771 = vmatmul.bf16.gmra.mxu0 %v4758
    %v4772 = vpop.f32.mrf.mxu0
    %v4773 = vadd.f32 0.0, %v4772
    %v4774 = vpop.f32.mrf.mxu0
    %v4775 = vadd.f32 0.0, %v4774
    %4776 = vmatmul.bf16.gmra.mxu0 %v4761
    %v4777 = vpop.f32.mrf.mxu0
    %v4778 = vadd.f32 0.0, %v4777
    %v4779 = vpop.f32.mrf.mxu0
    %v4780 = vadd.f32 0.0, %v4779
    %4781 = vdwg.mxu0
    %4782 = vmatpush.bf16.msra.mxu0 0
    %4783 = vmatpush.bf16.msra.mxu0 0
    %4784 = vmatpush.bf16.msra.mxu0 0
    %4785 = vmatpush.bf16.msra.mxu0 0
    %4786 = vmatpush.bf16.msra.mxu0 0
    %4787 = vmatpush.bf16.msra.mxu0 0
    %4788 = vmatpush.bf16.msra.mxu0 %v4752
    %4789 = vmatpush.bf16.msra.mxu0 %v4750
    %4790 = vmatmul.bf16.gmra.mxu0 %v4758
    %v4791 = vpop.f32.mrf.mxu0
    %v4792 = vadd.f32 0.0, %v4791
    %v4793 = vpop.f32.mrf.mxu0
    %v4794 = vadd.f32 0.0, %v4793
    %4795 = vmatmul.bf16.gmra.mxu0 %v4761
    %v4796 = vpop.f32.mrf.mxu0
    %v4797 = vadd.f32 0.0, %v4796
    %v4798 = vpop.f32.mrf.mxu0
    %v4799 = vadd.f32 0.0, %v4798
    %4800 = vdwg.mxu0
    %v4801 = vadd.f32 %v4682, %v4773
    %v4802 = vadd.f32 %v4683, %v4792
    %v4803 = vadd.f32 %v4684, %v4775
    %v4804 = vadd.f32 %v4685, %v4794
    %v4805 = vadd.f32 %v4686, %v4778
    %v4806 = vadd.f32 %v4687, %v4797
    %v4807 = vadd.f32 %v4688, %v4780
    %v4808 = vadd.f32 %v4689, %v4799
    %v4809 = vld [vmem:[#allocation15] sm:$0x3]
    %v4811 = vperm.slane %v4809, 0
    %v4812 = vperm.slane %v4809, 1
    %v4815 = vmul.f32 %v4801, %v4811
    %v4816 = vmul.f32 %v4802, %v4812
    %v4817 = vmul.f32 %v4803, %v4811
    %v4818 = vmul.f32 %v4804, %v4812
    %v4819 = vmul.f32 %v4805, %v4811
    %v4820 = vmul.f32 %v4806, %v4812
    %v4821 = vmul.f32 %v4807, %v4811
    %v4822 = vmul.f32 %v4808, %v4812
    %v4823 = vld [vmem:[#allocation16] sm:$0x3]
    %v4825 = vperm.slane %v4823, 0
    %v4826 = vperm.slane %v4823, 1
    %v4829 = vadd.f32 %v4815, %v4825
    %v4830 = vadd.f32 %v4816, %v4826
    %v4831 = vadd.f32 %v4817, %v4825
    %v4832 = vadd.f32 %v4818, %v4826
    %v4833 = vadd.f32 %v4819, %v4825
    %v4834 = vadd.f32 %v4820, %v4826
    %v4835 = vadd.f32 %v4821, %v4825
    %v4836 = vadd.f32 %v4822, %v4826
    %v4837 = vmax.f32 %v4829, 0.0
    %v4838 = vmax.f32 %v4830, 0.0
    %v4839 = vmax.f32 %v4831, 0.0
    %v4840 = vmax.f32 %v4832, 0.0
    %v4841 = vmax.f32 %v4833, 0.0
    %v4842 = vmax.f32 %v4834, 0.0
    %v4843 = vmax.f32 %v4835, 0.0
    %v4844 = vmax.f32 %v4836, 0.0
    %4845 = vst [vmem:[%s69] sm:$0xff] %v4837
    %4846 = vst [vmem:[%s69 + $0x8] sm:$0xff] %v4838
    %4847 = vst [vmem:[%s69 + $0x10] sm:$0xff] %v4839
    %4848 = vst [vmem:[%s69 + $0x18] sm:$0xff] %v4840
    %4849 = vst [vmem:[%s69 + $0x20] sm:$0xff] %v4841
    %4850 = vst [vmem:[%s69 + $0x28] sm:$0xff] %v4842
    %4851 = vst [vmem:[%s69 + $0x30] sm:$0xff] %v4843
    %4852 = vst [vmem:[%s69 + $0x38] sm:$0xff] %v4844
    // Predicated region
    $region178: #{_fpn_fuse_call.1} parent=1 // pred_check
      _
    $region179: #{_fpn_fuse_call.1} parent=1 // pred_check_branch
      %4854 = sbr.rel (0) target = $region181
    $region180: #{_fpn_fuse_call.1} parent=1 // pred_region
      _
    $region181: #{_fpn_fuse_call.1} parent=1 // pred_fallthru
      _
    // Predicated region
    $region182: #{_fpn_fuse_call.1} parent=1 // pred_check
      _
    $region183: #{_fpn_fuse_call.1} parent=1 // pred_check_branch
      %4856 = sbr.rel (0) target = $region185
    $region184: #{_fpn_fuse_call.1} parent=1 // pred_region
      _
    $region185: #{_fpn_fuse_call.1} parent=1 // pred_fallthru
      _
    %4857 = vsyncpa [#allocation3], 1
    %4858 = vsyncpa [#allocation5], 1
    %4859 = vsyncpa [#allocation8], 1
    %4860 = vsyncpa [#allocation11], 1
    %4861 = vsyncpa [#allocation14], 1
    %4862 = vsyncpa [#allocation17], 1

</llo_original>
